<compile_context>
chip_gen: v6e
topology: v6e:2x2x1
jax: 0.10.0
libtpu: 0.0.40
codegen_flags: <defaults>
</compile_context>

<pallas_src>
import jax
import jax.numpy as jnp
from jax.experimental import pallas as pl
from jax.experimental.pallas import tpu as pltpu


def _encoder_lstm_kernel(maxlen_ref, x_ref, len_ref, w_ih_ref, w_hh_ref, b_g_ref,
                         w_e2d_ref, b_e2d_ref, ctx_ref, slab_ref, h_sc, c_sc):
  """One (batch-tile, time-tile) grid step of the packed single-layer LSTM.

  maxlen_ref: (nb,) int32 SMEM (scalar prefetch) -- max length per batch tile.
  x_ref:      (TT, TB, E) bf16 time-major embeddings.
  len_ref:    (TB, 1) int32 per-row sequence lengths.
  ctx_ref:    (TT, TB, H) bf16 hidden-state output (zero past each length).
  slab_ref:   (TB, 2H) f32 [decoder_init | c_T], written on the last time tile.
  h_sc/c_sc:  (TB, H) f32 recurrent state, carried across time tiles.
  """
  f32 = jnp.float32
  TT, TB, E = x_ref.shape
  H = h_sc.shape[-1]
  bi = pl.program_id(0)
  ti = pl.program_id(1)
  nt = pl.num_programs(1)

  # h0 = c0 = 0 (EncoderLSTM.init_state) at the start of every batch tile.
  @pl.when(ti == 0)
  def _():
    h_sc[...] = jnp.zeros_like(h_sc)
    c_sc[...] = jnp.zeros_like(c_sc)

  t0 = ti * TT
  tile_active = t0 < maxlen_ref[bi]

  @pl.when(jnp.logical_not(tile_active))
  def _():
    # Every sequence in this batch tile has already ended: pack_padded_sequence
    # pads ctx with zeros and h/c stay frozen -- skip all compute.
    ctx_ref[...] = jnp.zeros_like(ctx_ref)

  @pl.when(tile_active)
  def _():
    lens = len_ref[...]                                       # (TB, 1) int32
    w_hh = w_hh_ref[...]                                      # (H, 4H) bf16

    # Hoisted input projection: one tall MXU matmul for the whole time tile,
    # with the fused LSTM bias folded in.  PyTorch gate order (i, f, g, o).
    x_blk = x_ref[...]                                        # (TT, TB, E) bf16
    xg = (jnp.dot(x_blk.reshape(TT * TB, E), w_ih_ref[...],
                  preferred_element_type=f32)
          + b_g_ref[...])                                     # (TT*TB, 4H) f32

    h = h_sc[...]                                             # (TB, H) f32
    c = c_sc[...]
    # Fully unrolled recurrence (TT is static).
    for t in range(TT):
      gates = xg[t * TB:(t + 1) * TB] + jnp.dot(
          h.astype(w_hh.dtype), w_hh, preferred_element_type=f32)   # (TB, 4H)
      i_g = jax.nn.sigmoid(gates[:, 0 * H:1 * H])
      f_g = jax.nn.sigmoid(gates[:, 1 * H:2 * H])
      g_g = jnp.tanh(gates[:, 2 * H:3 * H])
      o_g = jax.nn.sigmoid(gates[:, 3 * H:4 * H])
      c_new = f_g * c + i_g * g_g
      h_new = o_g * jnp.tanh(c_new)

      # pack_padded_sequence semantics: freeze state / zero ctx past each length.
      valid = (t0 + t) < lens                                 # (TB, 1) bool
      h = jnp.where(valid, h_new, h)
      c = jnp.where(valid, c_new, c)
      ctx_ref[t] = jnp.where(valid, h_new, 0.0).astype(ctx_ref.dtype)
    h_sc[...] = h
    c_sc[...] = c

  # decoder_init = tanh(encoder2decoder(h_T)); coalesced with c_T in one slab.
  @pl.when(ti == nt - 1)
  def _():
    h_t = h_sc[...]
    dec = jnp.tanh(jnp.dot(h_t.astype(w_e2d_ref.dtype), w_e2d_ref[...],
                           preferred_element_type=f32) + b_e2d_ref[...])
    slab_ref[:, 0:H] = dec.astype(slab_ref.dtype)
    slab_ref[:, H:2 * H] = c_sc[...].astype(slab_ref.dtype)


def _default_block_b(batch):
  """Largest divisor of `batch` that is a multiple of 8 and gives >= 2 tiles
  (>= 2 batch tiles keep v7x's second TensorCore busy)."""
  for tb in range(batch // 2, 7, -1):
    if batch % tb == 0 and tb % 8 == 0:
      return tb
  return batch


def _pick_time_tile(seq_len, block_t):
  for tt in range(min(block_t, seq_len), 0, -1):
    if seq_len % tt == 0:
      return tt
  return seq_len


def encoder_lstm_forward(token_ids, lengths, prep, *, block_b=None, block_t=8):
  """Returns (ctx, decoder_init, c_t) matching EncoderLSTM.forward (eval mode)."""
  B, T = token_ids.shape
  emb_table = prep["embedding"]                 # (vocab, E) bf16
  E = emb_table.shape[1]
  H = prep["w_hh"].shape[0]

  TB = _default_block_b(B) if block_b is None else block_b
  assert B % TB == 0, "batch must be divisible by the batch tile"
  TT = _pick_time_tile(T, block_t)
  nb, nt = B // TB, T // TT

  # TODO(synk): the nn.Embedding gather has no clean TPU-Pallas equivalent, so
  # the lookup stays in the XLA wrapper; nn.Dropout is identity in eval mode.
  # Gather straight into time-major layout (no (B,T,E)->(T,B,E) transpose).
  x_tm = jnp.take(emb_table, token_ids.T, axis=0)            # (T, B, E) bf16
  lengths_i32 = lengths.astype(jnp.int32)
  len_col = lengths_i32.reshape(B, 1)                        # per-row lengths
  tile_max_len = jnp.max(lengths_i32.reshape(nb, TB), axis=1)  # (nb,) prefetch

  ctx_tm, slab = pl.pallas_call(
      _encoder_lstm_kernel,
      out_shape=(
          jax.ShapeDtypeStruct((T, B, H), jnp.bfloat16),     # ctx (time-major)
          jax.ShapeDtypeStruct((B, 2 * H), jnp.float32),     # [decoder_init|c_t]
      ),
      grid_spec=pltpu.PrefetchScalarGridSpec(
          num_scalar_prefetch=1,
          grid=(nb, nt),
          in_specs=[
              pl.BlockSpec((TT, TB, E), lambda bi, ti, ml: (ti, bi, 0)),  # embeds
              pl.BlockSpec((TB, 1), lambda bi, ti, ml: (bi, 0)),          # lengths
              pl.BlockSpec(prep["w_ih"].shape, lambda bi, ti, ml: (0, 0)),
              pl.BlockSpec(prep["w_hh"].shape, lambda bi, ti, ml: (0, 0)),
              pl.BlockSpec(prep["b_gates"].shape, lambda bi, ti, ml: (0, 0)),
              pl.BlockSpec(prep["w_e2d"].shape, lambda bi, ti, ml: (0, 0)),
              pl.BlockSpec(prep["b_e2d"].shape, lambda bi, ti, ml: (0, 0)),
          ],
          out_specs=(
              pl.BlockSpec((TT, TB, H), lambda bi, ti, ml: (ti, bi, 0)),
              pl.BlockSpec((TB, 2 * H), lambda bi, ti, ml: (bi, 0)),
          ),
          scratch_shapes=[pltpu.VMEM((TB, H), jnp.float32),   # h (carried)
                          pltpu.VMEM((TB, H), jnp.float32)],  # c (carried)
      ),
      compiler_params=pltpu.CompilerParams(
          dimension_semantics=("parallel", "arbitrary"),
          vmem_limit_bytes=32 * 1024 * 1024),
  )(tile_max_len, x_tm, len_col, prep["w_ih"], prep["w_hh"], prep["b_gates"],
    prep["w_e2d"], prep["b_e2d"])

  # TODO(synk): downstream attention could consume time-major ctx directly and
  # skip this transpose; kept batch-first to match the PyTorch module's return.
  ctx = jnp.transpose(ctx_tm, (1, 0, 2))                     # (B, T, H) bf16
  decoder_init = slab[:, :H]
  c_t = slab[:, H:]
  return ctx, decoder_init, c_t


# ----------------------------------------------------------------------------
# Parameter construction (PyTorch-style layouts) and one-time kernel prep.
# ----------------------------------------------------------------------------
def init_params(key, vocab_size, embedding_size, hidden_size, padding_idx=0):
  ks = jax.random.split(key, 7)
  k = 1.0 / (hidden_size ** 0.5)
  emb = jax.random.normal(ks[0], (vocab_size, embedding_size), jnp.float32)
  emb = emb.at[padding_idx].set(0.0)   # nn.Embedding zeroes the padding row
  w_ih = jax.random.uniform(ks[1], (4 * hidden_size, embedding_size), jnp.float32, -k, k)
  w_hh = jax.random.uniform(ks[2], (4 * hidden_size, hidden_size), jnp.float32, -k, k)
  b_ih = jax.random.uniform(ks[3], (4 * hidden_size,), jnp.float32, -k, k)
  b_hh = jax.random.uniform(ks[4], (4 * hidden_size,), jnp.float32, -k, k)
  w_e2d = jax.random.uniform(ks[5], (hidden_size, hidden_size), jnp.float32, -k, k)
  b_e2d = jax.random.uniform(ks[6], (hidden_size,), jnp.float32, -k, k)
  return {"embedding": emb,
          "w_ih_l0": w_ih, "w_hh_l0": w_hh, "b_ih_l0": b_ih, "b_hh_l0": b_hh,
          "w_e2d": w_e2d, "b_e2d": b_e2d}


def prepare_params(params, compute_dtype=jnp.bfloat16):
  """One-time prep OUTSIDE the per-step path: transpose to (in, out), fuse the
  two LSTM biases, cast large operands to bf16 (kernel accumulates in f32)."""
  four_h, E = params["w_ih_l0"].shape
  H = four_h // 4
  assert params["w_hh_l0"].shape == (4 * H, H)
  assert params["w_e2d"].shape == (H, H)
  assert params["embedding"].shape[1] == E
  return {
      "embedding": params["embedding"].astype(compute_dtype),            # (V, E)
      "w_ih": params["w_ih_l0"].T.astype(compute_dtype),                 # (E, 4H)
      "w_hh": params["w_hh_l0"].T.astype(compute_dtype),                 # (H, 4H)
      "b_gates": (params["b_ih_l0"] + params["b_hh_l0"])[None, :].astype(jnp.float32),
      "w_e2d": params["w_e2d"].T.astype(compute_dtype),                  # (H, H)
      "b_e2d": params["b_e2d"][None, :].astype(jnp.float32),
  }


# ----------------------------------------------------------------------------
# Pure-JAX reference mirroring the PyTorch forward (eval-mode dropout,
# pack_padded_sequence semantics), computed in f32 over the prepared weights.
# ----------------------------------------------------------------------------
def _reference(token_ids, lengths, prep):
  f32 = jnp.float32
  emb = prep["embedding"].astype(f32)
  w_ih = prep["w_ih"].astype(f32)
  w_hh = prep["w_hh"].astype(f32)
  b_g = prep["b_gates"].astype(f32)
  w_e2d = prep["w_e2d"].astype(f32)
  b_e2d = prep["b_e2d"].astype(f32)
  B, T = token_ids.shape
  H = w_hh.shape[0]

  x = emb[token_ids]                                              # (B, T, E)
  mask = (jnp.arange(T)[None, :] < lengths[:, None]).astype(f32)  # (B, T)
  h = jnp.zeros((B, H), f32)
  c = jnp.zeros((B, H), f32)
  ctx_steps = []
  for t in range(T):
    gates = x[:, t, :] @ w_ih + h @ w_hh + b_g
    i_g = jax.nn.sigmoid(gates[:, 0 * H:1 * H])
    f_g = jax.nn.sigmoid(gates[:, 1 * H:2 * H])
    g_g = jnp.tanh(gates[:, 2 * H:3 * H])
    o_g = jax.nn.sigmoid(gates[:, 3 * H:4 * H])
    c_new = f_g * c + i_g * g_g
    h_new = o_g * jnp.tanh(c_new)
    m = mask[:, t:t + 1]
    h = m * h_new + (1.0 - m) * h
    c = m * c_new + (1.0 - m) * c
    ctx_steps.append(m * h_new)
  ctx = jnp.stack(ctx_steps, axis=1)                              # (B, T, H)
  dec = jnp.tanh(h @ w_e2d + b_e2d)
  return ctx, dec, c


if __name__ == "__main__":
  # Small but lane/sublane-aligned shapes (E, H, 4H multiples of 128; batch tile
  # a multiple of 16 so bf16 sublane packing and the 2-tile v7x split both hold).
  B, T = 32, 16
  VOCAB, EMBED, HIDDEN = 256, 128, 128
  PAD = 0

  key = jax.random.PRNGKey(0)
  k_ids, k_p = jax.random.split(key)
  # Sorted (descending) lengths, as pack_padded_sequence expects.
  lengths = jnp.clip(T - jnp.arange(B) // 2, 3, T).astype(jnp.int32)
  ids = jax.random.randint(k_ids, (B, T), 1, VOCAB, dtype=jnp.int32)
  ids = jnp.where(jnp.arange(T)[None, :] < lengths[:, None], ids, PAD)

  params = init_params(k_p, VOCAB, EMBED, HIDDEN, padding_idx=PAD)
  prep = prepare_params(params)          # one-time weight prep, not per step

  fwd = jax.jit(encoder_lstm_forward)
  ctx, dec_init, c_t = jax.block_until_ready(fwd(ids, lengths, prep))

  ctx_r, dec_r, c_r = _reference(ids, lengths, prep)
  assert ctx.shape == (B, T, HIDDEN) and ctx.dtype == jnp.bfloat16
  assert dec_init.shape == (B, HIDDEN) and dec_init.dtype == jnp.float32
  assert c_t.shape == (B, HIDDEN) and c_t.dtype == jnp.float32
  # ctx is bf16 and h is fed to the recurrent matmul in bf16; tolerances sized
  # for that (state itself is kept in f32 scratch).
  err_ctx = float(jnp.max(jnp.abs(ctx.astype(jnp.float32) - ctx_r)))
  err_dec = float(jnp.max(jnp.abs(dec_init - dec_r)))
  err_c = float(jnp.max(jnp.abs(c_t - c_r)))
  assert err_ctx < 2e-2, err_ctx
  assert err_dec < 2e-2, err_dec
  assert err_c < 2e-2, err_c

  print("KERNEL_OK")
</pallas_src>

<mosaic_0001>
module attributes {stable_mosaic.version = 11 : i64} {
  func.func @_encoder_lstm_kernel(%arg0: i32, %arg1: i32, %arg2: memref<2xi32, #tpu.memory_space<smem>>, %arg3: memref<8x16x128xbf16, #tpu.memory_space<vmem>>, %arg4: memref<16x1xi32, #tpu.memory_space<vmem>>, %arg5: memref<128x512xbf16, #tpu.memory_space<vmem>>, %arg6: memref<128x512xbf16, #tpu.memory_space<vmem>>, %arg7: memref<1x512xf32, #tpu.memory_space<vmem>>, %arg8: memref<128x128xbf16, #tpu.memory_space<vmem>>, %arg9: memref<1x128xf32, #tpu.memory_space<vmem>>, %arg10: memref<8x16x128xbf16, #tpu.memory_space<vmem>>, %arg11: memref<16x256xf32, #tpu.memory_space<vmem>>, %arg12: memref<16x128xf32, #tpu.memory_space<vmem>>, %arg13: memref<16x128xf32, #tpu.memory_space<vmem>>) attributes {dimension_semantics = [#tpu.dimension_semantics<parallel>, #tpu.dimension_semantics<arbitrary>], iteration_bounds = array<i64: 2, 2>, scalar_prefetch = 1 : i64, scratch_operands = 2 : i64, tpu.core_type = #tpu.core_type<tc>, window_params = [{transform_indices = @transform_0, window_bounds = array<i64: 8, 16, 128>}, {transform_indices = @transform_1, window_bounds = array<i64: 16, 1>}, {pipeline_mode = #tpu.pipeline_mode<synchronous>, transform_indices = @transform_2, window_bounds = array<i64: 128, 512>}, {pipeline_mode = #tpu.pipeline_mode<synchronous>, transform_indices = @transform_3, window_bounds = array<i64: 128, 512>}, {pipeline_mode = #tpu.pipeline_mode<synchronous>, transform_indices = @transform_4, window_bounds = array<i64: 1, 512>}, {pipeline_mode = #tpu.pipeline_mode<synchronous>, transform_indices = @transform_5, window_bounds = array<i64: 128, 128>}, {pipeline_mode = #tpu.pipeline_mode<synchronous>, transform_indices = @transform_6, window_bounds = array<i64: 1, 128>}, {transform_indices = @transform_7, window_bounds = array<i64: 8, 16, 128>}, {transform_indices = @transform_8, window_bounds = array<i64: 16, 256>}]} {
    %c0_i32 = arith.constant 0 : i32
    %0 = arith.cmpi eq, %arg1, %c0_i32 : i32
    %1 = arith.extui %0 : i1 to i32
    %c0_i32_0 = arith.constant 0 : i32
    %2 = arith.cmpi ne, %1, %c0_i32_0 : i32
    scf.if %2 {
      %cst = arith.constant 0.000000e+00 : f32
      %15 = vector.broadcast %cst : f32 to vector<16x128xf32>
      %c0 = arith.constant 0 : index
      %c0_4 = arith.constant 0 : index
      %16 = vector.load %arg12[%c0, %c0_4] : memref<16x128xf32, #tpu.memory_space<vmem>>, vector<16x128xf32>
      tpu.vector_store %arg12[%c0, %c0_4], %15 {strides = array<i32>} : memref<16x128xf32, #tpu.memory_space<vmem>>, vector<16x128xf32>,
      %cst_5 = arith.constant 0.000000e+00 : f32
      %17 = vector.broadcast %cst_5 : f32 to vector<16x128xf32>
      %c0_6 = arith.constant 0 : index
      %c0_7 = arith.constant 0 : index
      %18 = vector.load %arg13[%c0_6, %c0_7] : memref<16x128xf32, #tpu.memory_space<vmem>>, vector<16x128xf32>
      tpu.vector_store %arg13[%c0_6, %c0_7], %17 {strides = array<i32>} : memref<16x128xf32, #tpu.memory_space<vmem>>, vector<16x128xf32>,
    } else {
    }
    %c8_i32 = arith.constant 8 : i32
    %3 = arith.muli %arg1, %c8_i32 : i32
    %4 = arith.index_cast %arg0 : i32 to index
    %5 = memref.load %arg2[%4] : memref<2xi32, #tpu.memory_space<smem>>
    %6 = arith.cmpi slt, %3, %5 : i32
    %true = arith.constant true
    %7 = arith.xori %6, %true : i1
    %8 = arith.extui %7 : i1 to i32
    %c0_i32_1 = arith.constant 0 : i32
    %9 = arith.cmpi ne, %8, %c0_i32_1 : i32
    scf.if %9 {
      %cst = arith.constant 0.000000e+00 : bf16
      %15 = vector.broadcast %cst : bf16 to vector<8x16x128xbf16>
      %c0 = arith.constant 0 : index
      %c0_4 = arith.constant 0 : index
      %c0_5 = arith.constant 0 : index
      %16 = vector.load %arg10[%c0, %c0_4, %c0_5] : memref<8x16x128xbf16, #tpu.memory_space<vmem>>, vector<8x16x128xbf16>
      tpu.vector_store %arg10[%c0, %c0_4, %c0_5], %15 {strides = array<i32>} : memref<8x16x128xbf16, #tpu.memory_space<vmem>>, vector<8x16x128xbf16>,
    } else {
    }
    %10 = arith.extui %6 : i1 to i32
    %c0_i32_2 = arith.constant 0 : i32
    %11 = arith.cmpi ne, %10, %c0_i32_2 : i32
    scf.if %11 {
      %c0 = arith.constant 0 : index
      %c0_4 = arith.constant 0 : index
      %15 = vector.load %arg4[%c0, %c0_4] : memref<16x1xi32, #tpu.memory_space<vmem>>, vector<16x1xi32>
      %c0_5 = arith.constant 0 : index
      %c0_6 = arith.constant 0 : index
      %16 = vector.load %arg6[%c0_5, %c0_6] : memref<128x512xbf16, #tpu.memory_space<vmem>>, vector<128x512xbf16>
      %c0_7 = arith.constant 0 : index
      %c0_8 = arith.constant 0 : index
      %c0_9 = arith.constant 0 : index
      %17 = vector.load %arg3[%c0_7, %c0_8, %c0_9] : memref<8x16x128xbf16, #tpu.memory_space<vmem>>, vector<8x16x128xbf16>
      %18 = vector.shape_cast %17 : vector<8x16x128xbf16> to vector<128x128xbf16>
      %c0_10 = arith.constant 0 : index
      %c0_11 = arith.constant 0 : index
      %19 = vector.load %arg5[%c0_10, %c0_11] : memref<128x512xbf16, #tpu.memory_space<vmem>>, vector<128x512xbf16>
      %cst = arith.constant dense<0.000000e+00> : vector<128x512xf32>
      %20 = tpu.matmul %18, %19, %cst {dimension_numbers = #tpu.dot_dimension_numbers<[1], [0], [0], [1], [0, 0, 1, 1], [], []>} : vector<128x128xbf16>, vector<128x512xbf16>, vector<128x512xf32> -> vector<128x512xf32>
      %c0_12 = arith.constant 0 : index
      %c0_13 = arith.constant 0 : index
      %21 = vector.load %arg7[%c0_12, %c0_13] : memref<1x512xf32, #tpu.memory_space<vmem>>, vector<1x512xf32>
      %22 = vector.broadcast %21 : vector<1x512xf32> to vector<128x512xf32>
      %23 = arith.addf %20, %22 : vector<128x512xf32>
      %c0_14 = arith.constant 0 : index
      %c0_15 = arith.constant 0 : index
      %24 = vector.load %arg12[%c0_14, %c0_15] : memref<16x128xf32, #tpu.memory_space<vmem>>, vector<16x128xf32>
      %c0_16 = arith.constant 0 : index
      %c0_17 = arith.constant 0 : index
      %25 = vector.load %arg13[%c0_16, %c0_17] : memref<16x128xf32, #tpu.memory_space<vmem>>, vector<16x128xf32>
      %26 = vector.extract_strided_slice %23 {offsets = [0, 0], sizes = [16, 512], strides = [1, 1]} : vector<128x512xf32> to vector<16x512xf32>
      %27 = arith.truncf %24 : vector<16x128xf32> to vector<16x128xbf16>
      %cst_18 = arith.constant dense<0.000000e+00> : vector<16x512xf32>
      %28 = tpu.matmul %27, %16, %cst_18 {dimension_numbers = #tpu.dot_dimension_numbers<[1], [0], [0], [1], [0, 0, 1, 1], [], []>} : vector<16x128xbf16>, vector<128x512xbf16>, vector<16x512xf32> -> vector<16x512xf32>
      %29 = arith.addf %26, %28 : vector<16x512xf32>
      %30 = vector.extract_strided_slice %29 {offsets = [0, 0], sizes = [16, 128], strides = [1, 1]} : vector<16x512xf32> to vector<16x128xf32>
      %31 = arith.negf %30 : vector<16x128xf32>
      %32 = math.exp %31 : vector<16x128xf32>
      %cst_19 = arith.constant 1.000000e+00 : f32
      %33 = vector.broadcast %cst_19 : f32 to vector<16x128xf32>
      %34 = arith.addf %33, %32 : vector<16x128xf32>
      %35 = arith.divf %33, %34 : vector<16x128xf32>
      %36 = vector.extract_strided_slice %29 {offsets = [0, 128], sizes = [16, 128], strides = [1, 1]} : vector<16x512xf32> to vector<16x128xf32>
      %37 = arith.negf %36 : vector<16x128xf32>
      %38 = math.exp %37 : vector<16x128xf32>
      %cst_20 = arith.constant 1.000000e+00 : f32
      %39 = vector.broadcast %cst_20 : f32 to vector<16x128xf32>
      %40 = arith.addf %39, %38 : vector<16x128xf32>
      %41 = arith.divf %39, %40 : vector<16x128xf32>
      %42 = vector.extract_strided_slice %29 {offsets = [0, 256], sizes = [16, 128], strides = [1, 1]} : vector<16x512xf32> to vector<16x128xf32>
      %43 = math.tanh %42 : vector<16x128xf32>
      %44 = vector.extract_strided_slice %29 {offsets = [0, 384], sizes = [16, 128], strides = [1, 1]} : vector<16x512xf32> to vector<16x128xf32>
      %45 = arith.negf %44 : vector<16x128xf32>
      %46 = math.exp %45 : vector<16x128xf32>
      %cst_21 = arith.constant 1.000000e+00 : f32
      %47 = vector.broadcast %cst_21 : f32 to vector<16x128xf32>
      %48 = arith.addf %47, %46 : vector<16x128xf32>
      %49 = arith.divf %47, %48 : vector<16x128xf32>
      %50 = arith.mulf %41, %25 : vector<16x128xf32>
      %51 = arith.mulf %35, %43 : vector<16x128xf32>
      %52 = arith.addf %50, %51 : vector<16x128xf32>
      %53 = math.tanh %52 : vector<16x128xf32>
      %54 = arith.mulf %49, %53 : vector<16x128xf32>
      %c0_i32_22 = arith.constant 0 : i32
      %55 = arith.addi %3, %c0_i32_22 : i32
      %56 = vector.broadcast %55 : i32 to vector<16x1xi32>
      %57 = arith.cmpi slt, %56, %15 : vector<16x1xi32>
      %58 = vector.shape_cast %57 : vector<16x1xi1> to vector<16x1xi1>
      %59 = vector.broadcast %58 : vector<16x1xi1> to vector<16x128xi1>
      %60 = arith.select %59, %54, %24 : vector<16x128xi1>, vector<16x128xf32>
      %61 = vector.shape_cast %57 : vector<16x1xi1> to vector<16x1xi1>
      %62 = vector.broadcast %61 : vector<16x1xi1> to vector<16x128xi1>
      %63 = arith.select %62, %52, %25 : vector<16x128xi1>, vector<16x128xf32>
      %cst_23 = arith.constant 0.000000e+00 : f32
      %64 = vector.shape_cast %57 : vector<16x1xi1> to vector<16x1xi1>
      %65 = vector.broadcast %64 : vector<16x1xi1> to vector<16x128xi1>
      %66 = vector.broadcast %cst_23 : f32 to vector<16x128xf32>
      %67 = arith.select %65, %54, %66 : vector<16x128xi1>, vector<16x128xf32>
      %68 = arith.truncf %67 : vector<16x128xf32> to vector<16x128xbf16>
      %c0_24 = arith.constant 0 : index
      %c0_25 = arith.constant 0 : index
      %c0_26 = arith.constant 0 : index
      %69 = vector.load %arg10[%c0_24, %c0_25, %c0_26] : memref<8x16x128xbf16, #tpu.memory_space<vmem>>, vector<1x16x128xbf16>
      %70 = vector.shape_cast %69 : vector<1x16x128xbf16> to vector<16x128xbf16>
      %71 = vector.shape_cast %68 : vector<16x128xbf16> to vector<1x16x128xbf16>
      tpu.vector_store %arg10[%c0_24, %c0_25, %c0_26], %71 {strides = array<i32>} : memref<8x16x128xbf16, #tpu.memory_space<vmem>>, vector<1x16x128xbf16>,
      %72 = vector.extract_strided_slice %23 {offsets = [16, 0], sizes = [16, 512], strides = [1, 1]} : vector<128x512xf32> to vector<16x512xf32>
      %73 = arith.truncf %60 : vector<16x128xf32> to vector<16x128xbf16>
      %cst_27 = arith.constant dense<0.000000e+00> : vector<16x512xf32>
      %74 = tpu.matmul %73, %16, %cst_27 {dimension_numbers = #tpu.dot_dimension_numbers<[1], [0], [0], [1], [0, 0, 1, 1], [], []>} : vector<16x128xbf16>, vector<128x512xbf16>, vector<16x512xf32> -> vector<16x512xf32>
      %75 = arith.addf %72, %74 : vector<16x512xf32>
      %76 = vector.extract_strided_slice %75 {offsets = [0, 0], sizes = [16, 128], strides = [1, 1]} : vector<16x512xf32> to vector<16x128xf32>
      %77 = arith.negf %76 : vector<16x128xf32>
      %78 = math.exp %77 : vector<16x128xf32>
      %cst_28 = arith.constant 1.000000e+00 : f32
      %79 = vector.broadcast %cst_28 : f32 to vector<16x128xf32>
      %80 = arith.addf %79, %78 : vector<16x128xf32>
      %81 = arith.divf %79, %80 : vector<16x128xf32>
      %82 = vector.extract_strided_slice %75 {offsets = [0, 128], sizes = [16, 128], strides = [1, 1]} : vector<16x512xf32> to vector<16x128xf32>
      %83 = arith.negf %82 : vector<16x128xf32>
      %84 = math.exp %83 : vector<16x128xf32>
      %cst_29 = arith.constant 1.000000e+00 : f32
      %85 = vector.broadcast %cst_29 : f32 to vector<16x128xf32>
      %86 = arith.addf %85, %84 : vector<16x128xf32>
      %87 = arith.divf %85, %86 : vector<16x128xf32>
      %88 = vector.extract_strided_slice %75 {offsets = [0, 256], sizes = [16, 128], strides = [1, 1]} : vector<16x512xf32> to vector<16x128xf32>
      %89 = math.tanh %88 : vector<16x128xf32>
      %90 = vector.extract_strided_slice %75 {offsets = [0, 384], sizes = [16, 128], strides = [1, 1]} : vector<16x512xf32> to vector<16x128xf32>
      %91 = arith.negf %90 : vector<16x128xf32>
      %92 = math.exp %91 : vector<16x128xf32>
      %cst_30 = arith.constant 1.000000e+00 : f32
      %93 = vector.broadcast %cst_30 : f32 to vector<16x128xf32>
      %94 = arith.addf %93, %92 : vector<16x128xf32>
      %95 = arith.divf %93, %94 : vector<16x128xf32>
      %96 = arith.mulf %87, %63 : vector<16x128xf32>
      %97 = arith.mulf %81, %89 : vector<16x128xf32>
      %98 = arith.addf %96, %97 : vector<16x128xf32>
      %99 = math.tanh %98 : vector<16x128xf32>
      %100 = arith.mulf %95, %99 : vector<16x128xf32>
      %c1_i32_31 = arith.constant 1 : i32
      %101 = arith.addi %3, %c1_i32_31 : i32
      %102 = vector.broadcast %101 : i32 to vector<16x1xi32>
      %103 = arith.cmpi slt, %102, %15 : vector<16x1xi32>
      %104 = vector.shape_cast %103 : vector<16x1xi1> to vector<16x1xi1>
      %105 = vector.broadcast %104 : vector<16x1xi1> to vector<16x128xi1>
      %106 = arith.select %105, %100, %60 : vector<16x128xi1>, vector<16x128xf32>
      %107 = vector.shape_cast %103 : vector<16x1xi1> to vector<16x1xi1>
      %108 = vector.broadcast %107 : vector<16x1xi1> to vector<16x128xi1>
      %109 = arith.select %108, %98, %63 : vector<16x128xi1>, vector<16x128xf32>
      %cst_32 = arith.constant 0.000000e+00 : f32
      %110 = vector.shape_cast %103 : vector<16x1xi1> to vector<16x1xi1>
      %111 = vector.broadcast %110 : vector<16x1xi1> to vector<16x128xi1>
      %112 = vector.broadcast %cst_32 : f32 to vector<16x128xf32>
      %113 = arith.select %111, %100, %112 : vector<16x128xi1>, vector<16x128xf32>
      %114 = arith.truncf %113 : vector<16x128xf32> to vector<16x128xbf16>
      %c1 = arith.constant 1 : index
      %c0_33 = arith.constant 0 : index
      %c0_34 = arith.constant 0 : index
      %115 = vector.load %arg10[%c1, %c0_33, %c0_34] : memref<8x16x128xbf16, #tpu.memory_space<vmem>>, vector<1x16x128xbf16>
      %116 = vector.shape_cast %115 : vector<1x16x128xbf16> to vector<16x128xbf16>
      %117 = vector.shape_cast %114 : vector<16x128xbf16> to vector<1x16x128xbf16>
      tpu.vector_store %arg10[%c1, %c0_33, %c0_34], %117 {strides = array<i32>} : memref<8x16x128xbf16, #tpu.memory_space<vmem>>, vector<1x16x128xbf16>,
      %118 = vector.extract_strided_slice %23 {offsets = [32, 0], sizes = [16, 512], strides = [1, 1]} : vector<128x512xf32> to vector<16x512xf32>
      %119 = arith.truncf %106 : vector<16x128xf32> to vector<16x128xbf16>
      %cst_35 = arith.constant dense<0.000000e+00> : vector<16x512xf32>
      %120 = tpu.matmul %119, %16, %cst_35 {dimension_numbers = #tpu.dot_dimension_numbers<[1], [0], [0], [1], [0, 0, 1, 1], [], []>} : vector<16x128xbf16>, vector<128x512xbf16>, vector<16x512xf32> -> vector<16x512xf32>
      %121 = arith.addf %118, %120 : vector<16x512xf32>
      %122 = vector.extract_strided_slice %121 {offsets = [0, 0], sizes = [16, 128], strides = [1, 1]} : vector<16x512xf32> to vector<16x128xf32>
      %123 = arith.negf %122 : vector<16x128xf32>
      %124 = math.exp %123 : vector<16x128xf32>
      %cst_36 = arith.constant 1.000000e+00 : f32
      %125 = vector.broadcast %cst_36 : f32 to vector<16x128xf32>
      %126 = arith.addf %125, %124 : vector<16x128xf32>
      %127 = arith.divf %125, %126 : vector<16x128xf32>
      %128 = vector.extract_strided_slice %121 {offsets = [0, 128], sizes = [16, 128], strides = [1, 1]} : vector<16x512xf32> to vector<16x128xf32>
      %129 = arith.negf %128 : vector<16x128xf32>
      %130 = math.exp %129 : vector<16x128xf32>
      %cst_37 = arith.constant 1.000000e+00 : f32
      %131 = vector.broadcast %cst_37 : f32 to vector<16x128xf32>
      %132 = arith.addf %131, %130 : vector<16x128xf32>
      %133 = arith.divf %131, %132 : vector<16x128xf32>
      %134 = vector.extract_strided_slice %121 {offsets = [0, 256], sizes = [16, 128], strides = [1, 1]} : vector<16x512xf32> to vector<16x128xf32>
      %135 = math.tanh %134 : vector<16x128xf32>
      %136 = vector.extract_strided_slice %121 {offsets = [0, 384], sizes = [16, 128], strides = [1, 1]} : vector<16x512xf32> to vector<16x128xf32>
      %137 = arith.negf %136 : vector<16x128xf32>
      %138 = math.exp %137 : vector<16x128xf32>
      %cst_38 = arith.constant 1.000000e+00 : f32
      %139 = vector.broadcast %cst_38 : f32 to vector<16x128xf32>
      %140 = arith.addf %139, %138 : vector<16x128xf32>
      %141 = arith.divf %139, %140 : vector<16x128xf32>
      %142 = arith.mulf %133, %109 : vector<16x128xf32>
      %143 = arith.mulf %127, %135 : vector<16x128xf32>
      %144 = arith.addf %142, %143 : vector<16x128xf32>
      %145 = math.tanh %144 : vector<16x128xf32>
      %146 = arith.mulf %141, %145 : vector<16x128xf32>
      %c2_i32 = arith.constant 2 : i32
      %147 = arith.addi %3, %c2_i32 : i32
      %148 = vector.broadcast %147 : i32 to vector<16x1xi32>
      %149 = arith.cmpi slt, %148, %15 : vector<16x1xi32>
      %150 = vector.shape_cast %149 : vector<16x1xi1> to vector<16x1xi1>
      %151 = vector.broadcast %150 : vector<16x1xi1> to vector<16x128xi1>
      %152 = arith.select %151, %146, %106 : vector<16x128xi1>, vector<16x128xf32>
      %153 = vector.shape_cast %149 : vector<16x1xi1> to vector<16x1xi1>
      %154 = vector.broadcast %153 : vector<16x1xi1> to vector<16x128xi1>
      %155 = arith.select %154, %144, %109 : vector<16x128xi1>, vector<16x128xf32>
      %cst_39 = arith.constant 0.000000e+00 : f32
      %156 = vector.shape_cast %149 : vector<16x1xi1> to vector<16x1xi1>
      %157 = vector.broadcast %156 : vector<16x1xi1> to vector<16x128xi1>
      %158 = vector.broadcast %cst_39 : f32 to vector<16x128xf32>
      %159 = arith.select %157, %146, %158 : vector<16x128xi1>, vector<16x128xf32>
      %160 = arith.truncf %159 : vector<16x128xf32> to vector<16x128xbf16>
      %c2 = arith.constant 2 : index
      %c0_40 = arith.constant 0 : index
      %c0_41 = arith.constant 0 : index
      %161 = vector.load %arg10[%c2, %c0_40, %c0_41] : memref<8x16x128xbf16, #tpu.memory_space<vmem>>, vector<1x16x128xbf16>
      %162 = vector.shape_cast %161 : vector<1x16x128xbf16> to vector<16x128xbf16>
      %163 = vector.shape_cast %160 : vector<16x128xbf16> to vector<1x16x128xbf16>
      tpu.vector_store %arg10[%c2, %c0_40, %c0_41], %163 {strides = array<i32>} : memref<8x16x128xbf16, #tpu.memory_space<vmem>>, vector<1x16x128xbf16>,
      %164 = vector.extract_strided_slice %23 {offsets = [48, 0], sizes = [16, 512], strides = [1, 1]} : vector<128x512xf32> to vector<16x512xf32>
      %165 = arith.truncf %152 : vector<16x128xf32> to vector<16x128xbf16>
      %cst_42 = arith.constant dense<0.000000e+00> : vector<16x512xf32>
      %166 = tpu.matmul %165, %16, %cst_42 {dimension_numbers = #tpu.dot_dimension_numbers<[1], [0], [0], [1], [0, 0, 1, 1], [], []>} : vector<16x128xbf16>, vector<128x512xbf16>, vector<16x512xf32> -> vector<16x512xf32>
      %167 = arith.addf %164, %166 : vector<16x512xf32>
      %168 = vector.extract_strided_slice %167 {offsets = [0, 0], sizes = [16, 128], strides = [1, 1]} : vector<16x512xf32> to vector<16x128xf32>
      %169 = arith.negf %168 : vector<16x128xf32>
      %170 = math.exp %169 : vector<16x128xf32>
      %cst_43 = arith.constant 1.000000e+00 : f32
      %171 = vector.broadcast %cst_43 : f32 to vector<16x128xf32>
      %172 = arith.addf %171, %170 : vector<16x128xf32>
      %173 = arith.divf %171, %172 : vector<16x128xf32>
      %174 = vector.extract_strided_slice %167 {offsets = [0, 128], sizes = [16, 128], strides = [1, 1]} : vector<16x512xf32> to vector<16x128xf32>
      %175 = arith.negf %174 : vector<16x128xf32>
      %176 = math.exp %175 : vector<16x128xf32>
      %cst_44 = arith.constant 1.000000e+00 : f32
      %177 = vector.broadcast %cst_44 : f32 to vector<16x128xf32>
      %178 = arith.addf %177, %176 : vector<16x128xf32>
      %179 = arith.divf %177, %178 : vector<16x128xf32>
      %180 = vector.extract_strided_slice %167 {offsets = [0, 256], sizes = [16, 128], strides = [1, 1]} : vector<16x512xf32> to vector<16x128xf32>
      %181 = math.tanh %180 : vector<16x128xf32>
      %182 = vector.extract_strided_slice %167 {offsets = [0, 384], sizes = [16, 128], strides = [1, 1]} : vector<16x512xf32> to vector<16x128xf32>
      %183 = arith.negf %182 : vector<16x128xf32>
      %184 = math.exp %183 : vector<16x128xf32>
      %cst_45 = arith.constant 1.000000e+00 : f32
      %185 = vector.broadcast %cst_45 : f32 to vector<16x128xf32>
      %186 = arith.addf %185, %184 : vector<16x128xf32>
      %187 = arith.divf %185, %186 : vector<16x128xf32>
      %188 = arith.mulf %179, %155 : vector<16x128xf32>
      %189 = arith.mulf %173, %181 : vector<16x128xf32>
      %190 = arith.addf %188, %189 : vector<16x128xf32>
      %191 = math.tanh %190 : vector<16x128xf32>
      %192 = arith.mulf %187, %191 : vector<16x128xf32>
      %c3_i32 = arith.constant 3 : i32
      %193 = arith.addi %3, %c3_i32 : i32
      %194 = vector.broadcast %193 : i32 to vector<16x1xi32>
      %195 = arith.cmpi slt, %194, %15 : vector<16x1xi32>
      %196 = vector.shape_cast %195 : vector<16x1xi1> to vector<16x1xi1>
      %197 = vector.broadcast %196 : vector<16x1xi1> to vector<16x128xi1>
      %198 = arith.select %197, %192, %152 : vector<16x128xi1>, vector<16x128xf32>
      %199 = vector.shape_cast %195 : vector<16x1xi1> to vector<16x1xi1>
      %200 = vector.broadcast %199 : vector<16x1xi1> to vector<16x128xi1>
      %201 = arith.select %200, %190, %155 : vector<16x128xi1>, vector<16x128xf32>
      %cst_46 = arith.constant 0.000000e+00 : f32
      %202 = vector.shape_cast %195 : vector<16x1xi1> to vector<16x1xi1>
      %203 = vector.broadcast %202 : vector<16x1xi1> to vector<16x128xi1>
      %204 = vector.broadcast %cst_46 : f32 to vector<16x128xf32>
      %205 = arith.select %203, %192, %204 : vector<16x128xi1>, vector<16x128xf32>
      %206 = arith.truncf %205 : vector<16x128xf32> to vector<16x128xbf16>
      %c3 = arith.constant 3 : index
      %c0_47 = arith.constant 0 : index
      %c0_48 = arith.constant 0 : index
      %207 = vector.load %arg10[%c3, %c0_47, %c0_48] : memref<8x16x128xbf16, #tpu.memory_space<vmem>>, vector<1x16x128xbf16>
      %208 = vector.shape_cast %207 : vector<1x16x128xbf16> to vector<16x128xbf16>
      %209 = vector.shape_cast %206 : vector<16x128xbf16> to vector<1x16x128xbf16>
      tpu.vector_store %arg10[%c3, %c0_47, %c0_48], %209 {strides = array<i32>} : memref<8x16x128xbf16, #tpu.memory_space<vmem>>, vector<1x16x128xbf16>,
      %210 = vector.extract_strided_slice %23 {offsets = [64, 0], sizes = [16, 512], strides = [1, 1]} : vector<128x512xf32> to vector<16x512xf32>
      %211 = arith.truncf %198 : vector<16x128xf32> to vector<16x128xbf16>
      %cst_49 = arith.constant dense<0.000000e+00> : vector<16x512xf32>
      %212 = tpu.matmul %211, %16, %cst_49 {dimension_numbers = #tpu.dot_dimension_numbers<[1], [0], [0], [1], [0, 0, 1, 1], [], []>} : vector<16x128xbf16>, vector<128x512xbf16>, vector<16x512xf32> -> vector<16x512xf32>
      %213 = arith.addf %210, %212 : vector<16x512xf32>
      %214 = vector.extract_strided_slice %213 {offsets = [0, 0], sizes = [16, 128], strides = [1, 1]} : vector<16x512xf32> to vector<16x128xf32>
      %215 = arith.negf %214 : vector<16x128xf32>
      %216 = math.exp %215 : vector<16x128xf32>
      %cst_50 = arith.constant 1.000000e+00 : f32
      %217 = vector.broadcast %cst_50 : f32 to vector<16x128xf32>
      %218 = arith.addf %217, %216 : vector<16x128xf32>
      %219 = arith.divf %217, %218 : vector<16x128xf32>
      %220 = vector.extract_strided_slice %213 {offsets = [0, 128], sizes = [16, 128], strides = [1, 1]} : vector<16x512xf32> to vector<16x128xf32>
      %221 = arith.negf %220 : vector<16x128xf32>
      %222 = math.exp %221 : vector<16x128xf32>
      %cst_51 = arith.constant 1.000000e+00 : f32
      %223 = vector.broadcast %cst_51 : f32 to vector<16x128xf32>
      %224 = arith.addf %223, %222 : vector<16x128xf32>
      %225 = arith.divf %223, %224 : vector<16x128xf32>
      %226 = vector.extract_strided_slice %213 {offsets = [0, 256], sizes = [16, 128], strides = [1, 1]} : vector<16x512xf32> to vector<16x128xf32>
      %227 = math.tanh %226 : vector<16x128xf32>
      %228 = vector.extract_strided_slice %213 {offsets = [0, 384], sizes = [16, 128], strides = [1, 1]} : vector<16x512xf32> to vector<16x128xf32>
      %229 = arith.negf %228 : vector<16x128xf32>
      %230 = math.exp %229 : vector<16x128xf32>
      %cst_52 = arith.constant 1.000000e+00 : f32
      %231 = vector.broadcast %cst_52 : f32 to vector<16x128xf32>
      %232 = arith.addf %231, %230 : vector<16x128xf32>
      %233 = arith.divf %231, %232 : vector<16x128xf32>
      %234 = arith.mulf %225, %201 : vector<16x128xf32>
      %235 = arith.mulf %219, %227 : vector<16x128xf32>
      %236 = arith.addf %234, %235 : vector<16x128xf32>
      %237 = math.tanh %236 : vector<16x128xf32>
      %238 = arith.mulf %233, %237 : vector<16x128xf32>
      %c4_i32 = arith.constant 4 : i32
      %239 = arith.addi %3, %c4_i32 : i32
      %240 = vector.broadcast %239 : i32 to vector<16x1xi32>
      %241 = arith.cmpi slt, %240, %15 : vector<16x1xi32>
      %242 = vector.shape_cast %241 : vector<16x1xi1> to vector<16x1xi1>
      %243 = vector.broadcast %242 : vector<16x1xi1> to vector<16x128xi1>
      %244 = arith.select %243, %238, %198 : vector<16x128xi1>, vector<16x128xf32>
      %245 = vector.shape_cast %241 : vector<16x1xi1> to vector<16x1xi1>
      %246 = vector.broadcast %245 : vector<16x1xi1> to vector<16x128xi1>
      %247 = arith.select %246, %236, %201 : vector<16x128xi1>, vector<16x128xf32>
      %cst_53 = arith.constant 0.000000e+00 : f32
      %248 = vector.shape_cast %241 : vector<16x1xi1> to vector<16x1xi1>
      %249 = vector.broadcast %248 : vector<16x1xi1> to vector<16x128xi1>
      %250 = vector.broadcast %cst_53 : f32 to vector<16x128xf32>
      %251 = arith.select %249, %238, %250 : vector<16x128xi1>, vector<16x128xf32>
      %252 = arith.truncf %251 : vector<16x128xf32> to vector<16x128xbf16>
      %c4 = arith.constant 4 : index
      %c0_54 = arith.constant 0 : index
      %c0_55 = arith.constant 0 : index
      %253 = vector.load %arg10[%c4, %c0_54, %c0_55] : memref<8x16x128xbf16, #tpu.memory_space<vmem>>, vector<1x16x128xbf16>
      %254 = vector.shape_cast %253 : vector<1x16x128xbf16> to vector<16x128xbf16>
      %255 = vector.shape_cast %252 : vector<16x128xbf16> to vector<1x16x128xbf16>
      tpu.vector_store %arg10[%c4, %c0_54, %c0_55], %255 {strides = array<i32>} : memref<8x16x128xbf16, #tpu.memory_space<vmem>>, vector<1x16x128xbf16>,
      %256 = vector.extract_strided_slice %23 {offsets = [80, 0], sizes = [16, 512], strides = [1, 1]} : vector<128x512xf32> to vector<16x512xf32>
      %257 = arith.truncf %244 : vector<16x128xf32> to vector<16x128xbf16>
      %cst_56 = arith.constant dense<0.000000e+00> : vector<16x512xf32>
      %258 = tpu.matmul %257, %16, %cst_56 {dimension_numbers = #tpu.dot_dimension_numbers<[1], [0], [0], [1], [0, 0, 1, 1], [], []>} : vector<16x128xbf16>, vector<128x512xbf16>, vector<16x512xf32> -> vector<16x512xf32>
      %259 = arith.addf %256, %258 : vector<16x512xf32>
      %260 = vector.extract_strided_slice %259 {offsets = [0, 0], sizes = [16, 128], strides = [1, 1]} : vector<16x512xf32> to vector<16x128xf32>
      %261 = arith.negf %260 : vector<16x128xf32>
      %262 = math.exp %261 : vector<16x128xf32>
      %cst_57 = arith.constant 1.000000e+00 : f32
      %263 = vector.broadcast %cst_57 : f32 to vector<16x128xf32>
      %264 = arith.addf %263, %262 : vector<16x128xf32>
      %265 = arith.divf %263, %264 : vector<16x128xf32>
      %266 = vector.extract_strided_slice %259 {offsets = [0, 128], sizes = [16, 128], strides = [1, 1]} : vector<16x512xf32> to vector<16x128xf32>
      %267 = arith.negf %266 : vector<16x128xf32>
      %268 = math.exp %267 : vector<16x128xf32>
      %cst_58 = arith.constant 1.000000e+00 : f32
      %269 = vector.broadcast %cst_58 : f32 to vector<16x128xf32>
      %270 = arith.addf %269, %268 : vector<16x128xf32>
      %271 = arith.divf %269, %270 : vector<16x128xf32>
      %272 = vector.extract_strided_slice %259 {offsets = [0, 256], sizes = [16, 128], strides = [1, 1]} : vector<16x512xf32> to vector<16x128xf32>
      %273 = math.tanh %272 : vector<16x128xf32>
      %274 = vector.extract_strided_slice %259 {offsets = [0, 384], sizes = [16, 128], strides = [1, 1]} : vector<16x512xf32> to vector<16x128xf32>
      %275 = arith.negf %274 : vector<16x128xf32>
      %276 = math.exp %275 : vector<16x128xf32>
      %cst_59 = arith.constant 1.000000e+00 : f32
      %277 = vector.broadcast %cst_59 : f32 to vector<16x128xf32>
      %278 = arith.addf %277, %276 : vector<16x128xf32>
      %279 = arith.divf %277, %278 : vector<16x128xf32>
      %280 = arith.mulf %271, %247 : vector<16x128xf32>
      %281 = arith.mulf %265, %273 : vector<16x128xf32>
      %282 = arith.addf %280, %281 : vector<16x128xf32>
      %283 = math.tanh %282 : vector<16x128xf32>
      %284 = arith.mulf %279, %283 : vector<16x128xf32>
      %c5_i32 = arith.constant 5 : i32
      %285 = arith.addi %3, %c5_i32 : i32
      %286 = vector.broadcast %285 : i32 to vector<16x1xi32>
      %287 = arith.cmpi slt, %286, %15 : vector<16x1xi32>
      %288 = vector.shape_cast %287 : vector<16x1xi1> to vector<16x1xi1>
      %289 = vector.broadcast %288 : vector<16x1xi1> to vector<16x128xi1>
      %290 = arith.select %289, %284, %244 : vector<16x128xi1>, vector<16x128xf32>
      %291 = vector.shape_cast %287 : vector<16x1xi1> to vector<16x1xi1>
      %292 = vector.broadcast %291 : vector<16x1xi1> to vector<16x128xi1>
      %293 = arith.select %292, %282, %247 : vector<16x128xi1>, vector<16x128xf32>
      %cst_60 = arith.constant 0.000000e+00 : f32
      %294 = vector.shape_cast %287 : vector<16x1xi1> to vector<16x1xi1>
      %295 = vector.broadcast %294 : vector<16x1xi1> to vector<16x128xi1>
      %296 = vector.broadcast %cst_60 : f32 to vector<16x128xf32>
      %297 = arith.select %295, %284, %296 : vector<16x128xi1>, vector<16x128xf32>
      %298 = arith.truncf %297 : vector<16x128xf32> to vector<16x128xbf16>
      %c5 = arith.constant 5 : index
      %c0_61 = arith.constant 0 : index
      %c0_62 = arith.constant 0 : index
      %299 = vector.load %arg10[%c5, %c0_61, %c0_62] : memref<8x16x128xbf16, #tpu.memory_space<vmem>>, vector<1x16x128xbf16>
      %300 = vector.shape_cast %299 : vector<1x16x128xbf16> to vector<16x128xbf16>
      %301 = vector.shape_cast %298 : vector<16x128xbf16> to vector<1x16x128xbf16>
      tpu.vector_store %arg10[%c5, %c0_61, %c0_62], %301 {strides = array<i32>} : memref<8x16x128xbf16, #tpu.memory_space<vmem>>, vector<1x16x128xbf16>,
      %302 = vector.extract_strided_slice %23 {offsets = [96, 0], sizes = [16, 512], strides = [1, 1]} : vector<128x512xf32> to vector<16x512xf32>
      %303 = arith.truncf %290 : vector<16x128xf32> to vector<16x128xbf16>
      %cst_63 = arith.constant dense<0.000000e+00> : vector<16x512xf32>
      %304 = tpu.matmul %303, %16, %cst_63 {dimension_numbers = #tpu.dot_dimension_numbers<[1], [0], [0], [1], [0, 0, 1, 1], [], []>} : vector<16x128xbf16>, vector<128x512xbf16>, vector<16x512xf32> -> vector<16x512xf32>
      %305 = arith.addf %302, %304 : vector<16x512xf32>
      %306 = vector.extract_strided_slice %305 {offsets = [0, 0], sizes = [16, 128], strides = [1, 1]} : vector<16x512xf32> to vector<16x128xf32>
      %307 = arith.negf %306 : vector<16x128xf32>
      %308 = math.exp %307 : vector<16x128xf32>
      %cst_64 = arith.constant 1.000000e+00 : f32
      %309 = vector.broadcast %cst_64 : f32 to vector<16x128xf32>
      %310 = arith.addf %309, %308 : vector<16x128xf32>
      %311 = arith.divf %309, %310 : vector<16x128xf32>
      %312 = vector.extract_strided_slice %305 {offsets = [0, 128], sizes = [16, 128], strides = [1, 1]} : vector<16x512xf32> to vector<16x128xf32>
      %313 = arith.negf %312 : vector<16x128xf32>
      %314 = math.exp %313 : vector<16x128xf32>
      %cst_65 = arith.constant 1.000000e+00 : f32
      %315 = vector.broadcast %cst_65 : f32 to vector<16x128xf32>
      %316 = arith.addf %315, %314 : vector<16x128xf32>
      %317 = arith.divf %315, %316 : vector<16x128xf32>
      %318 = vector.extract_strided_slice %305 {offsets = [0, 256], sizes = [16, 128], strides = [1, 1]} : vector<16x512xf32> to vector<16x128xf32>
      %319 = math.tanh %318 : vector<16x128xf32>
      %320 = vector.extract_strided_slice %305 {offsets = [0, 384], sizes = [16, 128], strides = [1, 1]} : vector<16x512xf32> to vector<16x128xf32>
      %321 = arith.negf %320 : vector<16x128xf32>
      %322 = math.exp %321 : vector<16x128xf32>
      %cst_66 = arith.constant 1.000000e+00 : f32
      %323 = vector.broadcast %cst_66 : f32 to vector<16x128xf32>
      %324 = arith.addf %323, %322 : vector<16x128xf32>
      %325 = arith.divf %323, %324 : vector<16x128xf32>
      %326 = arith.mulf %317, %293 : vector<16x128xf32>
      %327 = arith.mulf %311, %319 : vector<16x128xf32>
      %328 = arith.addf %326, %327 : vector<16x128xf32>
      %329 = math.tanh %328 : vector<16x128xf32>
      %330 = arith.mulf %325, %329 : vector<16x128xf32>
      %c6_i32 = arith.constant 6 : i32
      %331 = arith.addi %3, %c6_i32 : i32
      %332 = vector.broadcast %331 : i32 to vector<16x1xi32>
      %333 = arith.cmpi slt, %332, %15 : vector<16x1xi32>
      %334 = vector.shape_cast %333 : vector<16x1xi1> to vector<16x1xi1>
      %335 = vector.broadcast %334 : vector<16x1xi1> to vector<16x128xi1>
      %336 = arith.select %335, %330, %290 : vector<16x128xi1>, vector<16x128xf32>
      %337 = vector.shape_cast %333 : vector<16x1xi1> to vector<16x1xi1>
      %338 = vector.broadcast %337 : vector<16x1xi1> to vector<16x128xi1>
      %339 = arith.select %338, %328, %293 : vector<16x128xi1>, vector<16x128xf32>
      %cst_67 = arith.constant 0.000000e+00 : f32
      %340 = vector.shape_cast %333 : vector<16x1xi1> to vector<16x1xi1>
      %341 = vector.broadcast %340 : vector<16x1xi1> to vector<16x128xi1>
      %342 = vector.broadcast %cst_67 : f32 to vector<16x128xf32>
      %343 = arith.select %341, %330, %342 : vector<16x128xi1>, vector<16x128xf32>
      %344 = arith.truncf %343 : vector<16x128xf32> to vector<16x128xbf16>
      %c6 = arith.constant 6 : index
      %c0_68 = arith.constant 0 : index
      %c0_69 = arith.constant 0 : index
      %345 = vector.load %arg10[%c6, %c0_68, %c0_69] : memref<8x16x128xbf16, #tpu.memory_space<vmem>>, vector<1x16x128xbf16>
      %346 = vector.shape_cast %345 : vector<1x16x128xbf16> to vector<16x128xbf16>
      %347 = vector.shape_cast %344 : vector<16x128xbf16> to vector<1x16x128xbf16>
      tpu.vector_store %arg10[%c6, %c0_68, %c0_69], %347 {strides = array<i32>} : memref<8x16x128xbf16, #tpu.memory_space<vmem>>, vector<1x16x128xbf16>,
      %348 = vector.extract_strided_slice %23 {offsets = [112, 0], sizes = [16, 512], strides = [1, 1]} : vector<128x512xf32> to vector<16x512xf32>
      %349 = arith.truncf %336 : vector<16x128xf32> to vector<16x128xbf16>
      %cst_70 = arith.constant dense<0.000000e+00> : vector<16x512xf32>
      %350 = tpu.matmul %349, %16, %cst_70 {dimension_numbers = #tpu.dot_dimension_numbers<[1], [0], [0], [1], [0, 0, 1, 1], [], []>} : vector<16x128xbf16>, vector<128x512xbf16>, vector<16x512xf32> -> vector<16x512xf32>
      %351 = arith.addf %348, %350 : vector<16x512xf32>
      %352 = vector.extract_strided_slice %351 {offsets = [0, 0], sizes = [16, 128], strides = [1, 1]} : vector<16x512xf32> to vector<16x128xf32>
      %353 = arith.negf %352 : vector<16x128xf32>
      %354 = math.exp %353 : vector<16x128xf32>
      %cst_71 = arith.constant 1.000000e+00 : f32
      %355 = vector.broadcast %cst_71 : f32 to vector<16x128xf32>
      %356 = arith.addf %355, %354 : vector<16x128xf32>
      %357 = arith.divf %355, %356 : vector<16x128xf32>
      %358 = vector.extract_strided_slice %351 {offsets = [0, 128], sizes = [16, 128], strides = [1, 1]} : vector<16x512xf32> to vector<16x128xf32>
      %359 = arith.negf %358 : vector<16x128xf32>
      %360 = math.exp %359 : vector<16x128xf32>
      %cst_72 = arith.constant 1.000000e+00 : f32
      %361 = vector.broadcast %cst_72 : f32 to vector<16x128xf32>
      %362 = arith.addf %361, %360 : vector<16x128xf32>
      %363 = arith.divf %361, %362 : vector<16x128xf32>
      %364 = vector.extract_strided_slice %351 {offsets = [0, 256], sizes = [16, 128], strides = [1, 1]} : vector<16x512xf32> to vector<16x128xf32>
      %365 = math.tanh %364 : vector<16x128xf32>
      %366 = vector.extract_strided_slice %351 {offsets = [0, 384], sizes = [16, 128], strides = [1, 1]} : vector<16x512xf32> to vector<16x128xf32>
      %367 = arith.negf %366 : vector<16x128xf32>
      %368 = math.exp %367 : vector<16x128xf32>
      %cst_73 = arith.constant 1.000000e+00 : f32
      %369 = vector.broadcast %cst_73 : f32 to vector<16x128xf32>
      %370 = arith.addf %369, %368 : vector<16x128xf32>
      %371 = arith.divf %369, %370 : vector<16x128xf32>
      %372 = arith.mulf %363, %339 : vector<16x128xf32>
      %373 = arith.mulf %357, %365 : vector<16x128xf32>
      %374 = arith.addf %372, %373 : vector<16x128xf32>
      %375 = math.tanh %374 : vector<16x128xf32>
      %376 = arith.mulf %371, %375 : vector<16x128xf32>
      %c7_i32 = arith.constant 7 : i32
      %377 = arith.addi %3, %c7_i32 : i32
      %378 = vector.broadcast %377 : i32 to vector<16x1xi32>
      %379 = arith.cmpi slt, %378, %15 : vector<16x1xi32>
      %380 = vector.shape_cast %379 : vector<16x1xi1> to vector<16x1xi1>
      %381 = vector.broadcast %380 : vector<16x1xi1> to vector<16x128xi1>
      %382 = arith.select %381, %376, %336 : vector<16x128xi1>, vector<16x128xf32>
      %383 = vector.shape_cast %379 : vector<16x1xi1> to vector<16x1xi1>
      %384 = vector.broadcast %383 : vector<16x1xi1> to vector<16x128xi1>
      %385 = arith.select %384, %374, %339 : vector<16x128xi1>, vector<16x128xf32>
      %cst_74 = arith.constant 0.000000e+00 : f32
      %386 = vector.shape_cast %379 : vector<16x1xi1> to vector<16x1xi1>
      %387 = vector.broadcast %386 : vector<16x1xi1> to vector<16x128xi1>
      %388 = vector.broadcast %cst_74 : f32 to vector<16x128xf32>
      %389 = arith.select %387, %376, %388 : vector<16x128xi1>, vector<16x128xf32>
      %390 = arith.truncf %389 : vector<16x128xf32> to vector<16x128xbf16>
      %c7 = arith.constant 7 : index
      %c0_75 = arith.constant 0 : index
      %c0_76 = arith.constant 0 : index
      %391 = vector.load %arg10[%c7, %c0_75, %c0_76] : memref<8x16x128xbf16, #tpu.memory_space<vmem>>, vector<1x16x128xbf16>
      %392 = vector.shape_cast %391 : vector<1x16x128xbf16> to vector<16x128xbf16>
      %393 = vector.shape_cast %390 : vector<16x128xbf16> to vector<1x16x128xbf16>
      tpu.vector_store %arg10[%c7, %c0_75, %c0_76], %393 {strides = array<i32>} : memref<8x16x128xbf16, #tpu.memory_space<vmem>>, vector<1x16x128xbf16>,
      %c0_77 = arith.constant 0 : index
      %c0_78 = arith.constant 0 : index
      %394 = vector.load %arg12[%c0_77, %c0_78] : memref<16x128xf32, #tpu.memory_space<vmem>>, vector<16x128xf32>
      tpu.vector_store %arg12[%c0_77, %c0_78], %382 {strides = array<i32>} : memref<16x128xf32, #tpu.memory_space<vmem>>, vector<16x128xf32>,
      %c0_79 = arith.constant 0 : index
      %c0_80 = arith.constant 0 : index
      %395 = vector.load %arg13[%c0_79, %c0_80] : memref<16x128xf32, #tpu.memory_space<vmem>>, vector<16x128xf32>
      tpu.vector_store %arg13[%c0_79, %c0_80], %385 {strides = array<i32>} : memref<16x128xf32, #tpu.memory_space<vmem>>, vector<16x128xf32>,
    } else {
    }
    %c1_i32 = arith.constant 1 : i32
    %12 = arith.cmpi eq, %arg1, %c1_i32 : i32
    %13 = arith.extui %12 : i1 to i32
    %c0_i32_3 = arith.constant 0 : i32
    %14 = arith.cmpi ne, %13, %c0_i32_3 : i32
    scf.if %14 {
      %c0 = arith.constant 0 : index
      %c0_4 = arith.constant 0 : index
      %15 = vector.load %arg12[%c0, %c0_4] : memref<16x128xf32, #tpu.memory_space<vmem>>, vector<16x128xf32>
      %16 = arith.truncf %15 : vector<16x128xf32> to vector<16x128xbf16>
      %c0_5 = arith.constant 0 : index
      %c0_6 = arith.constant 0 : index
      %17 = vector.load %arg8[%c0_5, %c0_6] : memref<128x128xbf16, #tpu.memory_space<vmem>>, vector<128x128xbf16>
      %cst = arith.constant dense<0.000000e+00> : vector<16x128xf32>
      %18 = tpu.matmul %16, %17, %cst {dimension_numbers = #tpu.dot_dimension_numbers<[1], [0], [0], [1], [0, 0, 1, 1], [], []>} : vector<16x128xbf16>, vector<128x128xbf16>, vector<16x128xf32> -> vector<16x128xf32>
      %c0_7 = arith.constant 0 : index
      %c0_8 = arith.constant 0 : index
      %19 = vector.load %arg9[%c0_7, %c0_8] : memref<1x128xf32, #tpu.memory_space<vmem>>, vector<1x128xf32>
      %20 = vector.broadcast %19 : vector<1x128xf32> to vector<16x128xf32>
      %21 = arith.addf %18, %20 : vector<16x128xf32>
      %22 = math.tanh %21 : vector<16x128xf32>
      %c0_9 = arith.constant 0 : index
      %c0_10 = arith.constant 0 : index
      %23 = vector.load %arg11[%c0_9, %c0_10] : memref<16x256xf32, #tpu.memory_space<vmem>>, vector<16x128xf32>
      tpu.vector_store %arg11[%c0_9, %c0_10], %22 {strides = array<i32>} : memref<16x256xf32, #tpu.memory_space<vmem>>, vector<16x128xf32>,
      %c0_11 = arith.constant 0 : index
      %c0_12 = arith.constant 0 : index
      %24 = vector.load %arg13[%c0_11, %c0_12] : memref<16x128xf32, #tpu.memory_space<vmem>>, vector<16x128xf32>
      %c0_13 = arith.constant 0 : index
      %c128 = arith.constant 128 : index
      %25 = vector.load %arg11[%c0_13, %c128] : memref<16x256xf32, #tpu.memory_space<vmem>>, vector<16x128xf32>
      tpu.vector_store %arg11[%c0_13, %c128], %24 {strides = array<i32>} : memref<16x256xf32, #tpu.memory_space<vmem>>, vector<16x128xf32>,
    } else {
    }
    return
  }
  func.func @transform_0(%arg0: i32, %arg1: i32, %arg2: memref<2xi32, #tpu.memory_space<smem>>) -> (i32, i32, i32) {
    %c0_i32 = arith.constant 0 : i32
    %c0_i32_0 = arith.constant 0 : i32
    return %arg1, %arg0, %c0_i32 : i32, i32, i32
  }
  func.func @transform_1(%arg0: i32, %arg1: i32, %arg2: memref<2xi32, #tpu.memory_space<smem>>) -> (i32, i32) {
    %c0_i32 = arith.constant 0 : i32
    %c0_i32_0 = arith.constant 0 : i32
    return %arg0, %c0_i32 : i32, i32
  }
  func.func @transform_2(%arg0: i32, %arg1: i32, %arg2: memref<2xi32, #tpu.memory_space<smem>>) -> (i32, i32) {
    %c0_i32 = arith.constant 0 : i32
    %c0_i32_0 = arith.constant 0 : i32
    %c0_i32_1 = arith.constant 0 : i32
    return %c0_i32, %c0_i32_0 : i32, i32
  }
  func.func @transform_3(%arg0: i32, %arg1: i32, %arg2: memref<2xi32, #tpu.memory_space<smem>>) -> (i32, i32) {
    %c0_i32 = arith.constant 0 : i32
    %c0_i32_0 = arith.constant 0 : i32
    %c0_i32_1 = arith.constant 0 : i32
    return %c0_i32, %c0_i32_0 : i32, i32
  }
  func.func @transform_4(%arg0: i32, %arg1: i32, %arg2: memref<2xi32, #tpu.memory_space<smem>>) -> (i32, i32) {
    %c0_i32 = arith.constant 0 : i32
    %c0_i32_0 = arith.constant 0 : i32
    %c0_i32_1 = arith.constant 0 : i32
    return %c0_i32, %c0_i32_0 : i32, i32
  }
  func.func @transform_5(%arg0: i32, %arg1: i32, %arg2: memref<2xi32, #tpu.memory_space<smem>>) -> (i32, i32) {
    %c0_i32 = arith.constant 0 : i32
    %c0_i32_0 = arith.constant 0 : i32
    %c0_i32_1 = arith.constant 0 : i32
    return %c0_i32, %c0_i32_0 : i32, i32
  }
  func.func @transform_6(%arg0: i32, %arg1: i32, %arg2: memref<2xi32, #tpu.memory_space<smem>>) -> (i32, i32) {
    %c0_i32 = arith.constant 0 : i32
    %c0_i32_0 = arith.constant 0 : i32
    %c0_i32_1 = arith.constant 0 : i32
    return %c0_i32, %c0_i32_0 : i32, i32
  }
  func.func @transform_7(%arg0: i32, %arg1: i32, %arg2: memref<2xi32, #tpu.memory_space<smem>>) -> (i32, i32, i32) {
    %c0_i32 = arith.constant 0 : i32
    %c0_i32_0 = arith.constant 0 : i32
    return %arg1, %arg0, %c0_i32 : i32, i32, i32
  }
  func.func @transform_8(%arg0: i32, %arg1: i32, %arg2: memref<2xi32, #tpu.memory_space<smem>>) -> (i32, i32) {
    %c0_i32 = arith.constant 0 : i32
    %c0_i32_0 = arith.constant 0 : i32
    return %arg0, %c0_i32 : i32, i32
  }
}

</mosaic_0001>

<llo_original>
// kernel: encoder_lstm_forward.1
$region0: #{encoder_lstm_forward.1}
  #allocation0 [shape = 'u32[]', space=smem, size = 0x4, offset = 0x4, fixed_abs, tag = 'smem constant byte address 0x4 - core index']
  #allocation1 [shape = 'u32[144,128]{1,0:T(1,128)}', space=vmem, size = 0x12000, scoped, tag = 'internal scratch']
  #allocation2 [shape = 'f32[16,128]{1,0:T(8,128)}', space=vmem, size = 0x2000, scoped, tag = 'scratch operand']
  #allocation3 [shape = 'f32[16,128]{1,0:T(8,128)}', space=vmem, size = 0x2000, scoped, tag = 'scratch operand']
  #allocation4 [shape = 's32[1]{0}', space=sflag, size = 0x4, scoped, tag = 'scoped memory for encoder_lstm_forward.1']
  #allocation5 [shape = 'u8[512]{0}', space=smem, size = 0x200, scoped, tag = 'prefetched SMEM operand 0']
  %s0 = inlined_call_operand.vmem [shape: s32[2], index: 0, kind: input, shape index: {}]
  %s1 = inlined_call_operand.vmem [shape: bf16[16,32,128], index: 1, kind: input, shape index: {}]
  %s2 = inlined_call_operand.vmem [shape: s32[32,1], index: 2, kind: input, shape index: {}]
  %s3 = inlined_call_operand.vmem [shape: bf16[128,512], index: 3, kind: input, shape index: {}]
  %s4 = inlined_call_operand.vmem [shape: bf16[128,512], index: 4, kind: input, shape index: {}]
  %s5 = inlined_call_operand.vmem [shape: f32[1,512], index: 5, kind: input, shape index: {}]
  %s6 = inlined_call_operand.vmem [shape: bf16[128,128], index: 6, kind: input, shape index: {}]
  %s7 = inlined_call_operand.vmem [shape: f32[1,128], index: 7, kind: input, shape index: {}]
  %s8 = inlined_call_operand.vmem [shape: bf16[16,32,128], index: 8, kind: output, shape index: {0}]
  %s9 = inlined_call_operand.vmem [shape: f32[32,256], index: 9, kind: output, shape index: {1}]
  %10 = xla_tuple %s8, %s9
  %s11 = sld [smem:[#allocation0]]
  $region163: #{encoder_lstm_forward.1} parent=0
    _
  %s13 = ssub.s32 1, %s11
  %s14 = scalar_select 0, %s13, %s11
  %s15 = sshll.u32 %s0, 4
  %s16 = int_to_ptr.vmem [resolvable:$true] %s15
  %18 = dma.vmem_to_smem %s16, 16, [#allocation5], [#allocation4]
  %19 = dma.done [#allocation4], 16
  %20 = sfence
  $region1: #{encoder_lstm_forward.1} parent=0
    #allocation6 [shape = 'u8[65536]{0}', space=vmem, size = 0x10000, scoped, tag = 'input window, operand 1']
    #allocation7 [shape = 'u8[65536]{0}', space=vmem, size = 0x10000, scoped, tag = 'output window, operand 0']
    loop: start=0, step=1, limit=6
    $region2: #{encoder_lstm_forward.1} parent=1 // loop_pre_header
      _
    $region3: #{encoder_lstm_forward.1} parent=1 // loop_header
      %s22 = sphi 0, %s26
      %p23 = scmp.ge.s32.totalorder %s22, 6
      %s29 = sphi 0, %s41
      %s30 = sphi 0, %s37
      %s31 = sphi 0, %s29
      %s32 = sphi 0, %s30
      %s33 = sphi 0, %s31
      %s34 = sphi 0, %s32
      %s46 = sphi 0, %s48
      %s49 = sphi 0, %s46
      %s50 = sphi 0, %s49
      %s66 = sphi 0, %s50
      %s72 = sphi 0, %s74
      %s75 = sphi 0, %s72
      %s76 = sphi 0, %s75
      %s92 = sphi 0, %s76
      %s96 = sphi 0, %s96
      %s98 = sphi 0, %s96
      %s99 = sphi 0, %s98
      %s113 = sphi 0, %s99
      %s117 = sphi 0, %s117
      %s119 = sphi 0, %s117
      %s120 = sphi 0, %s119
      %s134 = sphi 0, %s120
      %s138 = sphi 0, %s138
      %s140 = sphi 0, %s138
      %s141 = sphi 0, %s140
      %s155 = sphi 0, %s141
      %s159 = sphi 0, %s159
      %s161 = sphi 0, %s159
      %s162 = sphi 0, %s161
      %s176 = sphi 0, %s162
      %s180 = sphi 0, %s180
      %s182 = sphi 0, %s180
      %s183 = sphi 0, %s182
      %s197 = sphi 0, %s183
      %s205 = sphi 0, %s207
      %s208 = sphi 0, %s205
      %s209 = sphi 0, %s208
      %s225 = sphi 0, %s209
      %s231 = sphi 0, %s233
      %s234 = sphi 0, %s231
      %s235 = sphi 0, %s234
      %s251 = sphi 0, %s235
    $region4: #{encoder_lstm_forward.1} parent=1 // loop_header_branch
      %25 = sbr.rel (%p23) target = $region8
    $region5: #{encoder_lstm_forward.1} parent=1 // loop_body
      %s27 = ssub.s32 %s22, 1
      %s28 = ssub.s32 %s22, 2
      %s35 = sadd.s32 1, %s30
      %p36 = scmp.ge.s32.totalorder %s35, 2
      %s37 = scalar_select %p36, 0, %s35
      %s38 = sadd.s32 1, %s29
      %s39 = scalar_select %p36, %s38, %s29
      %p40 = scmp.ge.s32.totalorder %s39, 2
      %s41 = scalar_select %p40, 0, %s39
      %s42 = ssub.s32 %s30, %s37
      %s43 = ssub.s32 %s29, %s41
      %s44 = sor.u32 %s42, %s43
      %p45 = scmp.eq.s32.totalorder %s44, 0
      %s47 = sadd.s32 %s46, 1
      %s48 = scalar_select %p45, %s46, %s47
      %p51 = pneg %p45
      %p52 = scmp.eq.s32.totalorder %s22, 3
      %p53 = por %p51, %p52
      %p54 = scmp.ne.s32.totalorder %s46, %s49
      %p55 = scmp.eq.s32.totalorder %s22, 0
      %p56 = por %p54, %p55
      %p57 = scmp.ne.s32.totalorder %s46, %s49
      %p58 = scmp.eq.s32.totalorder %s27, 3
      %p59 = por %p57, %p58
      %p60 = scmp.ne.s32.totalorder %s49, %s50
      %p61 = scmp.eq.s32.totalorder %s27, 0
      %p62 = por %p60, %p61
      %p63 = scmp.ne.s32.totalorder %s49, %s50
      %p64 = scmp.eq.s32.totalorder %s28, 3
      %p65 = por %p63, %p64
      %p67 = scmp.ne.s32.totalorder %s50, %s66
      %p68 = scmp.eq.s32.totalorder %s28, 0
      %p69 = por %p67, %p68
      %s70 = ssub.s32 %s29, %s41
      %p71 = scmp.eq.s32.totalorder %s70, 0
      %s73 = sadd.s32 %s72, 1
      %s74 = scalar_select %p71, %s72, %s73
      %p77 = pneg %p71
      %p78 = scmp.eq.s32.totalorder %s22, 3
      %p79 = por %p77, %p78
      %p80 = scmp.ne.s32.totalorder %s72, %s75
      %p81 = scmp.eq.s32.totalorder %s22, 0
      %p82 = por %p80, %p81
      %p83 = scmp.ne.s32.totalorder %s72, %s75
      %p84 = scmp.eq.s32.totalorder %s27, 3
      %p85 = por %p83, %p84
      %p86 = scmp.ne.s32.totalorder %s75, %s76
      %p87 = scmp.eq.s32.totalorder %s27, 0
      %p88 = por %p86, %p87
      %p89 = scmp.ne.s32.totalorder %s75, %s76
      %p90 = scmp.eq.s32.totalorder %s28, 3
      %p91 = por %p89, %p90
      %p93 = scmp.ne.s32.totalorder %s76, %s92
      %p94 = scmp.eq.s32.totalorder %s28, 0
      %p95 = por %p93, %p94
      %s97 = sadd.s32 %s96, 1
      %p100 = scmp.eq.s32.totalorder %s22, 3
      %p101 = scmp.ne.s32.totalorder %s96, %s98
      %p102 = scmp.eq.s32.totalorder %s22, 0
      %p103 = por %p101, %p102
      %p104 = scmp.ne.s32.totalorder %s96, %s98
      %p105 = scmp.eq.s32.totalorder %s27, 3
      %p106 = por %p104, %p105
      %p107 = scmp.ne.s32.totalorder %s98, %s99
      %p108 = scmp.eq.s32.totalorder %s27, 0
      %p109 = por %p107, %p108
      %p110 = scmp.ne.s32.totalorder %s98, %s99
      %p111 = scmp.eq.s32.totalorder %s28, 3
      %p112 = por %p110, %p111
      %p114 = scmp.ne.s32.totalorder %s99, %s113
      %p115 = scmp.eq.s32.totalorder %s28, 0
      %p116 = por %p114, %p115
      %s118 = sadd.s32 %s117, 1
      %p121 = scmp.eq.s32.totalorder %s22, 3
      %p122 = scmp.ne.s32.totalorder %s117, %s119
      %p123 = scmp.eq.s32.totalorder %s22, 0
      %p124 = por %p122, %p123
      %p125 = scmp.ne.s32.totalorder %s117, %s119
      %p126 = scmp.eq.s32.totalorder %s27, 3
      %p127 = por %p125, %p126
      %p128 = scmp.ne.s32.totalorder %s119, %s120
      %p129 = scmp.eq.s32.totalorder %s27, 0
      %p130 = por %p128, %p129
      %p131 = scmp.ne.s32.totalorder %s119, %s120
      %p132 = scmp.eq.s32.totalorder %s28, 3
      %p133 = por %p131, %p132
      %p135 = scmp.ne.s32.totalorder %s120, %s134
      %p136 = scmp.eq.s32.totalorder %s28, 0
      %p137 = por %p135, %p136
      %s139 = sadd.s32 %s138, 1
      %p142 = scmp.eq.s32.totalorder %s22, 3
      %p143 = scmp.ne.s32.totalorder %s138, %s140
      %p144 = scmp.eq.s32.totalorder %s22, 0
      %p145 = por %p143, %p144
      %p146 = scmp.ne.s32.totalorder %s138, %s140
      %p147 = scmp.eq.s32.totalorder %s27, 3
      %p148 = por %p146, %p147
      %p149 = scmp.ne.s32.totalorder %s140, %s141
      %p150 = scmp.eq.s32.totalorder %s27, 0
      %p151 = por %p149, %p150
      %p152 = scmp.ne.s32.totalorder %s140, %s141
      %p153 = scmp.eq.s32.totalorder %s28, 3
      %p154 = por %p152, %p153
      %p156 = scmp.ne.s32.totalorder %s141, %s155
      %p157 = scmp.eq.s32.totalorder %s28, 0
      %p158 = por %p156, %p157
      %s160 = sadd.s32 %s159, 1
      %p163 = scmp.eq.s32.totalorder %s22, 3
      %p164 = scmp.ne.s32.totalorder %s159, %s161
      %p165 = scmp.eq.s32.totalorder %s22, 0
      %p166 = por %p164, %p165
      %p167 = scmp.ne.s32.totalorder %s159, %s161
      %p168 = scmp.eq.s32.totalorder %s27, 3
      %p169 = por %p167, %p168
      %p170 = scmp.ne.s32.totalorder %s161, %s162
      %p171 = scmp.eq.s32.totalorder %s27, 0
      %p172 = por %p170, %p171
      %p173 = scmp.ne.s32.totalorder %s161, %s162
      %p174 = scmp.eq.s32.totalorder %s28, 3
      %p175 = por %p173, %p174
      %p177 = scmp.ne.s32.totalorder %s162, %s176
      %p178 = scmp.eq.s32.totalorder %s28, 0
      %p179 = por %p177, %p178
      %s181 = sadd.s32 %s180, 1
      %p184 = scmp.eq.s32.totalorder %s22, 3
      %p185 = scmp.ne.s32.totalorder %s180, %s182
      %p186 = scmp.eq.s32.totalorder %s22, 0
      %p187 = por %p185, %p186
      %p188 = scmp.ne.s32.totalorder %s180, %s182
      %p189 = scmp.eq.s32.totalorder %s27, 3
      %p190 = por %p188, %p189
      %p191 = scmp.ne.s32.totalorder %s182, %s183
      %p192 = scmp.eq.s32.totalorder %s27, 0
      %p193 = por %p191, %p192
      %p194 = scmp.ne.s32.totalorder %s182, %s183
      %p195 = scmp.eq.s32.totalorder %s28, 3
      %p196 = por %p194, %p195
      %p198 = scmp.ne.s32.totalorder %s183, %s197
      %p199 = scmp.eq.s32.totalorder %s28, 0
      %p200 = por %p198, %p199
      %s201 = ssub.s32 %s30, %s37
      %s202 = ssub.s32 %s29, %s41
      %s203 = sor.u32 %s201, %s202
      %p204 = scmp.eq.s32.totalorder %s203, 0
      %s206 = sadd.s32 %s205, 1
      %s207 = scalar_select %p204, %s205, %s206
      %p210 = pneg %p204
      %p211 = scmp.eq.s32.totalorder %s22, 3
      %p212 = por %p210, %p211
      %p213 = scmp.ne.s32.totalorder %s205, %s208
      %p214 = scmp.eq.s32.totalorder %s22, 0
      %p215 = por %p213, %p214
      %p216 = scmp.ne.s32.totalorder %s205, %s208
      %p217 = scmp.eq.s32.totalorder %s27, 3
      %p218 = por %p216, %p217
      %p219 = scmp.ne.s32.totalorder %s208, %s209
      %p220 = scmp.eq.s32.totalorder %s27, 0
      %p221 = por %p219, %p220
      %p222 = scmp.ne.s32.totalorder %s208, %s209
      %p223 = scmp.eq.s32.totalorder %s28, 3
      %p224 = por %p222, %p223
      %p226 = scmp.ne.s32.totalorder %s209, %s225
      %p227 = scmp.eq.s32.totalorder %s28, 0
      %p228 = por %p226, %p227
      %s229 = ssub.s32 %s29, %s41
      %p230 = scmp.eq.s32.totalorder %s229, 0
      %s232 = sadd.s32 %s231, 1
      %s233 = scalar_select %p230, %s231, %s232
      %p236 = pneg %p230
      %p237 = scmp.eq.s32.totalorder %s22, 3
      %p238 = por %p236, %p237
      %p239 = scmp.ne.s32.totalorder %s231, %s234
      %p240 = scmp.eq.s32.totalorder %s22, 0
      %p241 = por %p239, %p240
      %p242 = scmp.ne.s32.totalorder %s231, %s234
      %p243 = scmp.eq.s32.totalorder %s27, 3
      %p244 = por %p242, %p243
      %p245 = scmp.ne.s32.totalorder %s234, %s235
      %p246 = scmp.eq.s32.totalorder %s27, 0
      %p247 = por %p245, %p246
      %p248 = scmp.ne.s32.totalorder %s234, %s235
      %p249 = scmp.eq.s32.totalorder %s28, 3
      %p250 = por %p248, %p249
      %p252 = scmp.ne.s32.totalorder %s235, %s251
      %p253 = scmp.eq.s32.totalorder %s28, 0
      %p254 = por %p252, %p253
      %p255 = scmp.le.s32.totalorder 1, %s22
      %p256 = scmp.lt.s32.totalorder %s22, 5
      %p257 = pnand %p255, %p256
      %p258 = pneg %p257
      // Predicated region
      $region9: #{encoder_lstm_forward.1} parent=5 // pred_check
        _
      $region10: #{encoder_lstm_forward.1} parent=5 // pred_check_branch
        %260 = sbr.rel (%p257) target = $region12
      $region11: #{encoder_lstm_forward.1} parent=5 // pred_region
        %s261 = ssub.s32 %s22, 1
        // Predicated region
        $region13: #{encoder_lstm_forward.1} parent=11 // pred_check
          %p262 = pneg %p109
        $region14: #{encoder_lstm_forward.1} parent=11 // pred_check_branch
          %264 = sbr.rel (%p262) target = $region16
        $region15: #{encoder_lstm_forward.1} parent=11 // pred_region
          _
        $region16: #{encoder_lstm_forward.1} parent=11 // pred_fallthru
          _
        // Predicated region
        $region17: #{encoder_lstm_forward.1} parent=11 // pred_check
          %p265 = pneg %p130
        $region18: #{encoder_lstm_forward.1} parent=11 // pred_check_branch
          %267 = sbr.rel (%p265) target = $region20
        $region19: #{encoder_lstm_forward.1} parent=11 // pred_region
          _
        $region20: #{encoder_lstm_forward.1} parent=11 // pred_fallthru
          _
        // Predicated region
        $region21: #{encoder_lstm_forward.1} parent=11 // pred_check
          %p268 = pneg %p151
        $region22: #{encoder_lstm_forward.1} parent=11 // pred_check_branch
          %270 = sbr.rel (%p268) target = $region24
        $region23: #{encoder_lstm_forward.1} parent=11 // pred_region
          _
        $region24: #{encoder_lstm_forward.1} parent=11 // pred_fallthru
          _
        // Predicated region
        $region25: #{encoder_lstm_forward.1} parent=11 // pred_check
          %p271 = pneg %p172
        $region26: #{encoder_lstm_forward.1} parent=11 // pred_check_branch
          %273 = sbr.rel (%p271) target = $region28
        $region27: #{encoder_lstm_forward.1} parent=11 // pred_region
          _
        $region28: #{encoder_lstm_forward.1} parent=11 // pred_fallthru
          _
        // Predicated region
        $region29: #{encoder_lstm_forward.1} parent=11 // pred_check
          %p274 = pneg %p193
        $region30: #{encoder_lstm_forward.1} parent=11 // pred_check_branch
          %276 = sbr.rel (%p274) target = $region32
        $region31: #{encoder_lstm_forward.1} parent=11 // pred_region
          _
        $region32: #{encoder_lstm_forward.1} parent=11 // pred_fallthru
          _
      $region12: #{encoder_lstm_forward.1} parent=5 // pred_fallthru
        _
      %p277 = scmp.lt.s32.totalorder %s22, 4
      // Predicated region
      $region33: #{encoder_lstm_forward.1} parent=5 // pred_check
        %p278 = pneg %p277
      $region34: #{encoder_lstm_forward.1} parent=5 // pred_check_branch
        %280 = sbr.rel (%p278) target = $region36
      $region35: #{encoder_lstm_forward.1} parent=5 // pred_region
        // Predicated region
        $region37: #{encoder_lstm_forward.1} parent=35 // pred_check
          %p281 = pneg %p56
        $region38: #{encoder_lstm_forward.1} parent=35 // pred_check_branch
          %283 = sbr.rel (%p281) target = $region40
        $region39: #{encoder_lstm_forward.1} parent=35 // pred_region
          %s284 = sand.u32 %s46, 1
          %s285 = sand.u32 %s46, 1
          %s286 = smul.addr %s285, 64
          %s287 = scalar_lea.vmem [#allocation6], %s286
          %s288 = smul.u32 8, %s30
          %s289 = smul.u32 2, %s29
          %s290 = smul.addr %s288, 4
          %s291 = sadd.s32 %s289, %s290
          %s292 = smul.addr %s291, 4
          %s293 = scalar_lea.vmem %s1, %s292
          // Predicated region
          $region41: #{encoder_lstm_forward.1} parent=39 // pred_check
            _
          $region42: #{encoder_lstm_forward.1} parent=39 // pred_check_branch
            %295 = sbr.rel (0) target = $region44
          $region43: #{encoder_lstm_forward.1} parent=39 // pred_region
            // Predicated region
            $region45: #{encoder_lstm_forward.1} parent=43 // pred_check
              _
            $region46: #{encoder_lstm_forward.1} parent=43 // pred_check_branch
              %297 = sbr.rel target = $region48
            $region47: #{encoder_lstm_forward.1} parent=43 // pred_region
              // Predicated region
              $region60: #{encoder_lstm_forward.1} parent=47 // pred_check
                _
              $region61: #{encoder_lstm_forward.1} parent=47 // pred_check_branch
                %343 = sbr.rel (0) target = $region63
              $region62: #{encoder_lstm_forward.1} parent=47 // pred_region
                loop: start=0, step=1, limit=1
                $region64: #{encoder_lstm_forward.1} parent=62 // loop_pre_header
                  _
                $region65: #{encoder_lstm_forward.1} parent=62 // loop_header
                  %s345 = sphi 0, %s349
                  %p346 = scmp.ge.s32.totalorder %s345, 1
                  %s350 = sphi %s293, %s293
                  %s351 = sphi %s287, %s287
                $region66: #{encoder_lstm_forward.1} parent=62 // loop_header_branch
                  %348 = sbr.rel (%p346) target = $region70
                $region67: #{encoder_lstm_forward.1} parent=62 // loop_body
                  _
                $region68: #{encoder_lstm_forward.1} parent=62 // loop_footer
                  %s349 = sadd.s32 1, %s345
                $region69: #{encoder_lstm_forward.1} parent=62 // loop_footer_branch
                  %344 = sbr.rel target = $region65
                $region70: #{encoder_lstm_forward.1} parent=62 // loop_exit
                  _
                %s353 = ssub.s32 16, 1
                loop: start=0, step=1, limit=1
                $region71: #{encoder_lstm_forward.1} parent=62 // loop_pre_header
                  _
                $region72: #{encoder_lstm_forward.1} parent=62 // loop_header
                  %s355 = sphi 0, %s359
                  %p356 = scmp.ge.s32.totalorder %s355, 1
                  %s360 = sphi %s293, %s293
                  %s361 = sphi %s287, %s287
                $region73: #{encoder_lstm_forward.1} parent=62 // loop_header_branch
                  %358 = sbr.rel (%p356) target = $region77
                $region74: #{encoder_lstm_forward.1} parent=62 // loop_body
                  %v362 = vld [vmem:[%s360] sm:%s353]
                  %363 = vst [vmem:[%s361] sm:%s353] %v362
                  %v364 = vld [vmem:[%s360 + $0x4] sm:%s353]
                  %365 = vst [vmem:[%s361 + $0x4] sm:%s353] %v364
                  %v366 = vld [vmem:[%s360 + $0x10] sm:%s353]
                  %367 = vst [vmem:[%s361 + $0x8] sm:%s353] %v366
                  %v368 = vld [vmem:[%s360 + $0x14] sm:%s353]
                  %369 = vst [vmem:[%s361 + $0xc] sm:%s353] %v368
                  %v370 = vld [vmem:[%s360 + $0x20] sm:%s353]
                  %371 = vst [vmem:[%s361 + $0x10] sm:%s353] %v370
                  %v372 = vld [vmem:[%s360 + $0x24] sm:%s353]
                  %373 = vst [vmem:[%s361 + $0x14] sm:%s353] %v372
                  %v374 = vld [vmem:[%s360 + $0x30] sm:%s353]
                  %375 = vst [vmem:[%s361 + $0x18] sm:%s353] %v374
                  %v376 = vld [vmem:[%s360 + $0x34] sm:%s353]
                  %377 = vst [vmem:[%s361 + $0x1c] sm:%s353] %v376
                  %v378 = vld [vmem:[%s360 + $0x40] sm:%s353]
                  %379 = vst [vmem:[%s361 + $0x20] sm:%s353] %v378
                  %v380 = vld [vmem:[%s360 + $0x44] sm:%s353]
                  %381 = vst [vmem:[%s361 + $0x24] sm:%s353] %v380
                  %v382 = vld [vmem:[%s360 + $0x50] sm:%s353]
                  %383 = vst [vmem:[%s361 + $0x28] sm:%s353] %v382
                  %v384 = vld [vmem:[%s360 + $0x54] sm:%s353]
                  %385 = vst [vmem:[%s361 + $0x2c] sm:%s353] %v384
                  %v386 = vld [vmem:[%s360 + $0x60] sm:%s353]
                  %387 = vst [vmem:[%s361 + $0x30] sm:%s353] %v386
                  %v388 = vld [vmem:[%s360 + $0x64] sm:%s353]
                  %389 = vst [vmem:[%s361 + $0x34] sm:%s353] %v388
                  %v390 = vld [vmem:[%s360 + $0x70] sm:%s353]
                  %391 = vst [vmem:[%s361 + $0x38] sm:%s353] %v390
                  %v392 = vld [vmem:[%s360 + $0x74] sm:%s353]
                  %393 = vst [vmem:[%s361 + $0x3c] sm:%s353] %v392
                $region75: #{encoder_lstm_forward.1} parent=62 // loop_footer
                  %s359 = sadd.s32 1, %s355
                $region76: #{encoder_lstm_forward.1} parent=62 // loop_footer_branch
                  %354 = sbr.rel target = $region72
                $region77: #{encoder_lstm_forward.1} parent=62 // loop_exit
                  _
              $region63: #{encoder_lstm_forward.1} parent=47 // pred_fallthru
                _
            $region48: #{encoder_lstm_forward.1} parent=43 // pred_fallthru
              _
            // Predicated region
            $region49: #{encoder_lstm_forward.1} parent=43 // pred_check
              _
            $region50: #{encoder_lstm_forward.1} parent=43 // pred_check_branch
              %299 = sbr.rel (0) target = $region52
            $region51: #{encoder_lstm_forward.1} parent=43 // pred_region
              %s301 = ssub.s32 16, 1
              loop: start=0, step=1, limit=1
              $region53: #{encoder_lstm_forward.1} parent=51 // loop_pre_header
                _
              $region54: #{encoder_lstm_forward.1} parent=51 // loop_header
                %s303 = sphi 0, %s307
                %p304 = scmp.ge.s32.totalorder %s303, 1
                %s308 = sphi %s293, %s293
                %s309 = sphi %s287, %s287
              $region55: #{encoder_lstm_forward.1} parent=51 // loop_header_branch
                %306 = sbr.rel (%p304) target = $region59
              $region56: #{encoder_lstm_forward.1} parent=51 // loop_body
                %v310 = vld [vmem:[%s308] sm:%s301]
                %311 = vst [vmem:[%s309] sm:%s301] %v310
                %v312 = vld [vmem:[%s308 + $0x4] sm:%s301]
                %313 = vst [vmem:[%s309 + $0x4] sm:%s301] %v312
                %v314 = vld [vmem:[%s308 + $0x10] sm:%s301]
                %315 = vst [vmem:[%s309 + $0x8] sm:%s301] %v314
                %v316 = vld [vmem:[%s308 + $0x14] sm:%s301]
                %317 = vst [vmem:[%s309 + $0xc] sm:%s301] %v316
                %v318 = vld [vmem:[%s308 + $0x20] sm:%s301]
                %319 = vst [vmem:[%s309 + $0x10] sm:%s301] %v318
                %v320 = vld [vmem:[%s308 + $0x24] sm:%s301]
                %321 = vst [vmem:[%s309 + $0x14] sm:%s301] %v320
                %v322 = vld [vmem:[%s308 + $0x30] sm:%s301]
                %323 = vst [vmem:[%s309 + $0x18] sm:%s301] %v322
                %v324 = vld [vmem:[%s308 + $0x34] sm:%s301]
                %325 = vst [vmem:[%s309 + $0x1c] sm:%s301] %v324
                %v326 = vld [vmem:[%s308 + $0x40] sm:%s301]
                %327 = vst [vmem:[%s309 + $0x20] sm:%s301] %v326
                %v328 = vld [vmem:[%s308 + $0x44] sm:%s301]
                %329 = vst [vmem:[%s309 + $0x24] sm:%s301] %v328
                %v330 = vld [vmem:[%s308 + $0x50] sm:%s301]
                %331 = vst [vmem:[%s309 + $0x28] sm:%s301] %v330
                %v332 = vld [vmem:[%s308 + $0x54] sm:%s301]
                %333 = vst [vmem:[%s309 + $0x2c] sm:%s301] %v332
                %v334 = vld [vmem:[%s308 + $0x60] sm:%s301]
                %335 = vst [vmem:[%s309 + $0x30] sm:%s301] %v334
                %v336 = vld [vmem:[%s308 + $0x64] sm:%s301]
                %337 = vst [vmem:[%s309 + $0x34] sm:%s301] %v336
                %v338 = vld [vmem:[%s308 + $0x70] sm:%s301]
                %339 = vst [vmem:[%s309 + $0x38] sm:%s301] %v338
                %v340 = vld [vmem:[%s308 + $0x74] sm:%s301]
                %341 = vst [vmem:[%s309 + $0x3c] sm:%s301] %v340
              $region57: #{encoder_lstm_forward.1} parent=51 // loop_footer
                %s307 = sadd.s32 1, %s303
              $region58: #{encoder_lstm_forward.1} parent=51 // loop_footer_branch
                %302 = sbr.rel target = $region54
              $region59: #{encoder_lstm_forward.1} parent=51 // loop_exit
                _
            $region52: #{encoder_lstm_forward.1} parent=43 // pred_fallthru
              _
          $region44: #{encoder_lstm_forward.1} parent=39 // pred_fallthru
            _
          %394 = vnop
        $region40: #{encoder_lstm_forward.1} parent=35 // pred_fallthru
          _
        // Predicated region
        $region78: #{encoder_lstm_forward.1} parent=35 // pred_check
          %p395 = pneg %p82
        $region79: #{encoder_lstm_forward.1} parent=35 // pred_check_branch
          %397 = sbr.rel (%p395) target = $region81
        $region80: #{encoder_lstm_forward.1} parent=35 // pred_region
          %s398 = smul.u32 2, %s29
          %p399 = scmp.lt.s32.totalorder %s398, 3
          %s400 = scalar_select %p399, %s398, 3
          %s401 = smul.addr %s400, 8
          %s402 = scalar_lea.vmem %s2, %s401
          %s403 = smul.u32 2, %s29
        $region81: #{encoder_lstm_forward.1} parent=35 // pred_fallthru
          _
      $region36: #{encoder_lstm_forward.1} parent=5 // pred_fallthru
        _
      %p404 = scmp.le.s32.totalorder 1, %s22
      %p405 = scmp.lt.s32.totalorder %s22, 5
      %p406 = pnand %p404, %p405
      %p407 = pneg %p406
      // Predicated region
      $region82: #{encoder_lstm_forward.1} parent=5 // pred_check
        _
      $region83: #{encoder_lstm_forward.1} parent=5 // pred_check_branch
        %409 = sbr.rel (%p406) target = $region85
      $region84: #{encoder_lstm_forward.1} parent=5 // pred_region
        %s410 = ssub.s32 %s22, 1
        %s411 = sand.u32 %s49, 1
        %s412 = sand.u32 %s49, 1
        %s413 = smul.addr %s412, 64
        %s414 = scalar_lea.vmem [#allocation6], %s413
        // Predicated region
        $region86: #{encoder_lstm_forward.1} parent=84 // pred_check
          %p415 = pneg %p62
        $region87: #{encoder_lstm_forward.1} parent=84 // pred_check_branch
          %417 = sbr.rel (%p415) target = $region89
        $region88: #{encoder_lstm_forward.1} parent=84 // pred_region
          _
        $region89: #{encoder_lstm_forward.1} parent=84 // pred_fallthru
          _
        %s418 = sand.u32 %s49, 1
        %s419 = sand.u32 %s49, 1
        %s420 = smul.addr %s419, 64
        %s421 = scalar_lea.vmem [#allocation6], %s420
        %p422 = pneg %p62
        %p423 = pneg %p59
        %s424 = smul.u32 2, %s31
        %p425 = scmp.lt.s32.totalorder %s424, 3
        %s426 = scalar_select %p425, %s424, 3
        %s427 = smul.addr %s426, 8
        %s428 = scalar_lea.vmem %s2, %s427
        %p429 = pneg %p88
        %p430 = pneg %p85
        %p431 = pneg %p109
        %p432 = pneg %p106
        %p433 = pneg %p130
        %p434 = pneg %p127
        %p435 = pneg %p151
        %p436 = pneg %p148
        %p437 = pneg %p172
        %p438 = pneg %p169
        %p439 = pneg %p193
        %p440 = pneg %p190
        %p441 = pneg %p221
        %p442 = pneg %p218
        %s443 = sand.u32 %s208, 1
        %s444 = sand.u32 %s208, 1
        %s445 = smul.addr %s444, 64
        %s446 = scalar_lea.vmem [#allocation7], %s445
        %p447 = pneg %p247
        %p448 = pneg %p244
        %s449 = smul.u32 2, %s31
        %p450 = scmp.lt.s32.totalorder %s449, 3
        %s451 = scalar_select %p450, %s449, 3
        %s452 = smul.addr %s451, 2
        %s453 = smul.addr %s452, 8
        %s454 = scalar_lea.vmem %s9, %s453
        %s455 = smul.u32 8, %s32
        %s456 = smul.u32 2, %s31
        %s457 = smul.u32 2, %s31
        %p458 = scmp.lt.s32.totalorder %s457, 3
        %s459 = scalar_select %p458, %s457, 3
        %s460 = smul.addr %s459, 8
        %s461 = scalar_lea.vmem %s2, %s460
        %s462 = smul.u32 2, %s31
        %s463 = smul.u32 8, %s32
        %s464 = smul.u32 2, %s31
        %s465 = smul.u32 2, %s31
        %p466 = scmp.lt.s32.totalorder %s465, 3
        %s467 = scalar_select %p466, %s465, 3
        %s468 = smul.addr %s467, 2
        %s469 = smul.addr %s468, 8
        %s470 = scalar_lea.vmem %s9, %s469
        %s471 = smul.u32 2, %s31
        %p473 = scmp.eq.s32.totalorder %s32, 0
        // Predicated region
        $region90: #{encoder_lstm_forward.1} parent=84 // pred_check
          %p474 = pneg %p473
        $region91: #{encoder_lstm_forward.1} parent=84 // pred_check_branch
          %476 = sbr.rel (%p474) target = $region93
        $region92: #{encoder_lstm_forward.1} parent=84 // pred_region
          %477 = vst [vmem:[#allocation2] sm:$0xff] 0.0
          %478 = vst [vmem:[#allocation2 + $0x8] sm:$0xff] 0.0
          %479 = vst [vmem:[#allocation3] sm:$0xff] 0.0
          %480 = vst [vmem:[#allocation3 + $0x8] sm:$0xff] 0.0
        $region93: #{encoder_lstm_forward.1} parent=84 // pred_fallthru
          _
        %s481 = smul.u32 %s32, 8
        %s482 = sld [smem:[#allocation5 + %s31]]
        %p483 = scmp.lt.s32.totalorder %s481, %s482
        %p484 = scmp.ge.s32.totalorder %s481, %s482
        // Predicated region
        $region94: #{encoder_lstm_forward.1} parent=84 // pred_check
          %p485 = pneg %p484
        $region95: #{encoder_lstm_forward.1} parent=84 // pred_check_branch
          %487 = sbr.rel (%p485) target = $region97
        $region96: #{encoder_lstm_forward.1} parent=84 // pred_region
          %488 = vst [vmem:[%s446] sm:$0xf] 0
          %489 = vst [vmem:[%s446 + $0x4] sm:$0xf] 0
          %490 = vst [vmem:[%s446 + $0x8] sm:$0xf] 0
          %491 = vst [vmem:[%s446 + $0xc] sm:$0xf] 0
          %492 = vst [vmem:[%s446 + $0x10] sm:$0xf] 0
          %493 = vst [vmem:[%s446 + $0x14] sm:$0xf] 0
          %494 = vst [vmem:[%s446 + $0x18] sm:$0xf] 0
          %495 = vst [vmem:[%s446 + $0x1c] sm:$0xf] 0
          %496 = vst [vmem:[%s446 + $0x20] sm:$0xf] 0
          %497 = vst [vmem:[%s446 + $0x24] sm:$0xf] 0
          %498 = vst [vmem:[%s446 + $0x28] sm:$0xf] 0
          %499 = vst [vmem:[%s446 + $0x2c] sm:$0xf] 0
          %500 = vst [vmem:[%s446 + $0x30] sm:$0xf] 0
          %501 = vst [vmem:[%s446 + $0x34] sm:$0xf] 0
          %502 = vst [vmem:[%s446 + $0x38] sm:$0xf] 0
          %503 = vst [vmem:[%s446 + $0x3c] sm:$0xf] 0
        $region97: #{encoder_lstm_forward.1} parent=84 // pred_fallthru
          _
        // Predicated region
        $region98: #{encoder_lstm_forward.1} parent=84 // pred_check
          %p504 = pneg %p483
        $region99: #{encoder_lstm_forward.1} parent=84 // pred_check_branch
          %506 = sbr.rel (%p504) target = $region101
        $region100: #{encoder_lstm_forward.1} parent=84 // pred_region
          %v507 = vld [vmem:[%s461] sm:$0xff]
          %v508 = vld [vmem:[%s461 + $0x8] sm:$0xff]
          %v509 = vld [vmem:[%s4] sm:$0xff]
          %v510 = vld [vmem:[%s4 + $0x8] sm:$0xff]
          %v511 = vld [vmem:[%s4 + $0x10] sm:$0xff]
          %v512 = vld [vmem:[%s4 + $0x18] sm:$0xff]
          %v513 = vld [vmem:[%s4 + $0x20] sm:$0xff]
          %v514 = vld [vmem:[%s4 + $0x28] sm:$0xff]
          %v515 = vld [vmem:[%s4 + $0x30] sm:$0xff]
          %v516 = vld [vmem:[%s4 + $0x38] sm:$0xff]
          %v517 = vld [vmem:[%s4 + $0x40] sm:$0xff]
          %v518 = vld [vmem:[%s4 + $0x48] sm:$0xff]
          %v519 = vld [vmem:[%s4 + $0x50] sm:$0xff]
          %v520 = vld [vmem:[%s4 + $0x58] sm:$0xff]
          %v521 = vld [vmem:[%s4 + $0x60] sm:$0xff]
          %v522 = vld [vmem:[%s4 + $0x68] sm:$0xff]
          %v523 = vld [vmem:[%s4 + $0x70] sm:$0xff]
          %v524 = vld [vmem:[%s4 + $0x78] sm:$0xff]
          %v525 = vld [vmem:[%s4 + $0x80] sm:$0xff]
          %v526 = vld [vmem:[%s4 + $0x88] sm:$0xff]
          %v527 = vld [vmem:[%s4 + $0x90] sm:$0xff]
          %v528 = vld [vmem:[%s4 + $0x98] sm:$0xff]
          %v529 = vld [vmem:[%s4 + $0xa0] sm:$0xff]
          %v530 = vld [vmem:[%s4 + $0xa8] sm:$0xff]
          %v531 = vld [vmem:[%s4 + $0xb0] sm:$0xff]
          %v532 = vld [vmem:[%s4 + $0xb8] sm:$0xff]
          %v533 = vld [vmem:[%s4 + $0xc0] sm:$0xff]
          %v534 = vld [vmem:[%s4 + $0xc8] sm:$0xff]
          %v535 = vld [vmem:[%s4 + $0xd0] sm:$0xff]
          %v536 = vld [vmem:[%s4 + $0xd8] sm:$0xff]
          %v537 = vld [vmem:[%s4 + $0xe0] sm:$0xff]
          %v538 = vld [vmem:[%s4 + $0xe8] sm:$0xff]
          %v539 = vld [vmem:[%s4 + $0xf0] sm:$0xff]
          %v540 = vld [vmem:[%s4 + $0xf8] sm:$0xff]
          %v541 = vld [vmem:[%s414] sm:$0xf]
          %v542 = vld [vmem:[%s414 + $0x4] sm:$0xf]
          %v543 = vld [vmem:[%s414 + $0x8] sm:$0xf]
          %v544 = vld [vmem:[%s414 + $0xc] sm:$0xf]
          %v545 = vld [vmem:[%s414 + $0x10] sm:$0xf]
          %v546 = vld [vmem:[%s414 + $0x14] sm:$0xf]
          %v547 = vld [vmem:[%s414 + $0x18] sm:$0xf]
          %v548 = vld [vmem:[%s414 + $0x1c] sm:$0xf]
          %v549 = vld [vmem:[%s414 + $0x20] sm:$0xf]
          %v550 = vld [vmem:[%s414 + $0x24] sm:$0xf]
          %v551 = vld [vmem:[%s414 + $0x28] sm:$0xf]
          %v552 = vld [vmem:[%s414 + $0x2c] sm:$0xf]
          %v553 = vld [vmem:[%s414 + $0x30] sm:$0xf]
          %v554 = vld [vmem:[%s414 + $0x34] sm:$0xf]
          %v555 = vld [vmem:[%s414 + $0x38] sm:$0xf]
          %v556 = vld [vmem:[%s414 + $0x3c] sm:$0xf]
          %v557 = vld [vmem:[%s3] sm:$0xff]
          %v558 = vld [vmem:[%s3 + $0x8] sm:$0xff]
          %v559 = vld [vmem:[%s3 + $0x10] sm:$0xff]
          %v560 = vld [vmem:[%s3 + $0x18] sm:$0xff]
          %v561 = vld [vmem:[%s3 + $0x20] sm:$0xff]
          %v562 = vld [vmem:[%s3 + $0x28] sm:$0xff]
          %v563 = vld [vmem:[%s3 + $0x30] sm:$0xff]
          %v564 = vld [vmem:[%s3 + $0x38] sm:$0xff]
          %v565 = vld [vmem:[%s3 + $0x40] sm:$0xff]
          %v566 = vld [vmem:[%s3 + $0x48] sm:$0xff]
          %v567 = vld [vmem:[%s3 + $0x50] sm:$0xff]
          %v568 = vld [vmem:[%s3 + $0x58] sm:$0xff]
          %v569 = vld [vmem:[%s3 + $0x60] sm:$0xff]
          %v570 = vld [vmem:[%s3 + $0x68] sm:$0xff]
          %v571 = vld [vmem:[%s3 + $0x70] sm:$0xff]
          %v572 = vld [vmem:[%s3 + $0x78] sm:$0xff]
          %v573 = vld [vmem:[%s3 + $0x80] sm:$0xff]
          %v574 = vld [vmem:[%s3 + $0x88] sm:$0xff]
          %v575 = vld [vmem:[%s3 + $0x90] sm:$0xff]
          %v576 = vld [vmem:[%s3 + $0x98] sm:$0xff]
          %v577 = vld [vmem:[%s3 + $0xa0] sm:$0xff]
          %v578 = vld [vmem:[%s3 + $0xa8] sm:$0xff]
          %v579 = vld [vmem:[%s3 + $0xb0] sm:$0xff]
          %v580 = vld [vmem:[%s3 + $0xb8] sm:$0xff]
          %v581 = vld [vmem:[%s3 + $0xc0] sm:$0xff]
          %v582 = vld [vmem:[%s3 + $0xc8] sm:$0xff]
          %v583 = vld [vmem:[%s3 + $0xd0] sm:$0xff]
          %v584 = vld [vmem:[%s3 + $0xd8] sm:$0xff]
          %v585 = vld [vmem:[%s3 + $0xe0] sm:$0xff]
          %v586 = vld [vmem:[%s3 + $0xe8] sm:$0xff]
          %v587 = vld [vmem:[%s3 + $0xf0] sm:$0xff]
          %v588 = vld [vmem:[%s3 + $0xf8] sm:$0xff]
          %v589 = vld [vmem:[%s5] sm:$0xf]
          %v591 = vlaneseq
          %v592 = vshrl.u32 %v591, 7
          %v593 = vsub.s32 0, %v592
          %v594 = vrot.slane %v589, %v593
          %v595 = vlaneseq
          %v596 = vshrl.u32 %v595, 7
          %v597 = vsub.s32 1, %v596
          %v598 = vrot.slane %v589, %v597
          %v599 = vlaneseq
          %v600 = vshrl.u32 %v599, 7
          %v601 = vsub.s32 2, %v600
          %v602 = vrot.slane %v589, %v601
          %v603 = vlaneseq
          %v604 = vshrl.u32 %v603, 7
          %v605 = vsub.s32 3, %v604
          %v606 = vrot.slane %v589, %v605
          %v627 = vunpack.c.l.b16 %v541
          %v628 = vunpack.c.l.b16 %v542
          %v629 = vunpack.c.l.b16 %v543
          %v630 = vunpack.c.l.b16 %v544
          %v631 = vunpack.c.l.b16 %v545
          %v632 = vunpack.c.l.b16 %v546
          %v633 = vunpack.c.l.b16 %v547
          %v634 = vunpack.c.l.b16 %v548
          %v635 = vunpack.c.l.b16 %v549
          %v636 = vunpack.c.l.b16 %v550
          %v637 = vunpack.c.l.b16 %v551
          %v638 = vunpack.c.l.b16 %v552
          %v639 = vunpack.c.l.b16 %v553
          %v640 = vunpack.c.l.b16 %v554
          %v641 = vunpack.c.l.b16 %v555
          %v642 = vunpack.c.l.b16 %v556
          %v643 = vpack.c.b16 %v628, %v627
          %v644 = vpack.c.b16 %v630, %v629
          %v645 = vpack.c.b16 %v632, %v631
          %v646 = vpack.c.b16 %v634, %v633
          %v647 = vpack.c.b16 %v636, %v635
          %v648 = vpack.c.b16 %v638, %v637
          %v649 = vpack.c.b16 %v640, %v639
          %v650 = vpack.c.b16 %v642, %v641
          %v691 = vunpack.c.l.b16 %v557
          %v692 = vunpack.c.h.b16 %v557
          %v693 = vunpack.c.l.b16 %v558
          %v694 = vunpack.c.h.b16 %v558
          %v695 = vunpack.c.l.b16 %v559
          %v696 = vunpack.c.h.b16 %v559
          %v697 = vunpack.c.l.b16 %v560
          %v698 = vunpack.c.h.b16 %v560
          %v699 = vunpack.c.l.b16 %v561
          %v700 = vunpack.c.h.b16 %v561
          %v701 = vunpack.c.l.b16 %v562
          %v702 = vunpack.c.h.b16 %v562
          %v703 = vunpack.c.l.b16 %v563
          %v704 = vunpack.c.h.b16 %v563
          %v705 = vunpack.c.l.b16 %v564
          %v706 = vunpack.c.h.b16 %v564
          %v707 = vunpack.c.l.b16 %v565
          %v708 = vunpack.c.h.b16 %v565
          %v709 = vunpack.c.l.b16 %v566
          %v710 = vunpack.c.h.b16 %v566
          %v711 = vunpack.c.l.b16 %v567
          %v712 = vunpack.c.h.b16 %v567
          %v713 = vunpack.c.l.b16 %v568
          %v714 = vunpack.c.h.b16 %v568
          %v715 = vunpack.c.l.b16 %v569
          %v716 = vunpack.c.h.b16 %v569
          %v717 = vunpack.c.l.b16 %v570
          %v718 = vunpack.c.h.b16 %v570
          %v719 = vunpack.c.l.b16 %v571
          %v720 = vunpack.c.h.b16 %v571
          %v721 = vunpack.c.l.b16 %v572
          %v722 = vunpack.c.h.b16 %v572
          %v723 = vunpack.c.l.b16 %v573
          %v724 = vunpack.c.h.b16 %v573
          %v725 = vunpack.c.l.b16 %v574
          %v726 = vunpack.c.h.b16 %v574
          %v727 = vunpack.c.l.b16 %v575
          %v728 = vunpack.c.h.b16 %v575
          %v729 = vunpack.c.l.b16 %v576
          %v730 = vunpack.c.h.b16 %v576
          %v731 = vunpack.c.l.b16 %v577
          %v732 = vunpack.c.h.b16 %v577
          %v733 = vunpack.c.l.b16 %v578
          %v734 = vunpack.c.h.b16 %v578
          %v735 = vunpack.c.l.b16 %v579
          %v736 = vunpack.c.h.b16 %v579
          %v737 = vunpack.c.l.b16 %v580
          %v738 = vunpack.c.h.b16 %v580
          %v739 = vunpack.c.l.b16 %v581
          %v740 = vunpack.c.h.b16 %v581
          %v741 = vunpack.c.l.b16 %v582
          %v742 = vunpack.c.h.b16 %v582
          %v743 = vunpack.c.l.b16 %v583
          %v744 = vunpack.c.h.b16 %v583
          %v745 = vunpack.c.l.b16 %v584
          %v746 = vunpack.c.h.b16 %v584
          %v747 = vunpack.c.l.b16 %v585
          %v748 = vunpack.c.h.b16 %v585
          %v749 = vunpack.c.l.b16 %v586
          %v750 = vunpack.c.h.b16 %v586
          %v751 = vunpack.c.l.b16 %v587
          %v752 = vunpack.c.h.b16 %v587
          %v753 = vunpack.c.l.b16 %v588
          %v754 = vunpack.c.h.b16 %v588
          %v755 = vpack.c.b16 %v695, %v691
          %v756 = vpack.c.b16 %v696, %v692
          %v757 = vpack.c.b16 %v697, %v693
          %v758 = vpack.c.b16 %v698, %v694
          %v759 = vpack.c.b16 %v703, %v699
          %v760 = vpack.c.b16 %v704, %v700
          %v761 = vpack.c.b16 %v705, %v701
          %v762 = vpack.c.b16 %v706, %v702
          %v763 = vpack.c.b16 %v711, %v707
          %v764 = vpack.c.b16 %v712, %v708
          %v765 = vpack.c.b16 %v713, %v709
          %v766 = vpack.c.b16 %v714, %v710
          %v767 = vpack.c.b16 %v719, %v715
          %v768 = vpack.c.b16 %v720, %v716
          %v769 = vpack.c.b16 %v721, %v717
          %v770 = vpack.c.b16 %v722, %v718
          %v771 = vpack.c.b16 %v727, %v723
          %v772 = vpack.c.b16 %v728, %v724
          %v773 = vpack.c.b16 %v729, %v725
          %v774 = vpack.c.b16 %v730, %v726
          %v775 = vpack.c.b16 %v735, %v731
          %v776 = vpack.c.b16 %v736, %v732
          %v777 = vpack.c.b16 %v737, %v733
          %v778 = vpack.c.b16 %v738, %v734
          %v779 = vpack.c.b16 %v743, %v739
          %v780 = vpack.c.b16 %v744, %v740
          %v781 = vpack.c.b16 %v745, %v741
          %v782 = vpack.c.b16 %v746, %v742
          %v783 = vpack.c.b16 %v751, %v747
          %v784 = vpack.c.b16 %v752, %v748
          %v785 = vpack.c.b16 %v753, %v749
          %v786 = vpack.c.b16 %v754, %v750
          %819 = vmatprep.subr.bf16.mxu0 %v784
          %820 = vmatpush1.bf16.msra.mxu0 %v783
          %821 = vmatprep.subr.bf16.mxu0 %v780
          %822 = vmatpush1.bf16.msra.mxu0 %v779
          %823 = vmatprep.subr.bf16.mxu0 %v776
          %824 = vmatpush1.bf16.msra.mxu0 %v775
          %825 = vmatprep.subr.bf16.mxu0 %v772
          %826 = vmatpush1.bf16.msra.mxu0 %v771
          %827 = vmatprep.subr.bf16.mxu0 %v768
          %828 = vmatpush1.bf16.msra.mxu0 %v767
          %829 = vmatprep.subr.bf16.mxu0 %v764
          %830 = vmatpush1.bf16.msra.mxu0 %v763
          %831 = vmatprep.subr.bf16.mxu0 %v760
          %832 = vmatpush1.bf16.msra.mxu0 %v759
          %833 = vmatprep.subr.bf16.mxu0 %v756
          %834 = vmatpush1.bf16.msra.mxu0 %v755
          %835 = vmatprep.subr.bf16.mxu0 0
          %836 = vmatpush2.bf16.msra.mxu0 0
          %837 = vmatprep.subr.bf16.mxu0 0
          %838 = vmatpush2.bf16.msra.mxu0 0
          %839 = vmatprep.subr.bf16.mxu0 0
          %840 = vmatpush2.bf16.msra.mxu0 0
          %841 = vmatprep.subr.bf16.mxu0 0
          %842 = vmatpush2.bf16.msra.mxu0 0
          %843 = vmatprep.subr.bf16.mxu0 0
          %844 = vmatpush2.bf16.msra.mxu0 0
          %845 = vmatprep.subr.bf16.mxu0 0
          %846 = vmatpush2.bf16.msra.mxu0 0
          %847 = vmatprep.subr.bf16.mxu0 0
          %848 = vmatpush2.bf16.msra.mxu0 0
          %849 = vmatprep.subr.bf16.mxu0 0
          %850 = vmatpush2.bf16.msra.mxu0 0
          %851 = vmatprep.mubr.bf16.mxu0 0
          %852 = vmatmul.mubr.bf16.gmra.mxu0 %v643
          %v853 = vpop.f32.mrf.mxu0
          %v854 = vadd.f32 %v594, %v853
          %v855 = vpop.f32.mrf.mxu0
          %v856 = vadd.f32 %v598, %v855
          %v857 = vpop.f32.mrf.mxu0
          %v858 = vadd.f32 %v594, %v857
          %v859 = vpop.f32.mrf.mxu0
          %v860 = vadd.f32 %v598, %v859
          %861 = vmatprep.mubr.bf16.mxu0 0
          %862 = vmatmul.mubr.bf16.gmra.mxu0 %v644
          %v863 = vpop.f32.mrf.mxu0
          %v864 = vadd.f32 %v594, %v863
          %v865 = vpop.f32.mrf.mxu0
          %v866 = vadd.f32 %v598, %v865
          %v867 = vpop.f32.mrf.mxu0
          %v868 = vadd.f32 %v594, %v867
          %v869 = vpop.f32.mrf.mxu0
          %v870 = vadd.f32 %v598, %v869
          %871 = vmatprep.mubr.bf16.mxu0 0
          %872 = vmatmul.mubr.bf16.gmra.mxu0 %v645
          %v873 = vpop.f32.mrf.mxu0
          %v874 = vadd.f32 %v594, %v873
          %v875 = vpop.f32.mrf.mxu0
          %v876 = vadd.f32 %v598, %v875
          %v877 = vpop.f32.mrf.mxu0
          %v878 = vadd.f32 %v594, %v877
          %v879 = vpop.f32.mrf.mxu0
          %v880 = vadd.f32 %v598, %v879
          %881 = vmatprep.mubr.bf16.mxu0 0
          %882 = vmatmul.mubr.bf16.gmra.mxu0 %v646
          %v883 = vpop.f32.mrf.mxu0
          %v884 = vadd.f32 %v594, %v883
          %v885 = vpop.f32.mrf.mxu0
          %v886 = vadd.f32 %v598, %v885
          %v887 = vpop.f32.mrf.mxu0
          %v888 = vadd.f32 %v594, %v887
          %v889 = vpop.f32.mrf.mxu0
          %v890 = vadd.f32 %v598, %v889
          %891 = vmatprep.mubr.bf16.mxu0 0
          %892 = vmatmul.mubr.bf16.gmra.mxu0 %v647
          %v893 = vpop.f32.mrf.mxu0
          %v894 = vadd.f32 %v594, %v893
          %v895 = vpop.f32.mrf.mxu0
          %v896 = vadd.f32 %v598, %v895
          %v897 = vpop.f32.mrf.mxu0
          %v898 = vadd.f32 %v594, %v897
          %v899 = vpop.f32.mrf.mxu0
          %v900 = vadd.f32 %v598, %v899
          %901 = vmatprep.mubr.bf16.mxu0 0
          %902 = vmatmul.mubr.bf16.gmra.mxu0 %v648
          %v903 = vpop.f32.mrf.mxu0
          %v904 = vadd.f32 %v594, %v903
          %v905 = vpop.f32.mrf.mxu0
          %v906 = vadd.f32 %v598, %v905
          %v907 = vpop.f32.mrf.mxu0
          %v908 = vadd.f32 %v594, %v907
          %v909 = vpop.f32.mrf.mxu0
          %v910 = vadd.f32 %v598, %v909
          %911 = vmatprep.mubr.bf16.mxu0 0
          %912 = vmatmul.mubr.bf16.gmra.mxu0 %v649
          %v913 = vpop.f32.mrf.mxu0
          %v914 = vadd.f32 %v594, %v913
          %v915 = vpop.f32.mrf.mxu0
          %v916 = vadd.f32 %v598, %v915
          %v917 = vpop.f32.mrf.mxu0
          %v918 = vadd.f32 %v594, %v917
          %v919 = vpop.f32.mrf.mxu0
          %v920 = vadd.f32 %v598, %v919
          %921 = vmatprep.mubr.bf16.mxu0 0
          %922 = vmatmul.mubr.bf16.gmra.mxu0 %v650
          %v923 = vpop.f32.mrf.mxu0
          %v924 = vadd.f32 %v594, %v923
          %v925 = vpop.f32.mrf.mxu0
          %v926 = vadd.f32 %v598, %v925
          %v927 = vpop.f32.mrf.mxu0
          %v928 = vadd.f32 %v594, %v927
          %v929 = vpop.f32.mrf.mxu0
          %v930 = vadd.f32 %v598, %v929
          %931 = vdwg.mxu0
          %932 = vmatprep.subr.bf16.mxu0 %v786
          %933 = vmatpush1.bf16.msra.mxu0 %v785
          %934 = vmatprep.subr.bf16.mxu0 %v782
          %935 = vmatpush1.bf16.msra.mxu0 %v781
          %936 = vmatprep.subr.bf16.mxu0 %v778
          %937 = vmatpush1.bf16.msra.mxu0 %v777
          %938 = vmatprep.subr.bf16.mxu0 %v774
          %939 = vmatpush1.bf16.msra.mxu0 %v773
          %940 = vmatprep.subr.bf16.mxu0 %v770
          %941 = vmatpush1.bf16.msra.mxu0 %v769
          %942 = vmatprep.subr.bf16.mxu0 %v766
          %943 = vmatpush1.bf16.msra.mxu0 %v765
          %944 = vmatprep.subr.bf16.mxu0 %v762
          %945 = vmatpush1.bf16.msra.mxu0 %v761
          %946 = vmatprep.subr.bf16.mxu0 %v758
          %947 = vmatpush1.bf16.msra.mxu0 %v757
          %948 = vmatprep.subr.bf16.mxu0 0
          %949 = vmatpush2.bf16.msra.mxu0 0
          %950 = vmatprep.subr.bf16.mxu0 0
          %951 = vmatpush2.bf16.msra.mxu0 0
          %952 = vmatprep.subr.bf16.mxu0 0
          %953 = vmatpush2.bf16.msra.mxu0 0
          %954 = vmatprep.subr.bf16.mxu0 0
          %955 = vmatpush2.bf16.msra.mxu0 0
          %956 = vmatprep.subr.bf16.mxu0 0
          %957 = vmatpush2.bf16.msra.mxu0 0
          %958 = vmatprep.subr.bf16.mxu0 0
          %959 = vmatpush2.bf16.msra.mxu0 0
          %960 = vmatprep.subr.bf16.mxu0 0
          %961 = vmatpush2.bf16.msra.mxu0 0
          %962 = vmatprep.subr.bf16.mxu0 0
          %963 = vmatpush2.bf16.msra.mxu0 0
          %964 = vmatprep.mubr.bf16.mxu0 0
          %965 = vmatmul.mubr.bf16.gmra.mxu0 %v643
          %v966 = vpop.f32.mrf.mxu0
          %v967 = vadd.f32 %v602, %v966
          %v968 = vpop.f32.mrf.mxu0
          %v969 = vadd.f32 %v606, %v968
          %v970 = vpop.f32.mrf.mxu0
          %v971 = vadd.f32 %v602, %v970
          %v972 = vpop.f32.mrf.mxu0
          %v973 = vadd.f32 %v606, %v972
          %974 = vmatprep.mubr.bf16.mxu0 0
          %975 = vmatmul.mubr.bf16.gmra.mxu0 %v644
          %v976 = vpop.f32.mrf.mxu0
          %v977 = vadd.f32 %v602, %v976
          %v978 = vpop.f32.mrf.mxu0
          %v979 = vadd.f32 %v606, %v978
          %v980 = vpop.f32.mrf.mxu0
          %v981 = vadd.f32 %v602, %v980
          %v982 = vpop.f32.mrf.mxu0
          %v983 = vadd.f32 %v606, %v982
          %984 = vmatprep.mubr.bf16.mxu0 0
          %985 = vmatmul.mubr.bf16.gmra.mxu0 %v645
          %v986 = vpop.f32.mrf.mxu0
          %v987 = vadd.f32 %v602, %v986
          %v988 = vpop.f32.mrf.mxu0
          %v989 = vadd.f32 %v606, %v988
          %v990 = vpop.f32.mrf.mxu0
          %v991 = vadd.f32 %v602, %v990
          %v992 = vpop.f32.mrf.mxu0
          %v993 = vadd.f32 %v606, %v992
          %994 = vmatprep.mubr.bf16.mxu0 0
          %995 = vmatmul.mubr.bf16.gmra.mxu0 %v646
          %v996 = vpop.f32.mrf.mxu0
          %v997 = vadd.f32 %v602, %v996
          %v998 = vpop.f32.mrf.mxu0
          %v999 = vadd.f32 %v606, %v998
          %v1000 = vpop.f32.mrf.mxu0
          %v1001 = vadd.f32 %v602, %v1000
          %v1002 = vpop.f32.mrf.mxu0
          %v1003 = vadd.f32 %v606, %v1002
          %1004 = vmatprep.mubr.bf16.mxu0 0
          %1005 = vmatmul.mubr.bf16.gmra.mxu0 %v647
          %v1006 = vpop.f32.mrf.mxu0
          %v1007 = vadd.f32 %v602, %v1006
          %v1008 = vpop.f32.mrf.mxu0
          %v1009 = vadd.f32 %v606, %v1008
          %v1010 = vpop.f32.mrf.mxu0
          %v1011 = vadd.f32 %v602, %v1010
          %v1012 = vpop.f32.mrf.mxu0
          %v1013 = vadd.f32 %v606, %v1012
          %1014 = vmatprep.mubr.bf16.mxu0 0
          %1015 = vmatmul.mubr.bf16.gmra.mxu0 %v648
          %v1016 = vpop.f32.mrf.mxu0
          %v1017 = vadd.f32 %v602, %v1016
          %v1018 = vpop.f32.mrf.mxu0
          %v1019 = vadd.f32 %v606, %v1018
          %v1020 = vpop.f32.mrf.mxu0
          %v1021 = vadd.f32 %v602, %v1020
          %v1022 = vpop.f32.mrf.mxu0
          %v1023 = vadd.f32 %v606, %v1022
          %1024 = vmatprep.mubr.bf16.mxu0 0
          %1025 = vmatmul.mubr.bf16.gmra.mxu0 %v649
          %v1026 = vpop.f32.mrf.mxu0
          %v1027 = vadd.f32 %v602, %v1026
          %v1028 = vpop.f32.mrf.mxu0
          %v1029 = vadd.f32 %v606, %v1028
          %v1030 = vpop.f32.mrf.mxu0
          %v1031 = vadd.f32 %v602, %v1030
          %v1032 = vpop.f32.mrf.mxu0
          %v1033 = vadd.f32 %v606, %v1032
          %1034 = vmatprep.mubr.bf16.mxu0 0
          %1035 = vmatmul.mubr.bf16.gmra.mxu0 %v650
          %v1036 = vpop.f32.mrf.mxu0
          %v1037 = vadd.f32 %v602, %v1036
          %v1038 = vpop.f32.mrf.mxu0
          %v1039 = vadd.f32 %v606, %v1038
          %v1040 = vpop.f32.mrf.mxu0
          %v1041 = vadd.f32 %v602, %v1040
          %v1042 = vpop.f32.mrf.mxu0
          %v1043 = vadd.f32 %v606, %v1042
          %1044 = vdwg.mxu0
          %v1045 = vld [vmem:[#allocation2] sm:$0xff]
          %v1046 = vld [vmem:[#allocation2 + $0x8] sm:$0xff]
          %v1047 = vld [vmem:[#allocation3] sm:$0xff]
          %v1048 = vld [vmem:[#allocation3 + $0x8] sm:$0xff]
          %v1049 = vpack.c.bf16 %v1046, %v1045
          %v1082 = vunpack.c.l.b16 %v509
          %v1083 = vunpack.c.h.b16 %v509
          %v1084 = vunpack.c.l.b16 %v510
          %v1085 = vunpack.c.h.b16 %v510
          %v1086 = vunpack.c.l.b16 %v511
          %v1087 = vunpack.c.h.b16 %v511
          %v1088 = vunpack.c.l.b16 %v512
          %v1089 = vunpack.c.h.b16 %v512
          %v1090 = vunpack.c.l.b16 %v513
          %v1091 = vunpack.c.h.b16 %v513
          %v1092 = vunpack.c.l.b16 %v514
          %v1093 = vunpack.c.h.b16 %v514
          %v1094 = vunpack.c.l.b16 %v515
          %v1095 = vunpack.c.h.b16 %v515
          %v1096 = vunpack.c.l.b16 %v516
          %v1097 = vunpack.c.h.b16 %v516
          %v1098 = vunpack.c.l.b16 %v517
          %v1099 = vunpack.c.h.b16 %v517
          %v1100 = vunpack.c.l.b16 %v518
          %v1101 = vunpack.c.h.b16 %v518
          %v1102 = vunpack.c.l.b16 %v519
          %v1103 = vunpack.c.h.b16 %v519
          %v1104 = vunpack.c.l.b16 %v520
          %v1105 = vunpack.c.h.b16 %v520
          %v1106 = vunpack.c.l.b16 %v521
          %v1107 = vunpack.c.h.b16 %v521
          %v1108 = vunpack.c.l.b16 %v522
          %v1109 = vunpack.c.h.b16 %v522
          %v1110 = vunpack.c.l.b16 %v523
          %v1111 = vunpack.c.h.b16 %v523
          %v1112 = vunpack.c.l.b16 %v524
          %v1113 = vunpack.c.h.b16 %v524
          %v1114 = vunpack.c.l.b16 %v525
          %v1115 = vunpack.c.h.b16 %v525
          %v1116 = vunpack.c.l.b16 %v526
          %v1117 = vunpack.c.h.b16 %v526
          %v1118 = vunpack.c.l.b16 %v527
          %v1119 = vunpack.c.h.b16 %v527
          %v1120 = vunpack.c.l.b16 %v528
          %v1121 = vunpack.c.h.b16 %v528
          %v1122 = vunpack.c.l.b16 %v529
          %v1123 = vunpack.c.h.b16 %v529
          %v1124 = vunpack.c.l.b16 %v530
          %v1125 = vunpack.c.h.b16 %v530
          %v1126 = vunpack.c.l.b16 %v531
          %v1127 = vunpack.c.h.b16 %v531
          %v1128 = vunpack.c.l.b16 %v532
          %v1129 = vunpack.c.h.b16 %v532
          %v1130 = vunpack.c.l.b16 %v533
          %v1131 = vunpack.c.h.b16 %v533
          %v1132 = vunpack.c.l.b16 %v534
          %v1133 = vunpack.c.h.b16 %v534
          %v1134 = vunpack.c.l.b16 %v535
          %v1135 = vunpack.c.h.b16 %v535
          %v1136 = vunpack.c.l.b16 %v536
          %v1137 = vunpack.c.h.b16 %v536
          %v1138 = vunpack.c.l.b16 %v537
          %v1139 = vunpack.c.h.b16 %v537
          %v1140 = vunpack.c.l.b16 %v538
          %v1141 = vunpack.c.h.b16 %v538
          %v1142 = vunpack.c.l.b16 %v539
          %v1143 = vunpack.c.h.b16 %v539
          %v1144 = vunpack.c.l.b16 %v540
          %v1145 = vunpack.c.h.b16 %v540
          %v1146 = vpack.c.b16 %v1086, %v1082
          %v1147 = vpack.c.b16 %v1087, %v1083
          %v1148 = vpack.c.b16 %v1088, %v1084
          %v1149 = vpack.c.b16 %v1089, %v1085
          %v1150 = vpack.c.b16 %v1094, %v1090
          %v1151 = vpack.c.b16 %v1095, %v1091
          %v1152 = vpack.c.b16 %v1096, %v1092
          %v1153 = vpack.c.b16 %v1097, %v1093
          %v1154 = vpack.c.b16 %v1102, %v1098
          %v1155 = vpack.c.b16 %v1103, %v1099
          %v1156 = vpack.c.b16 %v1104, %v1100
          %v1157 = vpack.c.b16 %v1105, %v1101
          %v1158 = vpack.c.b16 %v1110, %v1106
          %v1159 = vpack.c.b16 %v1111, %v1107
          %v1160 = vpack.c.b16 %v1112, %v1108
          %v1161 = vpack.c.b16 %v1113, %v1109
          %v1162 = vpack.c.b16 %v1118, %v1114
          %v1163 = vpack.c.b16 %v1119, %v1115
          %v1164 = vpack.c.b16 %v1120, %v1116
          %v1165 = vpack.c.b16 %v1121, %v1117
          %v1166 = vpack.c.b16 %v1126, %v1122
          %v1167 = vpack.c.b16 %v1127, %v1123
          %v1168 = vpack.c.b16 %v1128, %v1124
          %v1169 = vpack.c.b16 %v1129, %v1125
          %v1170 = vpack.c.b16 %v1134, %v1130
          %v1171 = vpack.c.b16 %v1135, %v1131
          %v1172 = vpack.c.b16 %v1136, %v1132
          %v1173 = vpack.c.b16 %v1137, %v1133
          %v1174 = vpack.c.b16 %v1142, %v1138
          %v1175 = vpack.c.b16 %v1143, %v1139
          %v1176 = vpack.c.b16 %v1144, %v1140
          %v1177 = vpack.c.b16 %v1145, %v1141
          %1210 = vmatprep.subr.bf16.mxu0 %v1175
          %1211 = vmatpush1.bf16.msra.mxu0 %v1174
          %1212 = vmatprep.subr.bf16.mxu0 %v1171
          %1213 = vmatpush1.bf16.msra.mxu0 %v1170
          %1214 = vmatprep.subr.bf16.mxu0 %v1167
          %1215 = vmatpush1.bf16.msra.mxu0 %v1166
          %1216 = vmatprep.subr.bf16.mxu0 %v1163
          %1217 = vmatpush1.bf16.msra.mxu0 %v1162
          %1218 = vmatprep.subr.bf16.mxu0 %v1159
          %1219 = vmatpush1.bf16.msra.mxu0 %v1158
          %1220 = vmatprep.subr.bf16.mxu0 %v1155
          %1221 = vmatpush1.bf16.msra.mxu0 %v1154
          %1222 = vmatprep.subr.bf16.mxu0 %v1151
          %1223 = vmatpush1.bf16.msra.mxu0 %v1150
          %1224 = vmatprep.subr.bf16.mxu0 %v1147
          %1225 = vmatpush1.bf16.msra.mxu0 %v1146
          %1226 = vmatprep.subr.bf16.mxu0 0
          %1227 = vmatpush2.bf16.msra.mxu0 0
          %1228 = vmatprep.subr.bf16.mxu0 0
          %1229 = vmatpush2.bf16.msra.mxu0 0
          %1230 = vmatprep.subr.bf16.mxu0 0
          %1231 = vmatpush2.bf16.msra.mxu0 0
          %1232 = vmatprep.subr.bf16.mxu0 0
          %1233 = vmatpush2.bf16.msra.mxu0 0
          %1234 = vmatprep.subr.bf16.mxu0 0
          %1235 = vmatpush2.bf16.msra.mxu0 0
          %1236 = vmatprep.subr.bf16.mxu0 0
          %1237 = vmatpush2.bf16.msra.mxu0 0
          %1238 = vmatprep.subr.bf16.mxu0 0
          %1239 = vmatpush2.bf16.msra.mxu0 0
          %1240 = vmatprep.subr.bf16.mxu0 0
          %1241 = vmatpush2.bf16.msra.mxu0 0
          %1242 = vmatprep.mubr.bf16.mxu0 0
          %1243 = vmatmul.mubr.bf16.gmra.mxu0 %v1049
          %v1244 = vpop.f32.mrf.mxu0
          %v1245 = vadd.f32 0.0, %v1244
          %v1246 = vpop.f32.mrf.mxu0
          %v1247 = vadd.f32 0.0, %v1246
          %v1248 = vpop.f32.mrf.mxu0
          %v1249 = vadd.f32 0.0, %v1248
          %v1250 = vpop.f32.mrf.mxu0
          %v1251 = vadd.f32 0.0, %v1250
          %1252 = vdwg.mxu0
          %1253 = vmatprep.subr.bf16.mxu0 %v1177
          %1254 = vmatpush1.bf16.msra.mxu0 %v1176
          %1255 = vmatprep.subr.bf16.mxu0 %v1173
          %1256 = vmatpush1.bf16.msra.mxu0 %v1172
          %1257 = vmatprep.subr.bf16.mxu0 %v1169
          %1258 = vmatpush1.bf16.msra.mxu0 %v1168
          %1259 = vmatprep.subr.bf16.mxu0 %v1165
          %1260 = vmatpush1.bf16.msra.mxu0 %v1164
          %1261 = vmatprep.subr.bf16.mxu0 %v1161
          %1262 = vmatpush1.bf16.msra.mxu0 %v1160
          %1263 = vmatprep.subr.bf16.mxu0 %v1157
          %1264 = vmatpush1.bf16.msra.mxu0 %v1156
          %1265 = vmatprep.subr.bf16.mxu0 %v1153
          %1266 = vmatpush1.bf16.msra.mxu0 %v1152
          %1267 = vmatprep.subr.bf16.mxu0 %v1149
          %1268 = vmatpush1.bf16.msra.mxu0 %v1148
          %1269 = vmatprep.subr.bf16.mxu0 0
          %1270 = vmatpush2.bf16.msra.mxu0 0
          %1271 = vmatprep.subr.bf16.mxu0 0
          %1272 = vmatpush2.bf16.msra.mxu0 0
          %1273 = vmatprep.subr.bf16.mxu0 0
          %1274 = vmatpush2.bf16.msra.mxu0 0
          %1275 = vmatprep.subr.bf16.mxu0 0
          %1276 = vmatpush2.bf16.msra.mxu0 0
          %1277 = vmatprep.subr.bf16.mxu0 0
          %1278 = vmatpush2.bf16.msra.mxu0 0
          %1279 = vmatprep.subr.bf16.mxu0 0
          %1280 = vmatpush2.bf16.msra.mxu0 0
          %1281 = vmatprep.subr.bf16.mxu0 0
          %1282 = vmatpush2.bf16.msra.mxu0 0
          %1283 = vmatprep.subr.bf16.mxu0 0
          %1284 = vmatpush2.bf16.msra.mxu0 0
          %1285 = vmatprep.mubr.bf16.mxu0 0
          %1286 = vmatmul.mubr.bf16.gmra.mxu0 %v1049
          %v1287 = vpop.f32.mrf.mxu0
          %v1288 = vadd.f32 0.0, %v1287
          %v1289 = vpop.f32.mrf.mxu0
          %v1290 = vadd.f32 0.0, %v1289
          %v1291 = vpop.f32.mrf.mxu0
          %v1292 = vadd.f32 0.0, %v1291
          %v1293 = vpop.f32.mrf.mxu0
          %v1294 = vadd.f32 0.0, %v1293
          %1295 = vdwg.mxu0
          %v1296 = vadd.f32 %v854, %v1245
          %v1297 = vadd.f32 %v856, %v1247
          %v1298 = vadd.f32 %v967, %v1288
          %v1299 = vadd.f32 %v969, %v1290
          %v1300 = vadd.f32 %v858, %v1249
          %v1301 = vadd.f32 %v860, %v1251
          %v1302 = vadd.f32 %v971, %v1292
          %v1303 = vadd.f32 %v973, %v1294
          %v1304 = vxor.u32 %v1296, 2147483648
          %v1305 = vxor.u32 %v1300, 2147483648
          %v1306 = vmul.f32 %v1304, 1.442695
          %v1307 = vpow.pop %v1306
          %v1308 = vmul.f32 %v1305, 1.442695
          %v1309 = vpow.pop %v1308
          %v1310 = vadd.f32 %v1307, 1.0
          %v1311 = vadd.f32 %v1309, 1.0
          %v1312 = vrcp.pop %v1310
          %v1313 = vmul.f32 1.0, %v1312
          %v1314 = vrcp.pop %v1311
          %v1315 = vmul.f32 1.0, %v1314
          %v1316 = vxor.u32 %v1297, 2147483648
          %v1317 = vxor.u32 %v1301, 2147483648
          %v1318 = vmul.f32 %v1316, 1.442695
          %v1319 = vpow.pop %v1318
          %v1320 = vmul.f32 %v1317, 1.442695
          %v1321 = vpow.pop %v1320
          %v1322 = vadd.f32 %v1319, 1.0
          %v1323 = vadd.f32 %v1321, 1.0
          %v1324 = vrcp.pop %v1322
          %v1325 = vmul.f32 1.0, %v1324
          %v1326 = vrcp.pop %v1323
          %v1327 = vmul.f32 1.0, %v1326
          %v1328 = vtanh.pop %v1298
          %v1329 = vtanh.pop %v1302
          %v1330 = vxor.u32 %v1299, 2147483648
          %v1331 = vxor.u32 %v1303, 2147483648
          %v1332 = vmul.f32 %v1330, 1.442695
          %v1333 = vpow.pop %v1332
          %v1334 = vmul.f32 %v1331, 1.442695
          %v1335 = vpow.pop %v1334
          %v1336 = vadd.f32 %v1333, 1.0
          %v1337 = vadd.f32 %v1335, 1.0
          %v1338 = vrcp.pop %v1336
          %v1339 = vmul.f32 1.0, %v1338
          %v1340 = vrcp.pop %v1337
          %v1341 = vmul.f32 1.0, %v1340
          %v1342 = vmul.f32 %v1325, %v1047
          %v1343 = vmul.f32 %v1327, %v1048
          %v1344 = vmul.f32 %v1313, %v1328
          %v1345 = vmul.f32 %v1315, %v1329
          %v1346 = vadd.f32 %v1342, %v1344
          %v1347 = vadd.f32 %v1343, %v1345
          %v1348 = vtanh.pop %v1346
          %v1349 = vtanh.pop %v1347
          %v1350 = vmul.f32 %v1339, %v1348
          %v1351 = vmul.f32 %v1341, %v1349
          %v1352 = vstv %s481
          %vm1353 = vcmp.lt.s32.totalorder %v1352, %v507
          %vm1354 = vcmp.lt.s32.totalorder %v1352, %v508
          %v1355 = vsel %vm1353, 1, 0
          %v1356 = vsel %vm1354, 1, 0
          %1357 = vset.pattern.permute.xlu0 0
          %1358 = vperm.xlu0 %1357, %v1355
          %v1359 = vpop.permute.xlu0 %1358
          %1360 = vset.pattern.permute.xlu0 0
          %1361 = vperm.xlu0 %1360, %v1356
          %v1362 = vpop.permute.xlu0 %1361
          %vm1363 = vcmp.eq.s32.totalorder %v1359, 1
          %vm1364 = vcmp.eq.s32.totalorder %v1362, 1
          %v1365 = vsel %vm1363, %v1350, %v1045
          %v1366 = vsel %vm1364, %v1351, %v1046
          %v1367 = vsel %vm1363, %v1346, %v1047
          %v1368 = vsel %vm1364, %v1347, %v1048
          %v1369 = vsel %vm1363, %v1350, 0.0
          %v1370 = vsel %vm1364, %v1351, 0.0
          %v1371 = vpack.c.bf16 %v1370, %v1369
          %v1373 = vunpack.c.l.b16 %v1371
          %v1374 = vunpack.c.h.b16 %v1371
          %v1375 = vpack.c.b16 %v1373, %v1373
          %v1376 = vpack.c.b16 %v1374, %v1374
          %1379 = vst [vmem:[%s446] sm:$0xf] %v1375
          %1380 = vst [vmem:[%s446 + $0x4] sm:$0xf] %v1376
          %v1381 = vpack.c.bf16 %v1366, %v1365
          %1382 = vmatprep.subr.bf16.mxu0 %v1175
          %1383 = vmatpush1.bf16.msra.mxu0 %v1174
          %1384 = vmatprep.subr.bf16.mxu0 %v1171
          %1385 = vmatpush1.bf16.msra.mxu0 %v1170
          %1386 = vmatprep.subr.bf16.mxu0 %v1167
          %1387 = vmatpush1.bf16.msra.mxu0 %v1166
          %1388 = vmatprep.subr.bf16.mxu0 %v1163
          %1389 = vmatpush1.bf16.msra.mxu0 %v1162
          %1390 = vmatprep.subr.bf16.mxu0 %v1159
          %1391 = vmatpush1.bf16.msra.mxu0 %v1158
          %1392 = vmatprep.subr.bf16.mxu0 %v1155
          %1393 = vmatpush1.bf16.msra.mxu0 %v1154
          %1394 = vmatprep.subr.bf16.mxu0 %v1151
          %1395 = vmatpush1.bf16.msra.mxu0 %v1150
          %1396 = vmatprep.subr.bf16.mxu0 %v1147
          %1397 = vmatpush1.bf16.msra.mxu0 %v1146
          %1398 = vmatprep.subr.bf16.mxu0 0
          %1399 = vmatpush2.bf16.msra.mxu0 0
          %1400 = vmatprep.subr.bf16.mxu0 0
          %1401 = vmatpush2.bf16.msra.mxu0 0
          %1402 = vmatprep.subr.bf16.mxu0 0
          %1403 = vmatpush2.bf16.msra.mxu0 0
          %1404 = vmatprep.subr.bf16.mxu0 0
          %1405 = vmatpush2.bf16.msra.mxu0 0
          %1406 = vmatprep.subr.bf16.mxu0 0
          %1407 = vmatpush2.bf16.msra.mxu0 0
          %1408 = vmatprep.subr.bf16.mxu0 0
          %1409 = vmatpush2.bf16.msra.mxu0 0
          %1410 = vmatprep.subr.bf16.mxu0 0
          %1411 = vmatpush2.bf16.msra.mxu0 0
          %1412 = vmatprep.subr.bf16.mxu0 0
          %1413 = vmatpush2.bf16.msra.mxu0 0
          %1414 = vmatprep.mubr.bf16.mxu0 0
          %1415 = vmatmul.mubr.bf16.gmra.mxu0 %v1381
          %v1416 = vpop.f32.mrf.mxu0
          %v1417 = vadd.f32 0.0, %v1416
          %v1418 = vpop.f32.mrf.mxu0
          %v1419 = vadd.f32 0.0, %v1418
          %v1420 = vpop.f32.mrf.mxu0
          %v1421 = vadd.f32 0.0, %v1420
          %v1422 = vpop.f32.mrf.mxu0
          %v1423 = vadd.f32 0.0, %v1422
          %1424 = vdwg.mxu0
          %1425 = vmatprep.subr.bf16.mxu0 %v1177
          %1426 = vmatpush1.bf16.msra.mxu0 %v1176
          %1427 = vmatprep.subr.bf16.mxu0 %v1173
          %1428 = vmatpush1.bf16.msra.mxu0 %v1172
          %1429 = vmatprep.subr.bf16.mxu0 %v1169
          %1430 = vmatpush1.bf16.msra.mxu0 %v1168
          %1431 = vmatprep.subr.bf16.mxu0 %v1165
          %1432 = vmatpush1.bf16.msra.mxu0 %v1164
          %1433 = vmatprep.subr.bf16.mxu0 %v1161
          %1434 = vmatpush1.bf16.msra.mxu0 %v1160
          %1435 = vmatprep.subr.bf16.mxu0 %v1157
          %1436 = vmatpush1.bf16.msra.mxu0 %v1156
          %1437 = vmatprep.subr.bf16.mxu0 %v1153
          %1438 = vmatpush1.bf16.msra.mxu0 %v1152
          %1439 = vmatprep.subr.bf16.mxu0 %v1149
          %1440 = vmatpush1.bf16.msra.mxu0 %v1148
          %1441 = vmatprep.subr.bf16.mxu0 0
          %1442 = vmatpush2.bf16.msra.mxu0 0
          %1443 = vmatprep.subr.bf16.mxu0 0
          %1444 = vmatpush2.bf16.msra.mxu0 0
          %1445 = vmatprep.subr.bf16.mxu0 0
          %1446 = vmatpush2.bf16.msra.mxu0 0
          %1447 = vmatprep.subr.bf16.mxu0 0
          %1448 = vmatpush2.bf16.msra.mxu0 0
          %1449 = vmatprep.subr.bf16.mxu0 0
          %1450 = vmatpush2.bf16.msra.mxu0 0
          %1451 = vmatprep.subr.bf16.mxu0 0
          %1452 = vmatpush2.bf16.msra.mxu0 0
          %1453 = vmatprep.subr.bf16.mxu0 0
          %1454 = vmatpush2.bf16.msra.mxu0 0
          %1455 = vmatprep.subr.bf16.mxu0 0
          %1456 = vmatpush2.bf16.msra.mxu0 0
          %1457 = vmatprep.mubr.bf16.mxu0 0
          %1458 = vmatmul.mubr.bf16.gmra.mxu0 %v1381
          %v1459 = vpop.f32.mrf.mxu0
          %v1460 = vadd.f32 0.0, %v1459
          %v1461 = vpop.f32.mrf.mxu0
          %v1462 = vadd.f32 0.0, %v1461
          %v1463 = vpop.f32.mrf.mxu0
          %v1464 = vadd.f32 0.0, %v1463
          %v1465 = vpop.f32.mrf.mxu0
          %v1466 = vadd.f32 0.0, %v1465
          %1467 = vdwg.mxu0
          %v1468 = vadd.f32 %v864, %v1417
          %v1469 = vadd.f32 %v866, %v1419
          %v1470 = vadd.f32 %v977, %v1460
          %v1471 = vadd.f32 %v979, %v1462
          %v1472 = vadd.f32 %v868, %v1421
          %v1473 = vadd.f32 %v870, %v1423
          %v1474 = vadd.f32 %v981, %v1464
          %v1475 = vadd.f32 %v983, %v1466
          %v1476 = vxor.u32 %v1468, 2147483648
          %v1477 = vxor.u32 %v1472, 2147483648
          %v1478 = vmul.f32 %v1476, 1.442695
          %v1479 = vpow.pop %v1478
          %v1480 = vmul.f32 %v1477, 1.442695
          %v1481 = vpow.pop %v1480
          %v1482 = vadd.f32 %v1479, 1.0
          %v1483 = vadd.f32 %v1481, 1.0
          %v1484 = vrcp.pop %v1482
          %v1485 = vmul.f32 1.0, %v1484
          %v1486 = vrcp.pop %v1483
          %v1487 = vmul.f32 1.0, %v1486
          %v1488 = vxor.u32 %v1469, 2147483648
          %v1489 = vxor.u32 %v1473, 2147483648
          %v1490 = vmul.f32 %v1488, 1.442695
          %v1491 = vpow.pop %v1490
          %v1492 = vmul.f32 %v1489, 1.442695
          %v1493 = vpow.pop %v1492
          %v1494 = vadd.f32 %v1491, 1.0
          %v1495 = vadd.f32 %v1493, 1.0
          %v1496 = vrcp.pop %v1494
          %v1497 = vmul.f32 1.0, %v1496
          %v1498 = vrcp.pop %v1495
          %v1499 = vmul.f32 1.0, %v1498
          %v1500 = vtanh.pop %v1470
          %v1501 = vtanh.pop %v1474
          %v1502 = vxor.u32 %v1471, 2147483648
          %v1503 = vxor.u32 %v1475, 2147483648
          %v1504 = vmul.f32 %v1502, 1.442695
          %v1505 = vpow.pop %v1504
          %v1506 = vmul.f32 %v1503, 1.442695
          %v1507 = vpow.pop %v1506
          %v1508 = vadd.f32 %v1505, 1.0
          %v1509 = vadd.f32 %v1507, 1.0
          %v1510 = vrcp.pop %v1508
          %v1511 = vmul.f32 1.0, %v1510
          %v1512 = vrcp.pop %v1509
          %v1513 = vmul.f32 1.0, %v1512
          %v1514 = vmul.f32 %v1497, %v1367
          %v1515 = vmul.f32 %v1499, %v1368
          %v1516 = vmul.f32 %v1485, %v1500
          %v1517 = vmul.f32 %v1487, %v1501
          %v1518 = vadd.f32 %v1514, %v1516
          %v1519 = vadd.f32 %v1515, %v1517
          %v1520 = vtanh.pop %v1518
          %v1521 = vtanh.pop %v1519
          %v1522 = vmul.f32 %v1511, %v1520
          %v1523 = vmul.f32 %v1513, %v1521
          %s1524 = sadd.s32 %s481, 1
          %v1525 = vstv %s1524
          %vm1526 = vcmp.lt.s32.totalorder %v1525, %v507
          %vm1527 = vcmp.lt.s32.totalorder %v1525, %v508
          %v1528 = vsel %vm1526, 1, 0
          %v1529 = vsel %vm1527, 1, 0
          %1530 = vset.pattern.permute.xlu0 0
          %1531 = vperm.xlu0 %1530, %v1528
          %v1532 = vpop.permute.xlu0 %1531
          %1533 = vset.pattern.permute.xlu0 0
          %1534 = vperm.xlu0 %1533, %v1529
          %v1535 = vpop.permute.xlu0 %1534
          %vm1536 = vcmp.eq.s32.totalorder %v1532, 1
          %vm1537 = vcmp.eq.s32.totalorder %v1535, 1
          %v1538 = vsel %vm1536, %v1522, %v1365
          %v1539 = vsel %vm1537, %v1523, %v1366
          %v1540 = vsel %vm1536, %v1518, %v1367
          %v1541 = vsel %vm1537, %v1519, %v1368
          %v1542 = vsel %vm1536, %v1522, 0.0
          %v1543 = vsel %vm1537, %v1523, 0.0
          %v1544 = vpack.c.bf16 %v1543, %v1542
          %v1546 = vunpack.c.l.b16 %v1544
          %v1547 = vunpack.c.h.b16 %v1544
          %v1548 = vpack.c.b16 %v1546, %v1546
          %v1549 = vpack.c.b16 %v1547, %v1547
          %s1552 = scalar_lea.vmem %s446, 8 [#allocation7]
          %1553 = vst [vmem:[%s1552] sm:$0xf] %v1548
          %1554 = vst [vmem:[%s1552 + $0x4] sm:$0xf] %v1549
          %v1555 = vpack.c.bf16 %v1539, %v1538
          %1556 = vmatprep.subr.bf16.mxu0 %v1175
          %1557 = vmatpush1.bf16.msra.mxu0 %v1174
          %1558 = vmatprep.subr.bf16.mxu0 %v1171
          %1559 = vmatpush1.bf16.msra.mxu0 %v1170
          %1560 = vmatprep.subr.bf16.mxu0 %v1167
          %1561 = vmatpush1.bf16.msra.mxu0 %v1166
          %1562 = vmatprep.subr.bf16.mxu0 %v1163
          %1563 = vmatpush1.bf16.msra.mxu0 %v1162
          %1564 = vmatprep.subr.bf16.mxu0 %v1159
          %1565 = vmatpush1.bf16.msra.mxu0 %v1158
          %1566 = vmatprep.subr.bf16.mxu0 %v1155
          %1567 = vmatpush1.bf16.msra.mxu0 %v1154
          %1568 = vmatprep.subr.bf16.mxu0 %v1151
          %1569 = vmatpush1.bf16.msra.mxu0 %v1150
          %1570 = vmatprep.subr.bf16.mxu0 %v1147
          %1571 = vmatpush1.bf16.msra.mxu0 %v1146
          %1572 = vmatprep.subr.bf16.mxu0 0
          %1573 = vmatpush2.bf16.msra.mxu0 0
          %1574 = vmatprep.subr.bf16.mxu0 0
          %1575 = vmatpush2.bf16.msra.mxu0 0
          %1576 = vmatprep.subr.bf16.mxu0 0
          %1577 = vmatpush2.bf16.msra.mxu0 0
          %1578 = vmatprep.subr.bf16.mxu0 0
          %1579 = vmatpush2.bf16.msra.mxu0 0
          %1580 = vmatprep.subr.bf16.mxu0 0
          %1581 = vmatpush2.bf16.msra.mxu0 0
          %1582 = vmatprep.subr.bf16.mxu0 0
          %1583 = vmatpush2.bf16.msra.mxu0 0
          %1584 = vmatprep.subr.bf16.mxu0 0
          %1585 = vmatpush2.bf16.msra.mxu0 0
          %1586 = vmatprep.subr.bf16.mxu0 0
          %1587 = vmatpush2.bf16.msra.mxu0 0
          %1588 = vmatprep.mubr.bf16.mxu0 0
          %1589 = vmatmul.mubr.bf16.gmra.mxu0 %v1555
          %v1590 = vpop.f32.mrf.mxu0
          %v1591 = vadd.f32 0.0, %v1590
          %v1592 = vpop.f32.mrf.mxu0
          %v1593 = vadd.f32 0.0, %v1592
          %v1594 = vpop.f32.mrf.mxu0
          %v1595 = vadd.f32 0.0, %v1594
          %v1596 = vpop.f32.mrf.mxu0
          %v1597 = vadd.f32 0.0, %v1596
          %1598 = vdwg.mxu0
          %1599 = vmatprep.subr.bf16.mxu0 %v1177
          %1600 = vmatpush1.bf16.msra.mxu0 %v1176
          %1601 = vmatprep.subr.bf16.mxu0 %v1173
          %1602 = vmatpush1.bf16.msra.mxu0 %v1172
          %1603 = vmatprep.subr.bf16.mxu0 %v1169
          %1604 = vmatpush1.bf16.msra.mxu0 %v1168
          %1605 = vmatprep.subr.bf16.mxu0 %v1165
          %1606 = vmatpush1.bf16.msra.mxu0 %v1164
          %1607 = vmatprep.subr.bf16.mxu0 %v1161
          %1608 = vmatpush1.bf16.msra.mxu0 %v1160
          %1609 = vmatprep.subr.bf16.mxu0 %v1157
          %1610 = vmatpush1.bf16.msra.mxu0 %v1156
          %1611 = vmatprep.subr.bf16.mxu0 %v1153
          %1612 = vmatpush1.bf16.msra.mxu0 %v1152
          %1613 = vmatprep.subr.bf16.mxu0 %v1149
          %1614 = vmatpush1.bf16.msra.mxu0 %v1148
          %1615 = vmatprep.subr.bf16.mxu0 0
          %1616 = vmatpush2.bf16.msra.mxu0 0
          %1617 = vmatprep.subr.bf16.mxu0 0
          %1618 = vmatpush2.bf16.msra.mxu0 0
          %1619 = vmatprep.subr.bf16.mxu0 0
          %1620 = vmatpush2.bf16.msra.mxu0 0
          %1621 = vmatprep.subr.bf16.mxu0 0
          %1622 = vmatpush2.bf16.msra.mxu0 0
          %1623 = vmatprep.subr.bf16.mxu0 0
          %1624 = vmatpush2.bf16.msra.mxu0 0
          %1625 = vmatprep.subr.bf16.mxu0 0
          %1626 = vmatpush2.bf16.msra.mxu0 0
          %1627 = vmatprep.subr.bf16.mxu0 0
          %1628 = vmatpush2.bf16.msra.mxu0 0
          %1629 = vmatprep.subr.bf16.mxu0 0
          %1630 = vmatpush2.bf16.msra.mxu0 0
          %1631 = vmatprep.mubr.bf16.mxu0 0
          %1632 = vmatmul.mubr.bf16.gmra.mxu0 %v1555
          %v1633 = vpop.f32.mrf.mxu0
          %v1634 = vadd.f32 0.0, %v1633
          %v1635 = vpop.f32.mrf.mxu0
          %v1636 = vadd.f32 0.0, %v1635
          %v1637 = vpop.f32.mrf.mxu0
          %v1638 = vadd.f32 0.0, %v1637
          %v1639 = vpop.f32.mrf.mxu0
          %v1640 = vadd.f32 0.0, %v1639
          %1641 = vdwg.mxu0
          %v1642 = vadd.f32 %v874, %v1591
          %v1643 = vadd.f32 %v876, %v1593
          %v1644 = vadd.f32 %v987, %v1634
          %v1645 = vadd.f32 %v989, %v1636
          %v1646 = vadd.f32 %v878, %v1595
          %v1647 = vadd.f32 %v880, %v1597
          %v1648 = vadd.f32 %v991, %v1638
          %v1649 = vadd.f32 %v993, %v1640
          %v1650 = vxor.u32 %v1642, 2147483648
          %v1651 = vxor.u32 %v1646, 2147483648
          %v1652 = vmul.f32 %v1650, 1.442695
          %v1653 = vpow.pop %v1652
          %v1654 = vmul.f32 %v1651, 1.442695
          %v1655 = vpow.pop %v1654
          %v1656 = vadd.f32 %v1653, 1.0
          %v1657 = vadd.f32 %v1655, 1.0
          %v1658 = vrcp.pop %v1656
          %v1659 = vmul.f32 1.0, %v1658
          %v1660 = vrcp.pop %v1657
          %v1661 = vmul.f32 1.0, %v1660
          %v1662 = vxor.u32 %v1643, 2147483648
          %v1663 = vxor.u32 %v1647, 2147483648
          %v1664 = vmul.f32 %v1662, 1.442695
          %v1665 = vpow.pop %v1664
          %v1666 = vmul.f32 %v1663, 1.442695
          %v1667 = vpow.pop %v1666
          %v1668 = vadd.f32 %v1665, 1.0
          %v1669 = vadd.f32 %v1667, 1.0
          %v1670 = vrcp.pop %v1668
          %v1671 = vmul.f32 1.0, %v1670
          %v1672 = vrcp.pop %v1669
          %v1673 = vmul.f32 1.0, %v1672
          %v1674 = vtanh.pop %v1644
          %v1675 = vtanh.pop %v1648
          %v1676 = vxor.u32 %v1645, 2147483648
          %v1677 = vxor.u32 %v1649, 2147483648
          %v1678 = vmul.f32 %v1676, 1.442695
          %v1679 = vpow.pop %v1678
          %v1680 = vmul.f32 %v1677, 1.442695
          %v1681 = vpow.pop %v1680
          %v1682 = vadd.f32 %v1679, 1.0
          %v1683 = vadd.f32 %v1681, 1.0
          %v1684 = vrcp.pop %v1682
          %v1685 = vmul.f32 1.0, %v1684
          %v1686 = vrcp.pop %v1683
          %v1687 = vmul.f32 1.0, %v1686
          %v1688 = vmul.f32 %v1671, %v1540
          %v1689 = vmul.f32 %v1673, %v1541
          %v1690 = vmul.f32 %v1659, %v1674
          %v1691 = vmul.f32 %v1661, %v1675
          %v1692 = vadd.f32 %v1688, %v1690
          %v1693 = vadd.f32 %v1689, %v1691
          %v1694 = vtanh.pop %v1692
          %v1695 = vtanh.pop %v1693
          %v1696 = vmul.f32 %v1685, %v1694
          %v1697 = vmul.f32 %v1687, %v1695
          %s1698 = sadd.s32 %s481, 2
          %v1699 = vstv %s1698
          %vm1700 = vcmp.lt.s32.totalorder %v1699, %v507
          %vm1701 = vcmp.lt.s32.totalorder %v1699, %v508
          %v1702 = vsel %vm1700, 1, 0
          %v1703 = vsel %vm1701, 1, 0
          %1704 = vset.pattern.permute.xlu0 0
          %1705 = vperm.xlu0 %1704, %v1702
          %v1706 = vpop.permute.xlu0 %1705
          %1707 = vset.pattern.permute.xlu0 0
          %1708 = vperm.xlu0 %1707, %v1703
          %v1709 = vpop.permute.xlu0 %1708
          %vm1710 = vcmp.eq.s32.totalorder %v1706, 1
          %vm1711 = vcmp.eq.s32.totalorder %v1709, 1
          %v1712 = vsel %vm1710, %v1696, %v1538
          %v1713 = vsel %vm1711, %v1697, %v1539
          %v1714 = vsel %vm1710, %v1692, %v1540
          %v1715 = vsel %vm1711, %v1693, %v1541
          %v1716 = vsel %vm1710, %v1696, 0.0
          %v1717 = vsel %vm1711, %v1697, 0.0
          %v1718 = vpack.c.bf16 %v1717, %v1716
          %v1720 = vunpack.c.l.b16 %v1718
          %v1721 = vunpack.c.h.b16 %v1718
          %v1722 = vpack.c.b16 %v1720, %v1720
          %v1723 = vpack.c.b16 %v1721, %v1721
          %s1726 = scalar_lea.vmem %s446, 16 [#allocation7]
          %1727 = vst [vmem:[%s1726] sm:$0xf] %v1722
          %1728 = vst [vmem:[%s1726 + $0x4] sm:$0xf] %v1723
          %v1729 = vpack.c.bf16 %v1713, %v1712
          %1730 = vmatprep.subr.bf16.mxu0 %v1175
          %1731 = vmatpush1.bf16.msra.mxu0 %v1174
          %1732 = vmatprep.subr.bf16.mxu0 %v1171
          %1733 = vmatpush1.bf16.msra.mxu0 %v1170
          %1734 = vmatprep.subr.bf16.mxu0 %v1167
          %1735 = vmatpush1.bf16.msra.mxu0 %v1166
          %1736 = vmatprep.subr.bf16.mxu0 %v1163
          %1737 = vmatpush1.bf16.msra.mxu0 %v1162
          %1738 = vmatprep.subr.bf16.mxu0 %v1159
          %1739 = vmatpush1.bf16.msra.mxu0 %v1158
          %1740 = vmatprep.subr.bf16.mxu0 %v1155
          %1741 = vmatpush1.bf16.msra.mxu0 %v1154
          %1742 = vmatprep.subr.bf16.mxu0 %v1151
          %1743 = vmatpush1.bf16.msra.mxu0 %v1150
          %1744 = vmatprep.subr.bf16.mxu0 %v1147
          %1745 = vmatpush1.bf16.msra.mxu0 %v1146
          %1746 = vmatprep.subr.bf16.mxu0 0
          %1747 = vmatpush2.bf16.msra.mxu0 0
          %1748 = vmatprep.subr.bf16.mxu0 0
          %1749 = vmatpush2.bf16.msra.mxu0 0
          %1750 = vmatprep.subr.bf16.mxu0 0
          %1751 = vmatpush2.bf16.msra.mxu0 0
          %1752 = vmatprep.subr.bf16.mxu0 0
          %1753 = vmatpush2.bf16.msra.mxu0 0
          %1754 = vmatprep.subr.bf16.mxu0 0
          %1755 = vmatpush2.bf16.msra.mxu0 0
          %1756 = vmatprep.subr.bf16.mxu0 0
          %1757 = vmatpush2.bf16.msra.mxu0 0
          %1758 = vmatprep.subr.bf16.mxu0 0
          %1759 = vmatpush2.bf16.msra.mxu0 0
          %1760 = vmatprep.subr.bf16.mxu0 0
          %1761 = vmatpush2.bf16.msra.mxu0 0
          %1762 = vmatprep.mubr.bf16.mxu0 0
          %1763 = vmatmul.mubr.bf16.gmra.mxu0 %v1729
          %v1764 = vpop.f32.mrf.mxu0
          %v1765 = vadd.f32 0.0, %v1764
          %v1766 = vpop.f32.mrf.mxu0
          %v1767 = vadd.f32 0.0, %v1766
          %v1768 = vpop.f32.mrf.mxu0
          %v1769 = vadd.f32 0.0, %v1768
          %v1770 = vpop.f32.mrf.mxu0
          %v1771 = vadd.f32 0.0, %v1770
          %1772 = vdwg.mxu0
          %1773 = vmatprep.subr.bf16.mxu0 %v1177
          %1774 = vmatpush1.bf16.msra.mxu0 %v1176
          %1775 = vmatprep.subr.bf16.mxu0 %v1173
          %1776 = vmatpush1.bf16.msra.mxu0 %v1172
          %1777 = vmatprep.subr.bf16.mxu0 %v1169
          %1778 = vmatpush1.bf16.msra.mxu0 %v1168
          %1779 = vmatprep.subr.bf16.mxu0 %v1165
          %1780 = vmatpush1.bf16.msra.mxu0 %v1164
          %1781 = vmatprep.subr.bf16.mxu0 %v1161
          %1782 = vmatpush1.bf16.msra.mxu0 %v1160
          %1783 = vmatprep.subr.bf16.mxu0 %v1157
          %1784 = vmatpush1.bf16.msra.mxu0 %v1156
          %1785 = vmatprep.subr.bf16.mxu0 %v1153
          %1786 = vmatpush1.bf16.msra.mxu0 %v1152
          %1787 = vmatprep.subr.bf16.mxu0 %v1149
          %1788 = vmatpush1.bf16.msra.mxu0 %v1148
          %1789 = vmatprep.subr.bf16.mxu0 0
          %1790 = vmatpush2.bf16.msra.mxu0 0
          %1791 = vmatprep.subr.bf16.mxu0 0
          %1792 = vmatpush2.bf16.msra.mxu0 0
          %1793 = vmatprep.subr.bf16.mxu0 0
          %1794 = vmatpush2.bf16.msra.mxu0 0
          %1795 = vmatprep.subr.bf16.mxu0 0
          %1796 = vmatpush2.bf16.msra.mxu0 0
          %1797 = vmatprep.subr.bf16.mxu0 0
          %1798 = vmatpush2.bf16.msra.mxu0 0
          %1799 = vmatprep.subr.bf16.mxu0 0
          %1800 = vmatpush2.bf16.msra.mxu0 0
          %1801 = vmatprep.subr.bf16.mxu0 0
          %1802 = vmatpush2.bf16.msra.mxu0 0
          %1803 = vmatprep.subr.bf16.mxu0 0
          %1804 = vmatpush2.bf16.msra.mxu0 0
          %1805 = vmatprep.mubr.bf16.mxu0 0
          %1806 = vmatmul.mubr.bf16.gmra.mxu0 %v1729
          %v1807 = vpop.f32.mrf.mxu0
          %v1808 = vadd.f32 0.0, %v1807
          %v1809 = vpop.f32.mrf.mxu0
          %v1810 = vadd.f32 0.0, %v1809
          %v1811 = vpop.f32.mrf.mxu0
          %v1812 = vadd.f32 0.0, %v1811
          %v1813 = vpop.f32.mrf.mxu0
          %v1814 = vadd.f32 0.0, %v1813
          %1815 = vdwg.mxu0
          %v1816 = vadd.f32 %v884, %v1765
          %v1817 = vadd.f32 %v886, %v1767
          %v1818 = vadd.f32 %v997, %v1808
          %v1819 = vadd.f32 %v999, %v1810
          %v1820 = vadd.f32 %v888, %v1769
          %v1821 = vadd.f32 %v890, %v1771
          %v1822 = vadd.f32 %v1001, %v1812
          %v1823 = vadd.f32 %v1003, %v1814
          %v1824 = vxor.u32 %v1816, 2147483648
          %v1825 = vxor.u32 %v1820, 2147483648
          %v1826 = vmul.f32 %v1824, 1.442695
          %v1827 = vpow.pop %v1826
          %v1828 = vmul.f32 %v1825, 1.442695
          %v1829 = vpow.pop %v1828
          %v1830 = vadd.f32 %v1827, 1.0
          %v1831 = vadd.f32 %v1829, 1.0
          %v1832 = vrcp.pop %v1830
          %v1833 = vmul.f32 1.0, %v1832
          %v1834 = vrcp.pop %v1831
          %v1835 = vmul.f32 1.0, %v1834
          %v1836 = vxor.u32 %v1817, 2147483648
          %v1837 = vxor.u32 %v1821, 2147483648
          %v1838 = vmul.f32 %v1836, 1.442695
          %v1839 = vpow.pop %v1838
          %v1840 = vmul.f32 %v1837, 1.442695
          %v1841 = vpow.pop %v1840
          %v1842 = vadd.f32 %v1839, 1.0
          %v1843 = vadd.f32 %v1841, 1.0
          %v1844 = vrcp.pop %v1842
          %v1845 = vmul.f32 1.0, %v1844
          %v1846 = vrcp.pop %v1843
          %v1847 = vmul.f32 1.0, %v1846
          %v1848 = vtanh.pop %v1818
          %v1849 = vtanh.pop %v1822
          %v1850 = vxor.u32 %v1819, 2147483648
          %v1851 = vxor.u32 %v1823, 2147483648
          %v1852 = vmul.f32 %v1850, 1.442695
          %v1853 = vpow.pop %v1852
          %v1854 = vmul.f32 %v1851, 1.442695
          %v1855 = vpow.pop %v1854
          %v1856 = vadd.f32 %v1853, 1.0
          %v1857 = vadd.f32 %v1855, 1.0
          %v1858 = vrcp.pop %v1856
          %v1859 = vmul.f32 1.0, %v1858
          %v1860 = vrcp.pop %v1857
          %v1861 = vmul.f32 1.0, %v1860
          %v1862 = vmul.f32 %v1845, %v1714
          %v1863 = vmul.f32 %v1847, %v1715
          %v1864 = vmul.f32 %v1833, %v1848
          %v1865 = vmul.f32 %v1835, %v1849
          %v1866 = vadd.f32 %v1862, %v1864
          %v1867 = vadd.f32 %v1863, %v1865
          %v1868 = vtanh.pop %v1866
          %v1869 = vtanh.pop %v1867
          %v1870 = vmul.f32 %v1859, %v1868
          %v1871 = vmul.f32 %v1861, %v1869
          %s1872 = sadd.s32 %s481, 3
          %v1873 = vstv %s1872
          %vm1874 = vcmp.lt.s32.totalorder %v1873, %v507
          %vm1875 = vcmp.lt.s32.totalorder %v1873, %v508
          %v1876 = vsel %vm1874, 1, 0
          %v1877 = vsel %vm1875, 1, 0
          %1878 = vset.pattern.permute.xlu0 0
          %1879 = vperm.xlu0 %1878, %v1876
          %v1880 = vpop.permute.xlu0 %1879
          %1881 = vset.pattern.permute.xlu0 0
          %1882 = vperm.xlu0 %1881, %v1877
          %v1883 = vpop.permute.xlu0 %1882
          %vm1884 = vcmp.eq.s32.totalorder %v1880, 1
          %vm1885 = vcmp.eq.s32.totalorder %v1883, 1
          %v1886 = vsel %vm1884, %v1870, %v1712
          %v1887 = vsel %vm1885, %v1871, %v1713
          %v1888 = vsel %vm1884, %v1866, %v1714
          %v1889 = vsel %vm1885, %v1867, %v1715
          %v1890 = vsel %vm1884, %v1870, 0.0
          %v1891 = vsel %vm1885, %v1871, 0.0
          %v1892 = vpack.c.bf16 %v1891, %v1890
          %v1894 = vunpack.c.l.b16 %v1892
          %v1895 = vunpack.c.h.b16 %v1892
          %v1896 = vpack.c.b16 %v1894, %v1894
          %v1897 = vpack.c.b16 %v1895, %v1895
          %s1900 = scalar_lea.vmem %s446, 24 [#allocation7]
          %1901 = vst [vmem:[%s1900] sm:$0xf] %v1896
          %1902 = vst [vmem:[%s1900 + $0x4] sm:$0xf] %v1897
          %v1903 = vpack.c.bf16 %v1887, %v1886
          %1904 = vmatprep.subr.bf16.mxu0 %v1175
          %1905 = vmatpush1.bf16.msra.mxu0 %v1174
          %1906 = vmatprep.subr.bf16.mxu0 %v1171
          %1907 = vmatpush1.bf16.msra.mxu0 %v1170
          %1908 = vmatprep.subr.bf16.mxu0 %v1167
          %1909 = vmatpush1.bf16.msra.mxu0 %v1166
          %1910 = vmatprep.subr.bf16.mxu0 %v1163
          %1911 = vmatpush1.bf16.msra.mxu0 %v1162
          %1912 = vmatprep.subr.bf16.mxu0 %v1159
          %1913 = vmatpush1.bf16.msra.mxu0 %v1158
          %1914 = vmatprep.subr.bf16.mxu0 %v1155
          %1915 = vmatpush1.bf16.msra.mxu0 %v1154
          %1916 = vmatprep.subr.bf16.mxu0 %v1151
          %1917 = vmatpush1.bf16.msra.mxu0 %v1150
          %1918 = vmatprep.subr.bf16.mxu0 %v1147
          %1919 = vmatpush1.bf16.msra.mxu0 %v1146
          %1920 = vmatprep.subr.bf16.mxu0 0
          %1921 = vmatpush2.bf16.msra.mxu0 0
          %1922 = vmatprep.subr.bf16.mxu0 0
          %1923 = vmatpush2.bf16.msra.mxu0 0
          %1924 = vmatprep.subr.bf16.mxu0 0
          %1925 = vmatpush2.bf16.msra.mxu0 0
          %1926 = vmatprep.subr.bf16.mxu0 0
          %1927 = vmatpush2.bf16.msra.mxu0 0
          %1928 = vmatprep.subr.bf16.mxu0 0
          %1929 = vmatpush2.bf16.msra.mxu0 0
          %1930 = vmatprep.subr.bf16.mxu0 0
          %1931 = vmatpush2.bf16.msra.mxu0 0
          %1932 = vmatprep.subr.bf16.mxu0 0
          %1933 = vmatpush2.bf16.msra.mxu0 0
          %1934 = vmatprep.subr.bf16.mxu0 0
          %1935 = vmatpush2.bf16.msra.mxu0 0
          %1936 = vmatprep.mubr.bf16.mxu0 0
          %1937 = vmatmul.mubr.bf16.gmra.mxu0 %v1903
          %v1938 = vpop.f32.mrf.mxu0
          %v1939 = vadd.f32 0.0, %v1938
          %v1940 = vpop.f32.mrf.mxu0
          %v1941 = vadd.f32 0.0, %v1940
          %v1942 = vpop.f32.mrf.mxu0
          %v1943 = vadd.f32 0.0, %v1942
          %v1944 = vpop.f32.mrf.mxu0
          %v1945 = vadd.f32 0.0, %v1944
          %1946 = vdwg.mxu0
          %1947 = vmatprep.subr.bf16.mxu0 %v1177
          %1948 = vmatpush1.bf16.msra.mxu0 %v1176
          %1949 = vmatprep.subr.bf16.mxu0 %v1173
          %1950 = vmatpush1.bf16.msra.mxu0 %v1172
          %1951 = vmatprep.subr.bf16.mxu0 %v1169
          %1952 = vmatpush1.bf16.msra.mxu0 %v1168
          %1953 = vmatprep.subr.bf16.mxu0 %v1165
          %1954 = vmatpush1.bf16.msra.mxu0 %v1164
          %1955 = vmatprep.subr.bf16.mxu0 %v1161
          %1956 = vmatpush1.bf16.msra.mxu0 %v1160
          %1957 = vmatprep.subr.bf16.mxu0 %v1157
          %1958 = vmatpush1.bf16.msra.mxu0 %v1156
          %1959 = vmatprep.subr.bf16.mxu0 %v1153
          %1960 = vmatpush1.bf16.msra.mxu0 %v1152
          %1961 = vmatprep.subr.bf16.mxu0 %v1149
          %1962 = vmatpush1.bf16.msra.mxu0 %v1148
          %1963 = vmatprep.subr.bf16.mxu0 0
          %1964 = vmatpush2.bf16.msra.mxu0 0
          %1965 = vmatprep.subr.bf16.mxu0 0
          %1966 = vmatpush2.bf16.msra.mxu0 0
          %1967 = vmatprep.subr.bf16.mxu0 0
          %1968 = vmatpush2.bf16.msra.mxu0 0
          %1969 = vmatprep.subr.bf16.mxu0 0
          %1970 = vmatpush2.bf16.msra.mxu0 0
          %1971 = vmatprep.subr.bf16.mxu0 0
          %1972 = vmatpush2.bf16.msra.mxu0 0
          %1973 = vmatprep.subr.bf16.mxu0 0
          %1974 = vmatpush2.bf16.msra.mxu0 0
          %1975 = vmatprep.subr.bf16.mxu0 0
          %1976 = vmatpush2.bf16.msra.mxu0 0
          %1977 = vmatprep.subr.bf16.mxu0 0
          %1978 = vmatpush2.bf16.msra.mxu0 0
          %1979 = vmatprep.mubr.bf16.mxu0 0
          %1980 = vmatmul.mubr.bf16.gmra.mxu0 %v1903
          %v1981 = vpop.f32.mrf.mxu0
          %v1982 = vadd.f32 0.0, %v1981
          %v1983 = vpop.f32.mrf.mxu0
          %v1984 = vadd.f32 0.0, %v1983
          %v1985 = vpop.f32.mrf.mxu0
          %v1986 = vadd.f32 0.0, %v1985
          %v1987 = vpop.f32.mrf.mxu0
          %v1988 = vadd.f32 0.0, %v1987
          %1989 = vdwg.mxu0
          %v1990 = vadd.f32 %v894, %v1939
          %v1991 = vadd.f32 %v896, %v1941
          %v1992 = vadd.f32 %v1007, %v1982
          %v1993 = vadd.f32 %v1009, %v1984
          %v1994 = vadd.f32 %v898, %v1943
          %v1995 = vadd.f32 %v900, %v1945
          %v1996 = vadd.f32 %v1011, %v1986
          %v1997 = vadd.f32 %v1013, %v1988
          %v1998 = vxor.u32 %v1990, 2147483648
          %v1999 = vxor.u32 %v1994, 2147483648
          %v2000 = vmul.f32 %v1998, 1.442695
          %v2001 = vpow.pop %v2000
          %v2002 = vmul.f32 %v1999, 1.442695
          %v2003 = vpow.pop %v2002
          %v2004 = vadd.f32 %v2001, 1.0
          %v2005 = vadd.f32 %v2003, 1.0
          %v2006 = vrcp.pop %v2004
          %v2007 = vmul.f32 1.0, %v2006
          %v2008 = vrcp.pop %v2005
          %v2009 = vmul.f32 1.0, %v2008
          %v2010 = vxor.u32 %v1991, 2147483648
          %v2011 = vxor.u32 %v1995, 2147483648
          %v2012 = vmul.f32 %v2010, 1.442695
          %v2013 = vpow.pop %v2012
          %v2014 = vmul.f32 %v2011, 1.442695
          %v2015 = vpow.pop %v2014
          %v2016 = vadd.f32 %v2013, 1.0
          %v2017 = vadd.f32 %v2015, 1.0
          %v2018 = vrcp.pop %v2016
          %v2019 = vmul.f32 1.0, %v2018
          %v2020 = vrcp.pop %v2017
          %v2021 = vmul.f32 1.0, %v2020
          %v2022 = vtanh.pop %v1992
          %v2023 = vtanh.pop %v1996
          %v2024 = vxor.u32 %v1993, 2147483648
          %v2025 = vxor.u32 %v1997, 2147483648
          %v2026 = vmul.f32 %v2024, 1.442695
          %v2027 = vpow.pop %v2026
          %v2028 = vmul.f32 %v2025, 1.442695
          %v2029 = vpow.pop %v2028
          %v2030 = vadd.f32 %v2027, 1.0
          %v2031 = vadd.f32 %v2029, 1.0
          %v2032 = vrcp.pop %v2030
          %v2033 = vmul.f32 1.0, %v2032
          %v2034 = vrcp.pop %v2031
          %v2035 = vmul.f32 1.0, %v2034
          %v2036 = vmul.f32 %v2019, %v1888
          %v2037 = vmul.f32 %v2021, %v1889
          %v2038 = vmul.f32 %v2007, %v2022
          %v2039 = vmul.f32 %v2009, %v2023
          %v2040 = vadd.f32 %v2036, %v2038
          %v2041 = vadd.f32 %v2037, %v2039
          %v2042 = vtanh.pop %v2040
          %v2043 = vtanh.pop %v2041
          %v2044 = vmul.f32 %v2033, %v2042
          %v2045 = vmul.f32 %v2035, %v2043
          %s2046 = sadd.s32 %s481, 4
          %v2047 = vstv %s2046
          %vm2048 = vcmp.lt.s32.totalorder %v2047, %v507
          %vm2049 = vcmp.lt.s32.totalorder %v2047, %v508
          %v2050 = vsel %vm2048, 1, 0
          %v2051 = vsel %vm2049, 1, 0
          %2052 = vset.pattern.permute.xlu0 0
          %2053 = vperm.xlu0 %2052, %v2050
          %v2054 = vpop.permute.xlu0 %2053
          %2055 = vset.pattern.permute.xlu0 0
          %2056 = vperm.xlu0 %2055, %v2051
          %v2057 = vpop.permute.xlu0 %2056
          %vm2058 = vcmp.eq.s32.totalorder %v2054, 1
          %vm2059 = vcmp.eq.s32.totalorder %v2057, 1
          %v2060 = vsel %vm2058, %v2044, %v1886
          %v2061 = vsel %vm2059, %v2045, %v1887
          %v2062 = vsel %vm2058, %v2040, %v1888
          %v2063 = vsel %vm2059, %v2041, %v1889
          %v2064 = vsel %vm2058, %v2044, 0.0
          %v2065 = vsel %vm2059, %v2045, 0.0
          %v2066 = vpack.c.bf16 %v2065, %v2064
          %v2068 = vunpack.c.l.b16 %v2066
          %v2069 = vunpack.c.h.b16 %v2066
          %v2070 = vpack.c.b16 %v2068, %v2068
          %v2071 = vpack.c.b16 %v2069, %v2069
          %s2074 = scalar_lea.vmem %s446, 32 [#allocation7]
          %2075 = vst [vmem:[%s2074] sm:$0xf] %v2070
          %2076 = vst [vmem:[%s2074 + $0x4] sm:$0xf] %v2071
          %v2077 = vpack.c.bf16 %v2061, %v2060
          %2078 = vmatprep.subr.bf16.mxu0 %v1175
          %2079 = vmatpush1.bf16.msra.mxu0 %v1174
          %2080 = vmatprep.subr.bf16.mxu0 %v1171
          %2081 = vmatpush1.bf16.msra.mxu0 %v1170
          %2082 = vmatprep.subr.bf16.mxu0 %v1167
          %2083 = vmatpush1.bf16.msra.mxu0 %v1166
          %2084 = vmatprep.subr.bf16.mxu0 %v1163
          %2085 = vmatpush1.bf16.msra.mxu0 %v1162
          %2086 = vmatprep.subr.bf16.mxu0 %v1159
          %2087 = vmatpush1.bf16.msra.mxu0 %v1158
          %2088 = vmatprep.subr.bf16.mxu0 %v1155
          %2089 = vmatpush1.bf16.msra.mxu0 %v1154
          %2090 = vmatprep.subr.bf16.mxu0 %v1151
          %2091 = vmatpush1.bf16.msra.mxu0 %v1150
          %2092 = vmatprep.subr.bf16.mxu0 %v1147
          %2093 = vmatpush1.bf16.msra.mxu0 %v1146
          %2094 = vmatprep.subr.bf16.mxu0 0
          %2095 = vmatpush2.bf16.msra.mxu0 0
          %2096 = vmatprep.subr.bf16.mxu0 0
          %2097 = vmatpush2.bf16.msra.mxu0 0
          %2098 = vmatprep.subr.bf16.mxu0 0
          %2099 = vmatpush2.bf16.msra.mxu0 0
          %2100 = vmatprep.subr.bf16.mxu0 0
          %2101 = vmatpush2.bf16.msra.mxu0 0
          %2102 = vmatprep.subr.bf16.mxu0 0
          %2103 = vmatpush2.bf16.msra.mxu0 0
          %2104 = vmatprep.subr.bf16.mxu0 0
          %2105 = vmatpush2.bf16.msra.mxu0 0
          %2106 = vmatprep.subr.bf16.mxu0 0
          %2107 = vmatpush2.bf16.msra.mxu0 0
          %2108 = vmatprep.subr.bf16.mxu0 0
          %2109 = vmatpush2.bf16.msra.mxu0 0
          %2110 = vmatprep.mubr.bf16.mxu0 0
          %2111 = vmatmul.mubr.bf16.gmra.mxu0 %v2077
          %v2112 = vpop.f32.mrf.mxu0
          %v2113 = vadd.f32 0.0, %v2112
          %v2114 = vpop.f32.mrf.mxu0
          %v2115 = vadd.f32 0.0, %v2114
          %v2116 = vpop.f32.mrf.mxu0
          %v2117 = vadd.f32 0.0, %v2116
          %v2118 = vpop.f32.mrf.mxu0
          %v2119 = vadd.f32 0.0, %v2118
          %2120 = vdwg.mxu0
          %2121 = vmatprep.subr.bf16.mxu0 %v1177
          %2122 = vmatpush1.bf16.msra.mxu0 %v1176
          %2123 = vmatprep.subr.bf16.mxu0 %v1173
          %2124 = vmatpush1.bf16.msra.mxu0 %v1172
          %2125 = vmatprep.subr.bf16.mxu0 %v1169
          %2126 = vmatpush1.bf16.msra.mxu0 %v1168
          %2127 = vmatprep.subr.bf16.mxu0 %v1165
          %2128 = vmatpush1.bf16.msra.mxu0 %v1164
          %2129 = vmatprep.subr.bf16.mxu0 %v1161
          %2130 = vmatpush1.bf16.msra.mxu0 %v1160
          %2131 = vmatprep.subr.bf16.mxu0 %v1157
          %2132 = vmatpush1.bf16.msra.mxu0 %v1156
          %2133 = vmatprep.subr.bf16.mxu0 %v1153
          %2134 = vmatpush1.bf16.msra.mxu0 %v1152
          %2135 = vmatprep.subr.bf16.mxu0 %v1149
          %2136 = vmatpush1.bf16.msra.mxu0 %v1148
          %2137 = vmatprep.subr.bf16.mxu0 0
          %2138 = vmatpush2.bf16.msra.mxu0 0
          %2139 = vmatprep.subr.bf16.mxu0 0
          %2140 = vmatpush2.bf16.msra.mxu0 0
          %2141 = vmatprep.subr.bf16.mxu0 0
          %2142 = vmatpush2.bf16.msra.mxu0 0
          %2143 = vmatprep.subr.bf16.mxu0 0
          %2144 = vmatpush2.bf16.msra.mxu0 0
          %2145 = vmatprep.subr.bf16.mxu0 0
          %2146 = vmatpush2.bf16.msra.mxu0 0
          %2147 = vmatprep.subr.bf16.mxu0 0
          %2148 = vmatpush2.bf16.msra.mxu0 0
          %2149 = vmatprep.subr.bf16.mxu0 0
          %2150 = vmatpush2.bf16.msra.mxu0 0
          %2151 = vmatprep.subr.bf16.mxu0 0
          %2152 = vmatpush2.bf16.msra.mxu0 0
          %2153 = vmatprep.mubr.bf16.mxu0 0
          %2154 = vmatmul.mubr.bf16.gmra.mxu0 %v2077
          %v2155 = vpop.f32.mrf.mxu0
          %v2156 = vadd.f32 0.0, %v2155
          %v2157 = vpop.f32.mrf.mxu0
          %v2158 = vadd.f32 0.0, %v2157
          %v2159 = vpop.f32.mrf.mxu0
          %v2160 = vadd.f32 0.0, %v2159
          %v2161 = vpop.f32.mrf.mxu0
          %v2162 = vadd.f32 0.0, %v2161
          %2163 = vdwg.mxu0
          %v2164 = vadd.f32 %v904, %v2113
          %v2165 = vadd.f32 %v906, %v2115
          %v2166 = vadd.f32 %v1017, %v2156
          %v2167 = vadd.f32 %v1019, %v2158
          %v2168 = vadd.f32 %v908, %v2117
          %v2169 = vadd.f32 %v910, %v2119
          %v2170 = vadd.f32 %v1021, %v2160
          %v2171 = vadd.f32 %v1023, %v2162
          %v2172 = vxor.u32 %v2164, 2147483648
          %v2173 = vxor.u32 %v2168, 2147483648
          %v2174 = vmul.f32 %v2172, 1.442695
          %v2175 = vpow.pop %v2174
          %v2176 = vmul.f32 %v2173, 1.442695
          %v2177 = vpow.pop %v2176
          %v2178 = vadd.f32 %v2175, 1.0
          %v2179 = vadd.f32 %v2177, 1.0
          %v2180 = vrcp.pop %v2178
          %v2181 = vmul.f32 1.0, %v2180
          %v2182 = vrcp.pop %v2179
          %v2183 = vmul.f32 1.0, %v2182
          %v2184 = vxor.u32 %v2165, 2147483648
          %v2185 = vxor.u32 %v2169, 2147483648
          %v2186 = vmul.f32 %v2184, 1.442695
          %v2187 = vpow.pop %v2186
          %v2188 = vmul.f32 %v2185, 1.442695
          %v2189 = vpow.pop %v2188
          %v2190 = vadd.f32 %v2187, 1.0
          %v2191 = vadd.f32 %v2189, 1.0
          %v2192 = vrcp.pop %v2190
          %v2193 = vmul.f32 1.0, %v2192
          %v2194 = vrcp.pop %v2191
          %v2195 = vmul.f32 1.0, %v2194
          %v2196 = vtanh.pop %v2166
          %v2197 = vtanh.pop %v2170
          %v2198 = vxor.u32 %v2167, 2147483648
          %v2199 = vxor.u32 %v2171, 2147483648
          %v2200 = vmul.f32 %v2198, 1.442695
          %v2201 = vpow.pop %v2200
          %v2202 = vmul.f32 %v2199, 1.442695
          %v2203 = vpow.pop %v2202
          %v2204 = vadd.f32 %v2201, 1.0
          %v2205 = vadd.f32 %v2203, 1.0
          %v2206 = vrcp.pop %v2204
          %v2207 = vmul.f32 1.0, %v2206
          %v2208 = vrcp.pop %v2205
          %v2209 = vmul.f32 1.0, %v2208
          %v2210 = vmul.f32 %v2193, %v2062
          %v2211 = vmul.f32 %v2195, %v2063
          %v2212 = vmul.f32 %v2181, %v2196
          %v2213 = vmul.f32 %v2183, %v2197
          %v2214 = vadd.f32 %v2210, %v2212
          %v2215 = vadd.f32 %v2211, %v2213
          %v2216 = vtanh.pop %v2214
          %v2217 = vtanh.pop %v2215
          %v2218 = vmul.f32 %v2207, %v2216
          %v2219 = vmul.f32 %v2209, %v2217
          %s2220 = sadd.s32 %s481, 5
          %v2221 = vstv %s2220
          %vm2222 = vcmp.lt.s32.totalorder %v2221, %v507
          %vm2223 = vcmp.lt.s32.totalorder %v2221, %v508
          %v2224 = vsel %vm2222, 1, 0
          %v2225 = vsel %vm2223, 1, 0
          %2226 = vset.pattern.permute.xlu0 0
          %2227 = vperm.xlu0 %2226, %v2224
          %v2228 = vpop.permute.xlu0 %2227
          %2229 = vset.pattern.permute.xlu0 0
          %2230 = vperm.xlu0 %2229, %v2225
          %v2231 = vpop.permute.xlu0 %2230
          %vm2232 = vcmp.eq.s32.totalorder %v2228, 1
          %vm2233 = vcmp.eq.s32.totalorder %v2231, 1
          %v2234 = vsel %vm2232, %v2218, %v2060
          %v2235 = vsel %vm2233, %v2219, %v2061
          %v2236 = vsel %vm2232, %v2214, %v2062
          %v2237 = vsel %vm2233, %v2215, %v2063
          %v2238 = vsel %vm2232, %v2218, 0.0
          %v2239 = vsel %vm2233, %v2219, 0.0
          %v2240 = vpack.c.bf16 %v2239, %v2238
          %v2242 = vunpack.c.l.b16 %v2240
          %v2243 = vunpack.c.h.b16 %v2240
          %v2244 = vpack.c.b16 %v2242, %v2242
          %v2245 = vpack.c.b16 %v2243, %v2243
          %s2248 = scalar_lea.vmem %s446, 40 [#allocation7]
          %2249 = vst [vmem:[%s2248] sm:$0xf] %v2244
          %2250 = vst [vmem:[%s2248 + $0x4] sm:$0xf] %v2245
          %v2251 = vpack.c.bf16 %v2235, %v2234
          %2252 = vmatprep.subr.bf16.mxu0 %v1175
          %2253 = vmatpush1.bf16.msra.mxu0 %v1174
          %2254 = vmatprep.subr.bf16.mxu0 %v1171
          %2255 = vmatpush1.bf16.msra.mxu0 %v1170
          %2256 = vmatprep.subr.bf16.mxu0 %v1167
          %2257 = vmatpush1.bf16.msra.mxu0 %v1166
          %2258 = vmatprep.subr.bf16.mxu0 %v1163
          %2259 = vmatpush1.bf16.msra.mxu0 %v1162
          %2260 = vmatprep.subr.bf16.mxu0 %v1159
          %2261 = vmatpush1.bf16.msra.mxu0 %v1158
          %2262 = vmatprep.subr.bf16.mxu0 %v1155
          %2263 = vmatpush1.bf16.msra.mxu0 %v1154
          %2264 = vmatprep.subr.bf16.mxu0 %v1151
          %2265 = vmatpush1.bf16.msra.mxu0 %v1150
          %2266 = vmatprep.subr.bf16.mxu0 %v1147
          %2267 = vmatpush1.bf16.msra.mxu0 %v1146
          %2268 = vmatprep.subr.bf16.mxu0 0
          %2269 = vmatpush2.bf16.msra.mxu0 0
          %2270 = vmatprep.subr.bf16.mxu0 0
          %2271 = vmatpush2.bf16.msra.mxu0 0
          %2272 = vmatprep.subr.bf16.mxu0 0
          %2273 = vmatpush2.bf16.msra.mxu0 0
          %2274 = vmatprep.subr.bf16.mxu0 0
          %2275 = vmatpush2.bf16.msra.mxu0 0
          %2276 = vmatprep.subr.bf16.mxu0 0
          %2277 = vmatpush2.bf16.msra.mxu0 0
          %2278 = vmatprep.subr.bf16.mxu0 0
          %2279 = vmatpush2.bf16.msra.mxu0 0
          %2280 = vmatprep.subr.bf16.mxu0 0
          %2281 = vmatpush2.bf16.msra.mxu0 0
          %2282 = vmatprep.subr.bf16.mxu0 0
          %2283 = vmatpush2.bf16.msra.mxu0 0
          %2284 = vmatprep.mubr.bf16.mxu0 0
          %2285 = vmatmul.mubr.bf16.gmra.mxu0 %v2251
          %v2286 = vpop.f32.mrf.mxu0
          %v2287 = vadd.f32 0.0, %v2286
          %v2288 = vpop.f32.mrf.mxu0
          %v2289 = vadd.f32 0.0, %v2288
          %v2290 = vpop.f32.mrf.mxu0
          %v2291 = vadd.f32 0.0, %v2290
          %v2292 = vpop.f32.mrf.mxu0
          %v2293 = vadd.f32 0.0, %v2292
          %2294 = vdwg.mxu0
          %2295 = vmatprep.subr.bf16.mxu0 %v1177
          %2296 = vmatpush1.bf16.msra.mxu0 %v1176
          %2297 = vmatprep.subr.bf16.mxu0 %v1173
          %2298 = vmatpush1.bf16.msra.mxu0 %v1172
          %2299 = vmatprep.subr.bf16.mxu0 %v1169
          %2300 = vmatpush1.bf16.msra.mxu0 %v1168
          %2301 = vmatprep.subr.bf16.mxu0 %v1165
          %2302 = vmatpush1.bf16.msra.mxu0 %v1164
          %2303 = vmatprep.subr.bf16.mxu0 %v1161
          %2304 = vmatpush1.bf16.msra.mxu0 %v1160
          %2305 = vmatprep.subr.bf16.mxu0 %v1157
          %2306 = vmatpush1.bf16.msra.mxu0 %v1156
          %2307 = vmatprep.subr.bf16.mxu0 %v1153
          %2308 = vmatpush1.bf16.msra.mxu0 %v1152
          %2309 = vmatprep.subr.bf16.mxu0 %v1149
          %2310 = vmatpush1.bf16.msra.mxu0 %v1148
          %2311 = vmatprep.subr.bf16.mxu0 0
          %2312 = vmatpush2.bf16.msra.mxu0 0
          %2313 = vmatprep.subr.bf16.mxu0 0
          %2314 = vmatpush2.bf16.msra.mxu0 0
          %2315 = vmatprep.subr.bf16.mxu0 0
          %2316 = vmatpush2.bf16.msra.mxu0 0
          %2317 = vmatprep.subr.bf16.mxu0 0
          %2318 = vmatpush2.bf16.msra.mxu0 0
          %2319 = vmatprep.subr.bf16.mxu0 0
          %2320 = vmatpush2.bf16.msra.mxu0 0
          %2321 = vmatprep.subr.bf16.mxu0 0
          %2322 = vmatpush2.bf16.msra.mxu0 0
          %2323 = vmatprep.subr.bf16.mxu0 0
          %2324 = vmatpush2.bf16.msra.mxu0 0
          %2325 = vmatprep.subr.bf16.mxu0 0
          %2326 = vmatpush2.bf16.msra.mxu0 0
          %2327 = vmatprep.mubr.bf16.mxu0 0
          %2328 = vmatmul.mubr.bf16.gmra.mxu0 %v2251
          %v2329 = vpop.f32.mrf.mxu0
          %v2330 = vadd.f32 0.0, %v2329
          %v2331 = vpop.f32.mrf.mxu0
          %v2332 = vadd.f32 0.0, %v2331
          %v2333 = vpop.f32.mrf.mxu0
          %v2334 = vadd.f32 0.0, %v2333
          %v2335 = vpop.f32.mrf.mxu0
          %v2336 = vadd.f32 0.0, %v2335
          %2337 = vdwg.mxu0
          %v2338 = vadd.f32 %v914, %v2287
          %v2339 = vadd.f32 %v916, %v2289
          %v2340 = vadd.f32 %v1027, %v2330
          %v2341 = vadd.f32 %v1029, %v2332
          %v2342 = vadd.f32 %v918, %v2291
          %v2343 = vadd.f32 %v920, %v2293
          %v2344 = vadd.f32 %v1031, %v2334
          %v2345 = vadd.f32 %v1033, %v2336
          %v2346 = vxor.u32 %v2338, 2147483648
          %v2347 = vxor.u32 %v2342, 2147483648
          %v2348 = vmul.f32 %v2346, 1.442695
          %v2349 = vpow.pop %v2348
          %v2350 = vmul.f32 %v2347, 1.442695
          %v2351 = vpow.pop %v2350
          %v2352 = vadd.f32 %v2349, 1.0
          %v2353 = vadd.f32 %v2351, 1.0
          %v2354 = vrcp.pop %v2352
          %v2355 = vmul.f32 1.0, %v2354
          %v2356 = vrcp.pop %v2353
          %v2357 = vmul.f32 1.0, %v2356
          %v2358 = vxor.u32 %v2339, 2147483648
          %v2359 = vxor.u32 %v2343, 2147483648
          %v2360 = vmul.f32 %v2358, 1.442695
          %v2361 = vpow.pop %v2360
          %v2362 = vmul.f32 %v2359, 1.442695
          %v2363 = vpow.pop %v2362
          %v2364 = vadd.f32 %v2361, 1.0
          %v2365 = vadd.f32 %v2363, 1.0
          %v2366 = vrcp.pop %v2364
          %v2367 = vmul.f32 1.0, %v2366
          %v2368 = vrcp.pop %v2365
          %v2369 = vmul.f32 1.0, %v2368
          %v2370 = vtanh.pop %v2340
          %v2371 = vtanh.pop %v2344
          %v2372 = vxor.u32 %v2341, 2147483648
          %v2373 = vxor.u32 %v2345, 2147483648
          %v2374 = vmul.f32 %v2372, 1.442695
          %v2375 = vpow.pop %v2374
          %v2376 = vmul.f32 %v2373, 1.442695
          %v2377 = vpow.pop %v2376
          %v2378 = vadd.f32 %v2375, 1.0
          %v2379 = vadd.f32 %v2377, 1.0
          %v2380 = vrcp.pop %v2378
          %v2381 = vmul.f32 1.0, %v2380
          %v2382 = vrcp.pop %v2379
          %v2383 = vmul.f32 1.0, %v2382
          %v2384 = vmul.f32 %v2367, %v2236
          %v2385 = vmul.f32 %v2369, %v2237
          %v2386 = vmul.f32 %v2355, %v2370
          %v2387 = vmul.f32 %v2357, %v2371
          %v2388 = vadd.f32 %v2384, %v2386
          %v2389 = vadd.f32 %v2385, %v2387
          %v2390 = vtanh.pop %v2388
          %v2391 = vtanh.pop %v2389
          %v2392 = vmul.f32 %v2381, %v2390
          %v2393 = vmul.f32 %v2383, %v2391
          %s2394 = sadd.s32 %s481, 6
          %v2395 = vstv %s2394
          %vm2396 = vcmp.lt.s32.totalorder %v2395, %v507
          %vm2397 = vcmp.lt.s32.totalorder %v2395, %v508
          %v2398 = vsel %vm2396, 1, 0
          %v2399 = vsel %vm2397, 1, 0
          %2400 = vset.pattern.permute.xlu0 0
          %2401 = vperm.xlu0 %2400, %v2398
          %v2402 = vpop.permute.xlu0 %2401
          %2403 = vset.pattern.permute.xlu0 0
          %2404 = vperm.xlu0 %2403, %v2399
          %v2405 = vpop.permute.xlu0 %2404
          %vm2406 = vcmp.eq.s32.totalorder %v2402, 1
          %vm2407 = vcmp.eq.s32.totalorder %v2405, 1
          %v2408 = vsel %vm2406, %v2392, %v2234
          %v2409 = vsel %vm2407, %v2393, %v2235
          %v2410 = vsel %vm2406, %v2388, %v2236
          %v2411 = vsel %vm2407, %v2389, %v2237
          %v2412 = vsel %vm2406, %v2392, 0.0
          %v2413 = vsel %vm2407, %v2393, 0.0
          %v2414 = vpack.c.bf16 %v2413, %v2412
          %v2416 = vunpack.c.l.b16 %v2414
          %v2417 = vunpack.c.h.b16 %v2414
          %v2418 = vpack.c.b16 %v2416, %v2416
          %v2419 = vpack.c.b16 %v2417, %v2417
          %s2422 = scalar_lea.vmem %s446, 48 [#allocation7]
          %2423 = vst [vmem:[%s2422] sm:$0xf] %v2418
          %2424 = vst [vmem:[%s2422 + $0x4] sm:$0xf] %v2419
          %v2425 = vpack.c.bf16 %v2409, %v2408
          %2426 = vmatprep.subr.bf16.mxu0 %v1175
          %2427 = vmatpush1.bf16.msra.mxu0 %v1174
          %2428 = vmatprep.subr.bf16.mxu0 %v1171
          %2429 = vmatpush1.bf16.msra.mxu0 %v1170
          %2430 = vmatprep.subr.bf16.mxu0 %v1167
          %2431 = vmatpush1.bf16.msra.mxu0 %v1166
          %2432 = vmatprep.subr.bf16.mxu0 %v1163
          %2433 = vmatpush1.bf16.msra.mxu0 %v1162
          %2434 = vmatprep.subr.bf16.mxu0 %v1159
          %2435 = vmatpush1.bf16.msra.mxu0 %v1158
          %2436 = vmatprep.subr.bf16.mxu0 %v1155
          %2437 = vmatpush1.bf16.msra.mxu0 %v1154
          %2438 = vmatprep.subr.bf16.mxu0 %v1151
          %2439 = vmatpush1.bf16.msra.mxu0 %v1150
          %2440 = vmatprep.subr.bf16.mxu0 %v1147
          %2441 = vmatpush1.bf16.msra.mxu0 %v1146
          %2442 = vmatprep.subr.bf16.mxu0 0
          %2443 = vmatpush2.bf16.msra.mxu0 0
          %2444 = vmatprep.subr.bf16.mxu0 0
          %2445 = vmatpush2.bf16.msra.mxu0 0
          %2446 = vmatprep.subr.bf16.mxu0 0
          %2447 = vmatpush2.bf16.msra.mxu0 0
          %2448 = vmatprep.subr.bf16.mxu0 0
          %2449 = vmatpush2.bf16.msra.mxu0 0
          %2450 = vmatprep.subr.bf16.mxu0 0
          %2451 = vmatpush2.bf16.msra.mxu0 0
          %2452 = vmatprep.subr.bf16.mxu0 0
          %2453 = vmatpush2.bf16.msra.mxu0 0
          %2454 = vmatprep.subr.bf16.mxu0 0
          %2455 = vmatpush2.bf16.msra.mxu0 0
          %2456 = vmatprep.subr.bf16.mxu0 0
          %2457 = vmatpush2.bf16.msra.mxu0 0
          %2458 = vmatprep.mubr.bf16.mxu0 0
          %2459 = vmatmul.mubr.bf16.gmra.mxu0 %v2425
          %v2460 = vpop.f32.mrf.mxu0
          %v2461 = vadd.f32 0.0, %v2460
          %v2462 = vpop.f32.mrf.mxu0
          %v2463 = vadd.f32 0.0, %v2462
          %v2464 = vpop.f32.mrf.mxu0
          %v2465 = vadd.f32 0.0, %v2464
          %v2466 = vpop.f32.mrf.mxu0
          %v2467 = vadd.f32 0.0, %v2466
          %2468 = vdwg.mxu0
          %2469 = vmatprep.subr.bf16.mxu0 %v1177
          %2470 = vmatpush1.bf16.msra.mxu0 %v1176
          %2471 = vmatprep.subr.bf16.mxu0 %v1173
          %2472 = vmatpush1.bf16.msra.mxu0 %v1172
          %2473 = vmatprep.subr.bf16.mxu0 %v1169
          %2474 = vmatpush1.bf16.msra.mxu0 %v1168
          %2475 = vmatprep.subr.bf16.mxu0 %v1165
          %2476 = vmatpush1.bf16.msra.mxu0 %v1164
          %2477 = vmatprep.subr.bf16.mxu0 %v1161
          %2478 = vmatpush1.bf16.msra.mxu0 %v1160
          %2479 = vmatprep.subr.bf16.mxu0 %v1157
          %2480 = vmatpush1.bf16.msra.mxu0 %v1156
          %2481 = vmatprep.subr.bf16.mxu0 %v1153
          %2482 = vmatpush1.bf16.msra.mxu0 %v1152
          %2483 = vmatprep.subr.bf16.mxu0 %v1149
          %2484 = vmatpush1.bf16.msra.mxu0 %v1148
          %2485 = vmatprep.subr.bf16.mxu0 0
          %2486 = vmatpush2.bf16.msra.mxu0 0
          %2487 = vmatprep.subr.bf16.mxu0 0
          %2488 = vmatpush2.bf16.msra.mxu0 0
          %2489 = vmatprep.subr.bf16.mxu0 0
          %2490 = vmatpush2.bf16.msra.mxu0 0
          %2491 = vmatprep.subr.bf16.mxu0 0
          %2492 = vmatpush2.bf16.msra.mxu0 0
          %2493 = vmatprep.subr.bf16.mxu0 0
          %2494 = vmatpush2.bf16.msra.mxu0 0
          %2495 = vmatprep.subr.bf16.mxu0 0
          %2496 = vmatpush2.bf16.msra.mxu0 0
          %2497 = vmatprep.subr.bf16.mxu0 0
          %2498 = vmatpush2.bf16.msra.mxu0 0
          %2499 = vmatprep.subr.bf16.mxu0 0
          %2500 = vmatpush2.bf16.msra.mxu0 0
          %2501 = vmatprep.mubr.bf16.mxu0 0
          %2502 = vmatmul.mubr.bf16.gmra.mxu0 %v2425
          %v2503 = vpop.f32.mrf.mxu0
          %v2504 = vadd.f32 0.0, %v2503
          %v2505 = vpop.f32.mrf.mxu0
          %v2506 = vadd.f32 0.0, %v2505
          %v2507 = vpop.f32.mrf.mxu0
          %v2508 = vadd.f32 0.0, %v2507
          %v2509 = vpop.f32.mrf.mxu0
          %v2510 = vadd.f32 0.0, %v2509
          %2511 = vdwg.mxu0
          %v2512 = vadd.f32 %v924, %v2461
          %v2513 = vadd.f32 %v926, %v2463
          %v2514 = vadd.f32 %v1037, %v2504
          %v2515 = vadd.f32 %v1039, %v2506
          %v2516 = vadd.f32 %v928, %v2465
          %v2517 = vadd.f32 %v930, %v2467
          %v2518 = vadd.f32 %v1041, %v2508
          %v2519 = vadd.f32 %v1043, %v2510
          %v2520 = vxor.u32 %v2512, 2147483648
          %v2521 = vxor.u32 %v2516, 2147483648
          %v2522 = vmul.f32 %v2520, 1.442695
          %v2523 = vpow.pop %v2522
          %v2524 = vmul.f32 %v2521, 1.442695
          %v2525 = vpow.pop %v2524
          %v2526 = vadd.f32 %v2523, 1.0
          %v2527 = vadd.f32 %v2525, 1.0
          %v2528 = vrcp.pop %v2526
          %v2529 = vmul.f32 1.0, %v2528
          %v2530 = vrcp.pop %v2527
          %v2531 = vmul.f32 1.0, %v2530
          %v2532 = vxor.u32 %v2513, 2147483648
          %v2533 = vxor.u32 %v2517, 2147483648
          %v2534 = vmul.f32 %v2532, 1.442695
          %v2535 = vpow.pop %v2534
          %v2536 = vmul.f32 %v2533, 1.442695
          %v2537 = vpow.pop %v2536
          %v2538 = vadd.f32 %v2535, 1.0
          %v2539 = vadd.f32 %v2537, 1.0
          %v2540 = vrcp.pop %v2538
          %v2541 = vmul.f32 1.0, %v2540
          %v2542 = vrcp.pop %v2539
          %v2543 = vmul.f32 1.0, %v2542
          %v2544 = vtanh.pop %v2514
          %v2545 = vtanh.pop %v2518
          %v2546 = vxor.u32 %v2515, 2147483648
          %v2547 = vxor.u32 %v2519, 2147483648
          %v2548 = vmul.f32 %v2546, 1.442695
          %v2549 = vpow.pop %v2548
          %v2550 = vmul.f32 %v2547, 1.442695
          %v2551 = vpow.pop %v2550
          %v2552 = vadd.f32 %v2549, 1.0
          %v2553 = vadd.f32 %v2551, 1.0
          %v2554 = vrcp.pop %v2552
          %v2555 = vmul.f32 1.0, %v2554
          %v2556 = vrcp.pop %v2553
          %v2557 = vmul.f32 1.0, %v2556
          %v2558 = vmul.f32 %v2541, %v2410
          %v2559 = vmul.f32 %v2543, %v2411
          %v2560 = vmul.f32 %v2529, %v2544
          %v2561 = vmul.f32 %v2531, %v2545
          %v2562 = vadd.f32 %v2558, %v2560
          %v2563 = vadd.f32 %v2559, %v2561
          %v2564 = vtanh.pop %v2562
          %v2565 = vtanh.pop %v2563
          %v2566 = vmul.f32 %v2555, %v2564
          %v2567 = vmul.f32 %v2557, %v2565
          %s2568 = sadd.s32 %s481, 7
          %v2569 = vstv %s2568
          %vm2570 = vcmp.lt.s32.totalorder %v2569, %v507
          %vm2571 = vcmp.lt.s32.totalorder %v2569, %v508
          %v2572 = vsel %vm2570, 1, 0
          %v2573 = vsel %vm2571, 1, 0
          %2574 = vset.pattern.permute.xlu0 0
          %2575 = vperm.xlu0 %2574, %v2572
          %v2576 = vpop.permute.xlu0 %2575
          %2577 = vset.pattern.permute.xlu0 0
          %2578 = vperm.xlu0 %2577, %v2573
          %v2579 = vpop.permute.xlu0 %2578
          %vm2580 = vcmp.eq.s32.totalorder %v2576, 1
          %vm2581 = vcmp.eq.s32.totalorder %v2579, 1
          %v2582 = vsel %vm2580, %v2566, %v2408
          %v2583 = vsel %vm2581, %v2567, %v2409
          %v2584 = vsel %vm2580, %v2562, %v2410
          %v2585 = vsel %vm2581, %v2563, %v2411
          %v2586 = vsel %vm2580, %v2566, 0.0
          %v2587 = vsel %vm2581, %v2567, 0.0
          %v2588 = vpack.c.bf16 %v2587, %v2586
          %v2590 = vunpack.c.l.b16 %v2588
          %v2591 = vunpack.c.h.b16 %v2588
          %v2592 = vpack.c.b16 %v2590, %v2590
          %v2593 = vpack.c.b16 %v2591, %v2591
          %s2596 = scalar_lea.vmem %s446, 56 [#allocation7]
          %2597 = vst [vmem:[%s2596] sm:$0xf] %v2592
          %2598 = vst [vmem:[%s2596 + $0x4] sm:$0xf] %v2593
          %2599 = vst [vmem:[#allocation2] sm:$0xff] %v2582
          %2600 = vst [vmem:[#allocation2 + $0x8] sm:$0xff] %v2583
          %2601 = vst [vmem:[#allocation3] sm:$0xff] %v2584
          %2602 = vst [vmem:[#allocation3 + $0x8] sm:$0xff] %v2585
        $region101: #{encoder_lstm_forward.1} parent=84 // pred_fallthru
          _
        %p2603 = scmp.eq.s32.totalorder %s32, 1
        // Predicated region
        $region102: #{encoder_lstm_forward.1} parent=84 // pred_check
          %p2604 = pneg %p2603
        $region103: #{encoder_lstm_forward.1} parent=84 // pred_check_branch
          %2606 = sbr.rel (%p2604) target = $region105
        $region104: #{encoder_lstm_forward.1} parent=84 // pred_region
          %v2607 = vld [vmem:[#allocation2] sm:$0xff]
          %v2608 = vld [vmem:[#allocation2 + $0x8] sm:$0xff]
          %v2609 = vpack.c.bf16 %v2608, %v2607
          %v2610 = vld [vmem:[%s6] sm:$0xf]
          %v2611 = vld [vmem:[%s6 + $0x4] sm:$0xf]
          %v2612 = vld [vmem:[%s6 + $0x8] sm:$0xf]
          %v2613 = vld [vmem:[%s6 + $0xc] sm:$0xf]
          %v2614 = vld [vmem:[%s6 + $0x10] sm:$0xf]
          %v2615 = vld [vmem:[%s6 + $0x14] sm:$0xf]
          %v2616 = vld [vmem:[%s6 + $0x18] sm:$0xf]
          %v2617 = vld [vmem:[%s6 + $0x1c] sm:$0xf]
          %v2618 = vld [vmem:[%s6 + $0x20] sm:$0xf]
          %v2619 = vld [vmem:[%s6 + $0x24] sm:$0xf]
          %v2620 = vld [vmem:[%s6 + $0x28] sm:$0xf]
          %v2621 = vld [vmem:[%s6 + $0x2c] sm:$0xf]
          %v2622 = vld [vmem:[%s6 + $0x30] sm:$0xf]
          %v2623 = vld [vmem:[%s6 + $0x34] sm:$0xf]
          %v2624 = vld [vmem:[%s6 + $0x38] sm:$0xf]
          %v2625 = vld [vmem:[%s6 + $0x3c] sm:$0xf]
          %v2626 = vld [vmem:[%s7] sm:$0x1]
          %v2628 = vlaneseq
          %v2629 = vshrl.u32 %v2628, 7
          %v2630 = vsub.s32 0, %v2629
          %v2631 = vrot.slane %v2626, %v2630
          %v2649 = vunpack.c.l.b16 %v2610
          %v2650 = vunpack.c.l.b16 %v2611
          %v2651 = vunpack.c.l.b16 %v2612
          %v2652 = vunpack.c.l.b16 %v2613
          %v2653 = vunpack.c.l.b16 %v2614
          %v2654 = vunpack.c.l.b16 %v2615
          %v2655 = vunpack.c.l.b16 %v2616
          %v2656 = vunpack.c.l.b16 %v2617
          %v2657 = vunpack.c.l.b16 %v2618
          %v2658 = vunpack.c.l.b16 %v2619
          %v2659 = vunpack.c.l.b16 %v2620
          %v2660 = vunpack.c.l.b16 %v2621
          %v2661 = vunpack.c.l.b16 %v2622
          %v2662 = vunpack.c.l.b16 %v2623
          %v2663 = vunpack.c.l.b16 %v2624
          %v2664 = vunpack.c.l.b16 %v2625
          %v2665 = vpack.c.b16 %v2650, %v2649
          %v2666 = vpack.c.b16 %v2652, %v2651
          %v2667 = vpack.c.b16 %v2654, %v2653
          %v2668 = vpack.c.b16 %v2656, %v2655
          %v2669 = vpack.c.b16 %v2658, %v2657
          %v2670 = vpack.c.b16 %v2660, %v2659
          %v2671 = vpack.c.b16 %v2662, %v2661
          %v2672 = vpack.c.b16 %v2664, %v2663
          %2681 = vmatprep.subr.bf16.mxu0 0
          %2682 = vmatpush1.bf16.msra.mxu0 %v2672
          %2683 = vmatprep.subr.bf16.mxu0 0
          %2684 = vmatpush1.bf16.msra.mxu0 %v2671
          %2685 = vmatprep.subr.bf16.mxu0 0
          %2686 = vmatpush1.bf16.msra.mxu0 %v2670
          %2687 = vmatprep.subr.bf16.mxu0 0
          %2688 = vmatpush1.bf16.msra.mxu0 %v2669
          %2689 = vmatprep.subr.bf16.mxu0 0
          %2690 = vmatpush1.bf16.msra.mxu0 %v2668
          %2691 = vmatprep.subr.bf16.mxu0 0
          %2692 = vmatpush1.bf16.msra.mxu0 %v2667
          %2693 = vmatprep.subr.bf16.mxu0 0
          %2694 = vmatpush1.bf16.msra.mxu0 %v2666
          %2695 = vmatprep.subr.bf16.mxu0 0
          %2696 = vmatpush1.bf16.msra.mxu0 %v2665
          %2697 = vmatprep.subr.bf16.mxu0 0
          %2698 = vmatpush2.bf16.msra.mxu0 0
          %2699 = vmatprep.subr.bf16.mxu0 0
          %2700 = vmatpush2.bf16.msra.mxu0 0
          %2701 = vmatprep.subr.bf16.mxu0 0
          %2702 = vmatpush2.bf16.msra.mxu0 0
          %2703 = vmatprep.subr.bf16.mxu0 0
          %2704 = vmatpush2.bf16.msra.mxu0 0
          %2705 = vmatprep.subr.bf16.mxu0 0
          %2706 = vmatpush2.bf16.msra.mxu0 0
          %2707 = vmatprep.subr.bf16.mxu0 0
          %2708 = vmatpush2.bf16.msra.mxu0 0
          %2709 = vmatprep.subr.bf16.mxu0 0
          %2710 = vmatpush2.bf16.msra.mxu0 0
          %2711 = vmatprep.subr.bf16.mxu0 0
          %2712 = vmatpush2.bf16.msra.mxu0 0
          %2713 = vmatprep.mubr.bf16.mxu0 0
          %2714 = vmatmul.mubr.bf16.gmra.mxu0 %v2609
          %v2715 = vpop.f32.mrf.mxu0
          %v2716 = vadd.f32 %v2631, %v2715
          %v2717 = vpop.f32.mrf.mxu0
          %v2718 = vpop.f32.mrf.mxu0
          %v2719 = vadd.f32 %v2631, %v2718
          %v2720 = vpop.f32.mrf.mxu0
          %2721 = vdwg.mxu0
          %v2722 = vtanh.pop %v2716
          %v2723 = vtanh.pop %v2719
          %2724 = vst [vmem:[%s470] sm:$0xff] %v2722
          %2725 = vst [vmem:[%s470 + $0x10] sm:$0xff] %v2723
          %v2726 = vld [vmem:[#allocation3] sm:$0xff]
          %v2727 = vld [vmem:[#allocation3 + $0x8] sm:$0xff]
          %2728 = vst [vmem:[%s470 + $0x8] sm:$0xff] %v2726
          %2729 = vst [vmem:[%s470 + $0x18] sm:$0xff] %v2727
        $region105: #{encoder_lstm_forward.1} parent=84 // pred_fallthru
          _
        %s2730 = sand.u32 %s208, 1
        %s2731 = sand.u32 %s208, 1
        %s2732 = smul.addr %s2731, 64
        %s2733 = scalar_lea.vmem [#allocation7], %s2732
        %s2734 = smul.u32 2, %s31
        %p2735 = scmp.lt.s32.totalorder %s2734, 3
        %s2736 = scalar_select %p2735, %s2734, 3
        %s2737 = smul.addr %s2736, 2
        %s2738 = smul.addr %s2737, 8
        %s2739 = scalar_lea.vmem %s9, %s2738
        // Predicated region
        $region106: #{encoder_lstm_forward.1} parent=84 // pred_check
          %p2740 = pneg %p218
        $region107: #{encoder_lstm_forward.1} parent=84 // pred_check_branch
          %2742 = sbr.rel (%p2740) target = $region109
        $region108: #{encoder_lstm_forward.1} parent=84 // pred_region
          %s2743 = smul.u32 8, %s32
          %s2744 = smul.u32 2, %s31
          %s2745 = smul.addr %s2743, 4
          %s2746 = sadd.s32 %s2744, %s2745
          %s2747 = smul.addr %s2746, 4
          %s2748 = scalar_lea.vmem %s8, %s2747
          // Predicated region
          $region110: #{encoder_lstm_forward.1} parent=108 // pred_check
            _
          $region111: #{encoder_lstm_forward.1} parent=108 // pred_check_branch
            %2750 = sbr.rel (0) target = $region113
          $region112: #{encoder_lstm_forward.1} parent=108 // pred_region
            // Predicated region
            $region114: #{encoder_lstm_forward.1} parent=112 // pred_check
              _
            $region115: #{encoder_lstm_forward.1} parent=112 // pred_check_branch
              %2752 = sbr.rel target = $region117
            $region116: #{encoder_lstm_forward.1} parent=112 // pred_region
              // Predicated region
              $region129: #{encoder_lstm_forward.1} parent=116 // pred_check
                _
              $region130: #{encoder_lstm_forward.1} parent=116 // pred_check_branch
                %2798 = sbr.rel (0) target = $region132
              $region131: #{encoder_lstm_forward.1} parent=116 // pred_region
                loop: start=0, step=1, limit=1
                $region133: #{encoder_lstm_forward.1} parent=131 // loop_pre_header
                  _
                $region134: #{encoder_lstm_forward.1} parent=131 // loop_header
                  %s2800 = sphi 0, %s2804
                  %p2801 = scmp.ge.s32.totalorder %s2800, 1
                  %s2805 = sphi %s2733, %s2733
                  %s2806 = sphi %s2748, %s2748
                $region135: #{encoder_lstm_forward.1} parent=131 // loop_header_branch
                  %2803 = sbr.rel (%p2801) target = $region139
                $region136: #{encoder_lstm_forward.1} parent=131 // loop_body
                  _
                $region137: #{encoder_lstm_forward.1} parent=131 // loop_footer
                  %s2804 = sadd.s32 1, %s2800
                $region138: #{encoder_lstm_forward.1} parent=131 // loop_footer_branch
                  %2799 = sbr.rel target = $region134
                $region139: #{encoder_lstm_forward.1} parent=131 // loop_exit
                  _
                %s2808 = ssub.s32 16, 1
                loop: start=0, step=1, limit=1
                $region140: #{encoder_lstm_forward.1} parent=131 // loop_pre_header
                  _
                $region141: #{encoder_lstm_forward.1} parent=131 // loop_header
                  %s2810 = sphi 0, %s2814
                  %p2811 = scmp.ge.s32.totalorder %s2810, 1
                  %s2815 = sphi %s2733, %s2733
                  %s2816 = sphi %s2748, %s2748
                $region142: #{encoder_lstm_forward.1} parent=131 // loop_header_branch
                  %2813 = sbr.rel (%p2811) target = $region146
                $region143: #{encoder_lstm_forward.1} parent=131 // loop_body
                  %v2817 = vld [vmem:[%s2815] sm:%s2808]
                  %2818 = vst [vmem:[%s2816] sm:%s2808] %v2817
                  %v2819 = vld [vmem:[%s2815 + $0x4] sm:%s2808]
                  %2820 = vst [vmem:[%s2816 + $0x4] sm:%s2808] %v2819
                  %v2821 = vld [vmem:[%s2815 + $0x8] sm:%s2808]
                  %2822 = vst [vmem:[%s2816 + $0x10] sm:%s2808] %v2821
                  %v2823 = vld [vmem:[%s2815 + $0xc] sm:%s2808]
                  %2824 = vst [vmem:[%s2816 + $0x14] sm:%s2808] %v2823
                  %v2825 = vld [vmem:[%s2815 + $0x10] sm:%s2808]
                  %2826 = vst [vmem:[%s2816 + $0x20] sm:%s2808] %v2825
                  %v2827 = vld [vmem:[%s2815 + $0x14] sm:%s2808]
                  %2828 = vst [vmem:[%s2816 + $0x24] sm:%s2808] %v2827
                  %v2829 = vld [vmem:[%s2815 + $0x18] sm:%s2808]
                  %2830 = vst [vmem:[%s2816 + $0x30] sm:%s2808] %v2829
                  %v2831 = vld [vmem:[%s2815 + $0x1c] sm:%s2808]
                  %2832 = vst [vmem:[%s2816 + $0x34] sm:%s2808] %v2831
                  %v2833 = vld [vmem:[%s2815 + $0x20] sm:%s2808]
                  %2834 = vst [vmem:[%s2816 + $0x40] sm:%s2808] %v2833
                  %v2835 = vld [vmem:[%s2815 + $0x24] sm:%s2808]
                  %2836 = vst [vmem:[%s2816 + $0x44] sm:%s2808] %v2835
                  %v2837 = vld [vmem:[%s2815 + $0x28] sm:%s2808]
                  %2838 = vst [vmem:[%s2816 + $0x50] sm:%s2808] %v2837
                  %v2839 = vld [vmem:[%s2815 + $0x2c] sm:%s2808]
                  %2840 = vst [vmem:[%s2816 + $0x54] sm:%s2808] %v2839
                  %v2841 = vld [vmem:[%s2815 + $0x30] sm:%s2808]
                  %2842 = vst [vmem:[%s2816 + $0x60] sm:%s2808] %v2841
                  %v2843 = vld [vmem:[%s2815 + $0x34] sm:%s2808]
                  %2844 = vst [vmem:[%s2816 + $0x64] sm:%s2808] %v2843
                  %v2845 = vld [vmem:[%s2815 + $0x38] sm:%s2808]
                  %2846 = vst [vmem:[%s2816 + $0x70] sm:%s2808] %v2845
                  %v2847 = vld [vmem:[%s2815 + $0x3c] sm:%s2808]
                  %2848 = vst [vmem:[%s2816 + $0x74] sm:%s2808] %v2847
                $region144: #{encoder_lstm_forward.1} parent=131 // loop_footer
                  %s2814 = sadd.s32 1, %s2810
                $region145: #{encoder_lstm_forward.1} parent=131 // loop_footer_branch
                  %2809 = sbr.rel target = $region141
                $region146: #{encoder_lstm_forward.1} parent=131 // loop_exit
                  _
              $region132: #{encoder_lstm_forward.1} parent=116 // pred_fallthru
                _
            $region117: #{encoder_lstm_forward.1} parent=112 // pred_fallthru
              _
            // Predicated region
            $region118: #{encoder_lstm_forward.1} parent=112 // pred_check
              _
            $region119: #{encoder_lstm_forward.1} parent=112 // pred_check_branch
              %2754 = sbr.rel (0) target = $region121
            $region120: #{encoder_lstm_forward.1} parent=112 // pred_region
              %s2756 = ssub.s32 16, 1
              loop: start=0, step=1, limit=1
              $region122: #{encoder_lstm_forward.1} parent=120 // loop_pre_header
                _
              $region123: #{encoder_lstm_forward.1} parent=120 // loop_header
                %s2758 = sphi 0, %s2762
                %p2759 = scmp.ge.s32.totalorder %s2758, 1
                %s2763 = sphi %s2733, %s2733
                %s2764 = sphi %s2748, %s2748
              $region124: #{encoder_lstm_forward.1} parent=120 // loop_header_branch
                %2761 = sbr.rel (%p2759) target = $region128
              $region125: #{encoder_lstm_forward.1} parent=120 // loop_body
                %v2765 = vld [vmem:[%s2763] sm:%s2756]
                %2766 = vst [vmem:[%s2764] sm:%s2756] %v2765
                %v2767 = vld [vmem:[%s2763 + $0x4] sm:%s2756]
                %2768 = vst [vmem:[%s2764 + $0x4] sm:%s2756] %v2767
                %v2769 = vld [vmem:[%s2763 + $0x8] sm:%s2756]
                %2770 = vst [vmem:[%s2764 + $0x10] sm:%s2756] %v2769
                %v2771 = vld [vmem:[%s2763 + $0xc] sm:%s2756]
                %2772 = vst [vmem:[%s2764 + $0x14] sm:%s2756] %v2771
                %v2773 = vld [vmem:[%s2763 + $0x10] sm:%s2756]
                %2774 = vst [vmem:[%s2764 + $0x20] sm:%s2756] %v2773
                %v2775 = vld [vmem:[%s2763 + $0x14] sm:%s2756]
                %2776 = vst [vmem:[%s2764 + $0x24] sm:%s2756] %v2775
                %v2777 = vld [vmem:[%s2763 + $0x18] sm:%s2756]
                %2778 = vst [vmem:[%s2764 + $0x30] sm:%s2756] %v2777
                %v2779 = vld [vmem:[%s2763 + $0x1c] sm:%s2756]
                %2780 = vst [vmem:[%s2764 + $0x34] sm:%s2756] %v2779
                %v2781 = vld [vmem:[%s2763 + $0x20] sm:%s2756]
                %2782 = vst [vmem:[%s2764 + $0x40] sm:%s2756] %v2781
                %v2783 = vld [vmem:[%s2763 + $0x24] sm:%s2756]
                %2784 = vst [vmem:[%s2764 + $0x44] sm:%s2756] %v2783
                %v2785 = vld [vmem:[%s2763 + $0x28] sm:%s2756]
                %2786 = vst [vmem:[%s2764 + $0x50] sm:%s2756] %v2785
                %v2787 = vld [vmem:[%s2763 + $0x2c] sm:%s2756]
                %2788 = vst [vmem:[%s2764 + $0x54] sm:%s2756] %v2787
                %v2789 = vld [vmem:[%s2763 + $0x30] sm:%s2756]
                %2790 = vst [vmem:[%s2764 + $0x60] sm:%s2756] %v2789
                %v2791 = vld [vmem:[%s2763 + $0x34] sm:%s2756]
                %2792 = vst [vmem:[%s2764 + $0x64] sm:%s2756] %v2791
                %v2793 = vld [vmem:[%s2763 + $0x38] sm:%s2756]
                %2794 = vst [vmem:[%s2764 + $0x70] sm:%s2756] %v2793
                %v2795 = vld [vmem:[%s2763 + $0x3c] sm:%s2756]
                %2796 = vst [vmem:[%s2764 + $0x74] sm:%s2756] %v2795
              $region126: #{encoder_lstm_forward.1} parent=120 // loop_footer
                %s2762 = sadd.s32 1, %s2758
              $region127: #{encoder_lstm_forward.1} parent=120 // loop_footer_branch
                %2757 = sbr.rel target = $region123
              $region128: #{encoder_lstm_forward.1} parent=120 // loop_exit
                _
            $region121: #{encoder_lstm_forward.1} parent=112 // pred_fallthru
              _
          $region113: #{encoder_lstm_forward.1} parent=108 // pred_fallthru
            _
          %2849 = vnop
        $region109: #{encoder_lstm_forward.1} parent=84 // pred_fallthru
          _
        // Predicated region
        $region147: #{encoder_lstm_forward.1} parent=84 // pred_check
          %p2850 = pneg %p244
        $region148: #{encoder_lstm_forward.1} parent=84 // pred_check_branch
          %2852 = sbr.rel (%p2850) target = $region150
        $region149: #{encoder_lstm_forward.1} parent=84 // pred_region
          %s2853 = smul.u32 2, %s31
        $region150: #{encoder_lstm_forward.1} parent=84 // pred_fallthru
          _
      $region85: #{encoder_lstm_forward.1} parent=5 // pred_fallthru
        _
      %p2854 = scmp.le.s32.totalorder 2, %s22
      // Predicated region
      $region151: #{encoder_lstm_forward.1} parent=5 // pred_check
        %p2855 = pneg %p2854
      $region152: #{encoder_lstm_forward.1} parent=5 // pred_check_branch
        %2857 = sbr.rel (%p2855) target = $region154
      $region153: #{encoder_lstm_forward.1} parent=5 // pred_region
        %s2858 = ssub.s32 %s22, 2
        // Predicated region
        $region155: #{encoder_lstm_forward.1} parent=153 // pred_check
          %p2859 = pneg %p224
        $region156: #{encoder_lstm_forward.1} parent=153 // pred_check_branch
          %2861 = sbr.rel (%p2859) target = $region158
        $region157: #{encoder_lstm_forward.1} parent=153 // pred_region
          %s2862 = sand.u32 %s209, 1
          %s2863 = sand.u32 %s209, 1
          %s2864 = smul.addr %s2863, 64
          %s2865 = scalar_lea.vmem [#allocation7], %s2864
        $region158: #{encoder_lstm_forward.1} parent=153 // pred_fallthru
          _
        // Predicated region
        $region159: #{encoder_lstm_forward.1} parent=153 // pred_check
          %p2866 = pneg %p250
        $region160: #{encoder_lstm_forward.1} parent=153 // pred_check_branch
          %2868 = sbr.rel (%p2866) target = $region162
        $region161: #{encoder_lstm_forward.1} parent=153 // pred_region
          %s2869 = smul.u32 2, %s33
          %p2870 = scmp.lt.s32.totalorder %s2869, 3
          %s2871 = scalar_select %p2870, %s2869, 3
          %s2872 = smul.addr %s2871, 2
          %s2873 = smul.addr %s2872, 8
          %s2874 = scalar_lea.vmem %s9, %s2873
        $region162: #{encoder_lstm_forward.1} parent=153 // pred_fallthru
          _
      $region154: #{encoder_lstm_forward.1} parent=5 // pred_fallthru
        _
    $region6: #{encoder_lstm_forward.1} parent=1 // loop_footer
      %s26 = sadd.s32 1, %s22
    $region7: #{encoder_lstm_forward.1} parent=1 // loop_footer_branch
      %21 = sbr.rel target = $region3
    $region8: #{encoder_lstm_forward.1} parent=1 // loop_exit
      _

</llo_original>
